<compile_context>
chip_gen: v7x
topology: tpu7x:2x2x1
jax: 0.10.0
libtpu: 0.0.40
codegen_flags: <defaults>
</compile_context>

<pallas_src>
import functools

import jax
import jax.numpy as jnp
from jax import lax
from jax.experimental import pallas as pl
from jax.experimental.pallas import tpu as pltpu


# ----------------------------- fused Pallas kernel -----------------------------


def _optimized_block_kernel(x_ref, w1_ref, b1_ref, w2_ref, b2_ref, wsc_ref,
                            bsc_ref, o_ref, xpad_s, hpad_s, pcol_s,
                            *, H, W, Cin, Cout, K, downsample):
    """Whole OptimizedBlock forward for one batch element, all in VMEM."""
    pad = (K - 1) // 2
    HW = H * W

    x = x_ref[0]                                   # (H, W, Cin) NHWC

    # -- fused zero padding: write into VMEM scratch, no padded copy in HBM --
    xpad_s[...] = jnp.zeros_like(xpad_s)
    xpad_s[pad:pad + H, pad:pad + W, :] = x

    def conv_same(src_pad_ref, C, w_ref, b_ref):
        """KxK 'same' conv as one im2col MXU matmul (patches staged in VMEM)."""
        for t in range(K * K):
            kh, kw = divmod(t, K)
            pcol_s[:, t * C:(t + 1) * C] = (
                src_pad_ref[kh:kh + H, kw:kw + W, :].reshape(HW, C))
        patches = pcol_s[:, :K * K * C]            # (H*W, K*K*C)
        return jnp.dot(patches, w_ref[...],
                       preferred_element_type=jnp.float32) + b_ref[...]

    # -- conv1 + ReLU --------------------------------------------------------
    h = jnp.maximum(conv_same(xpad_s, Cin, w1_ref, b1_ref), 0.0)   # (H*W, Cout)

    # -- conv2 (pad h in VMEM scratch) ---------------------------------------
    hpad_s[...] = jnp.zeros_like(hpad_s)
    hpad_s[pad:pad + H, pad:pad + W, :] = h.reshape(H, W, Cout)
    h = conv_same(hpad_s, Cout, w2_ref, b2_ref)                    # (H*W, Cout)

    # -- optional 2x2 average pool: pure VPU adds (no pooling matrix) --------
    def pool2x2(t):
        Ht, Wt, Ct = t.shape
        t = t.reshape(Ht // 2, 2, Wt, Ct)
        t = t[:, 0] + t[:, 1]                       # rows
        t = t.reshape(Ht // 2, Wt // 2, 2, Ct)
        return (t[:, :, 0] + t[:, :, 1]) * 0.25     # cols

    if downsample:
        Ho, Wo = H // 2, W // 2
        h = pool2x2(h.reshape(H, W, Cout)).reshape(Ho * Wo, Cout)
        sx = pool2x2(x).reshape(Ho * Wo, Cin)
    else:
        Ho, Wo = H, W
        sx = x.reshape(HW, Cin)

    # -- 1x1 shortcut conv fused with the residual add -----------------------
    out = h + jnp.dot(sx, wsc_ref[...],
                      preferred_element_type=jnp.float32) + bsc_ref[...]
    o_ref[0] = out.astype(o_ref.dtype)              # (Ho*Wo, Cout)


def optimized_block_forward(x_nchw, params, downsample=False):
    """NCHW in / NCHW out, matching PyTorch OptimizedBlock.forward."""
    x = jnp.transpose(x_nchw, (0, 2, 3, 1))          # NCHW -> NHWC (C on lanes)
    N, H, W, Cin = x.shape
    w1, b1, w2, b2, wsc, bsc = params
    K, Cout = w1.shape[0], w1.shape[-1]
    Ho, Wo = (H // 2, W // 2) if downsample else (H, W)
    Hp, Wp = H + K - 1, W + K - 1

    # im2col-ready weight matrices; biases as (1, Cout) rows.
    w1f = w1.reshape(K * K * Cin, Cout)
    w2f = w2.reshape(K * K * Cout, Cout)
    wscf = wsc.reshape(Cin, Cout)

    kernel = functools.partial(_optimized_block_kernel, H=H, W=W, Cin=Cin,
                               Cout=Cout, K=K, downsample=downsample)
    const = lambda n: (0, 0)          # weights/biases: same block every step

    out = pl.pallas_call(
        kernel,
        out_shape=jax.ShapeDtypeStruct((N, Ho * Wo, Cout), x.dtype),
        grid=(N,),
        in_specs=[
            pl.BlockSpec((1, H, W, Cin), lambda n: (n, 0, 0, 0)),
            pl.BlockSpec((K * K * Cin, Cout), const),
            pl.BlockSpec((1, Cout), const),
            pl.BlockSpec((K * K * Cout, Cout), const),
            pl.BlockSpec((1, Cout), const),
            pl.BlockSpec((Cin, Cout), const),
            pl.BlockSpec((1, Cout), const),
        ],
        out_specs=pl.BlockSpec((1, Ho * Wo, Cout), lambda n: (n, 0, 0)),
        scratch_shapes=[
            pltpu.VMEM((Hp, Wp, Cin), jnp.float32),                    # padded x
            pltpu.VMEM((Hp, Wp, Cout), jnp.float32),                   # padded h
            pltpu.VMEM((H * W, K * K * max(Cin, Cout)), jnp.float32),  # im2col
        ],
        compiler_params=pltpu.CompilerParams(
            dimension_semantics=("parallel",)),      # v7x: 2 TCs split the batch
    )(x, w1f, b1[None, :], w2f, b2[None, :], wscf, bsc[None, :])

    out = out.reshape(N, Ho, Wo, Cout)
    return jnp.transpose(out, (0, 3, 1, 2))          # NHWC -> NCHW


# ------------------------------ parameter glue ------------------------------


def spectral_normalize(w_oihw, key, n_iter=1, eps=1e-4):
    """Emulates torch.nn.utils.spectral_norm (1 power iteration, eps=1e-4)."""
    out_ch = w_oihw.shape[0]
    wm = w_oihw.reshape(out_ch, -1)
    u = jax.random.normal(key, (out_ch,), jnp.float32)
    u = u / jnp.maximum(jnp.linalg.norm(u), eps)
    v = None
    for _ in range(n_iter):
        v = wm.T @ u
        v = v / jnp.maximum(jnp.linalg.norm(v), eps)
        u = wm @ v
        u = u / jnp.maximum(jnp.linalg.norm(u), eps)
    sigma = u @ (wm @ v)
    return w_oihw / sigma


def _oihw_to_hwio(w):
    return jnp.transpose(w, (2, 3, 1, 0))


def init_params(key, in_ch, out_ch, ksize=3):
    ks = jax.random.split(key, 9)

    def conv_w(k, cout, cin, kh, kw):
        fan_in = cin * kh * kw
        return jax.random.normal(k, (cout, cin, kh, kw), jnp.float32) / jnp.sqrt(fan_in)

    w1 = spectral_normalize(conv_w(ks[0], out_ch, in_ch, ksize, ksize), ks[6])
    w2 = spectral_normalize(conv_w(ks[1], out_ch, out_ch, ksize, ksize), ks[7])
    wsc = spectral_normalize(conv_w(ks[2], out_ch, in_ch, 1, 1), ks[8])
    b1 = 0.1 * jax.random.normal(ks[3], (out_ch,), jnp.float32)
    b2 = 0.1 * jax.random.normal(ks[4], (out_ch,), jnp.float32)
    bsc = 0.1 * jax.random.normal(ks[5], (out_ch,), jnp.float32)
    return (_oihw_to_hwio(w1), b1, _oihw_to_hwio(w2), b2, _oihw_to_hwio(wsc), bsc)


# ------------------------------ pure-JAX reference ---------------------------


def reference_forward(x_nchw, params, downsample=False):
    x = jnp.transpose(x_nchw, (0, 2, 3, 1))
    w1, b1, w2, b2, wsc, bsc = params

    def conv(t, w, b, pad):
        return lax.conv_general_dilated(
            t, w, (1, 1), [(pad, pad), (pad, pad)],
            dimension_numbers=("NHWC", "HWIO", "NHWC"),
            precision=lax.Precision.HIGHEST) + b

    def pool(t):
        N, H, W, C = t.shape
        return t.reshape(N, H // 2, 2, W // 2, 2, C).mean(axis=(2, 4))

    h = jax.nn.relu(conv(x, w1, b1, 1))
    h = conv(h, w2, b2, 1)
    sx = x
    if downsample:
        h = pool(h)
        sx = pool(sx)
    sc = conv(sx, wsc, bsc, 0)
    return jnp.transpose(h + sc, (0, 3, 1, 2))


# ------------------------------------ main ------------------------------------


if __name__ == "__main__":
    key = jax.random.PRNGKey(0)
    kx, kp = jax.random.split(key)

    N, in_ch, out_ch, H, W = 2, 4, 8, 16, 16
    x = jax.random.normal(kx, (N, in_ch, H, W), jnp.float32)   # NCHW like PyTorch
    params = init_params(kp, in_ch, out_ch)

    for downsample in (False, True):
        out = optimized_block_forward(x, params, downsample=downsample)
        out = jax.block_until_ready(out)
        ref = reference_forward(x, params, downsample=downsample)
        assert out.shape == ref.shape, (out.shape, ref.shape)
        assert jnp.allclose(out, ref, atol=2e-4, rtol=2e-4), float(
            jnp.max(jnp.abs(out - ref)))

    print("KERNEL_OK")
</pallas_src>

<mosaic_0001>
module attributes {stable_mosaic.version = 11 : i64} {
  func.func @_optimized_block_kernel(%arg0: i32, %arg1: memref<1x16x16x4xf32, #tpu.memory_space<vmem>>, %arg2: memref<36x8xf32, #tpu.memory_space<vmem>>, %arg3: memref<1x8xf32, #tpu.memory_space<vmem>>, %arg4: memref<72x8xf32, #tpu.memory_space<vmem>>, %arg5: memref<1x8xf32, #tpu.memory_space<vmem>>, %arg6: memref<4x8xf32, #tpu.memory_space<vmem>>, %arg7: memref<1x8xf32, #tpu.memory_space<vmem>>, %arg8: memref<1x256x8xf32, #tpu.memory_space<vmem>>, %arg9: memref<18x18x4xf32, #tpu.memory_space<vmem>>, %arg10: memref<18x18x8xf32, #tpu.memory_space<vmem>>, %arg11: memref<256x72xf32, #tpu.memory_space<vmem>>) attributes {dimension_semantics = [#tpu.dimension_semantics<parallel>], iteration_bounds = array<i64: 2>, scalar_prefetch = 0 : i64, scratch_operands = 3 : i64, tpu.core_type = #tpu.core_type<tc>, window_params = [{transform_indices = @transform_0, window_bounds = array<i64: 1, 16, 16, 4>}, {pipeline_mode = #tpu.pipeline_mode<synchronous>, transform_indices = @transform_1, window_bounds = array<i64: 36, 8>}, {pipeline_mode = #tpu.pipeline_mode<synchronous>, transform_indices = @transform_2, window_bounds = array<i64: 1, 8>}, {pipeline_mode = #tpu.pipeline_mode<synchronous>, transform_indices = @transform_3, window_bounds = array<i64: 72, 8>}, {pipeline_mode = #tpu.pipeline_mode<synchronous>, transform_indices = @transform_4, window_bounds = array<i64: 1, 8>}, {pipeline_mode = #tpu.pipeline_mode<synchronous>, transform_indices = @transform_5, window_bounds = array<i64: 4, 8>}, {pipeline_mode = #tpu.pipeline_mode<synchronous>, transform_indices = @transform_6, window_bounds = array<i64: 1, 8>}, {transform_indices = @transform_7, window_bounds = array<i64: 1, 256, 8>}]} {
    %c0 = arith.constant 0 : index
    %c0_0 = arith.constant 0 : index
    %c0_1 = arith.constant 0 : index
    %c0_2 = arith.constant 0 : index
    %0 = vector.load %arg1[%c0, %c0_0, %c0_1, %c0_2] : memref<1x16x16x4xf32, #tpu.memory_space<vmem>>, vector<1x16x16x4xf32>
    %1 = vector.shape_cast %0 : vector<1x16x16x4xf32> to vector<16x16x4xf32>
    %cst = arith.constant 0.000000e+00 : f32
    %2 = vector.broadcast %cst : f32 to vector<18x18x4xf32>
    %c0_3 = arith.constant 0 : index
    %c0_4 = arith.constant 0 : index
    %c0_5 = arith.constant 0 : index
    %3 = vector.load %arg9[%c0_3, %c0_4, %c0_5] : memref<18x18x4xf32, #tpu.memory_space<vmem>>, vector<18x18x4xf32>
    tpu.vector_store %arg9[%c0_3, %c0_4, %c0_5], %2 {strides = array<i32>} : memref<18x18x4xf32, #tpu.memory_space<vmem>>, vector<18x18x4xf32>,
    %c1 = arith.constant 1 : index
    %c1_6 = arith.constant 1 : index
    %c0_7 = arith.constant 0 : index
    %4 = vector.load %arg9[%c1, %c1_6, %c0_7] : memref<18x18x4xf32, #tpu.memory_space<vmem>>, vector<16x16x4xf32>
    tpu.vector_store %arg9[%c1, %c1_6, %c0_7], %1 {strides = array<i32>} : memref<18x18x4xf32, #tpu.memory_space<vmem>>, vector<16x16x4xf32>,
    %c0_8 = arith.constant 0 : index
    %c0_9 = arith.constant 0 : index
    %c0_10 = arith.constant 0 : index
    %5 = vector.load %arg9[%c0_8, %c0_9, %c0_10] : memref<18x18x4xf32, #tpu.memory_space<vmem>>, vector<16x16x4xf32>
    %6 = vector.shape_cast %5 : vector<16x16x4xf32> to vector<256x4xf32>
    %c0_11 = arith.constant 0 : index
    %c0_12 = arith.constant 0 : index
    %7 = vector.load %arg11[%c0_11, %c0_12] : memref<256x72xf32, #tpu.memory_space<vmem>>, vector<256x4xf32>
    tpu.vector_store %arg11[%c0_11, %c0_12], %6 {strides = array<i32>} : memref<256x72xf32, #tpu.memory_space<vmem>>, vector<256x4xf32>,
    %c0_13 = arith.constant 0 : index
    %c1_14 = arith.constant 1 : index
    %c0_15 = arith.constant 0 : index
    %8 = vector.load %arg9[%c0_13, %c1_14, %c0_15] : memref<18x18x4xf32, #tpu.memory_space<vmem>>, vector<16x16x4xf32>
    %9 = vector.shape_cast %8 : vector<16x16x4xf32> to vector<256x4xf32>
    %c0_16 = arith.constant 0 : index
    %c4 = arith.constant 4 : index
    %10 = vector.load %arg11[%c0_16, %c4] : memref<256x72xf32, #tpu.memory_space<vmem>>, vector<256x4xf32>
    tpu.vector_store %arg11[%c0_16, %c4], %9 {strides = array<i32>} : memref<256x72xf32, #tpu.memory_space<vmem>>, vector<256x4xf32>,
    %c0_17 = arith.constant 0 : index
    %c2 = arith.constant 2 : index
    %c0_18 = arith.constant 0 : index
    %11 = vector.load %arg9[%c0_17, %c2, %c0_18] : memref<18x18x4xf32, #tpu.memory_space<vmem>>, vector<16x16x4xf32>
    %12 = vector.shape_cast %11 : vector<16x16x4xf32> to vector<256x4xf32>
    %c0_19 = arith.constant 0 : index
    %c8 = arith.constant 8 : index
    %13 = vector.load %arg11[%c0_19, %c8] : memref<256x72xf32, #tpu.memory_space<vmem>>, vector<256x4xf32>
    tpu.vector_store %arg11[%c0_19, %c8], %12 {strides = array<i32>} : memref<256x72xf32, #tpu.memory_space<vmem>>, vector<256x4xf32>,
    %c1_20 = arith.constant 1 : index
    %c0_21 = arith.constant 0 : index
    %c0_22 = arith.constant 0 : index
    %14 = vector.load %arg9[%c1_20, %c0_21, %c0_22] : memref<18x18x4xf32, #tpu.memory_space<vmem>>, vector<16x16x4xf32>
    %15 = vector.shape_cast %14 : vector<16x16x4xf32> to vector<256x4xf32>
    %c0_23 = arith.constant 0 : index
    %c12 = arith.constant 12 : index
    %16 = vector.load %arg11[%c0_23, %c12] : memref<256x72xf32, #tpu.memory_space<vmem>>, vector<256x4xf32>
    tpu.vector_store %arg11[%c0_23, %c12], %15 {strides = array<i32>} : memref<256x72xf32, #tpu.memory_space<vmem>>, vector<256x4xf32>,
    %c1_24 = arith.constant 1 : index
    %c1_25 = arith.constant 1 : index
    %c0_26 = arith.constant 0 : index
    %17 = vector.load %arg9[%c1_24, %c1_25, %c0_26] : memref<18x18x4xf32, #tpu.memory_space<vmem>>, vector<16x16x4xf32>
    %18 = vector.shape_cast %17 : vector<16x16x4xf32> to vector<256x4xf32>
    %c0_27 = arith.constant 0 : index
    %c16 = arith.constant 16 : index
    %19 = vector.load %arg11[%c0_27, %c16] : memref<256x72xf32, #tpu.memory_space<vmem>>, vector<256x4xf32>
    tpu.vector_store %arg11[%c0_27, %c16], %18 {strides = array<i32>} : memref<256x72xf32, #tpu.memory_space<vmem>>, vector<256x4xf32>,
    %c1_28 = arith.constant 1 : index
    %c2_29 = arith.constant 2 : index
    %c0_30 = arith.constant 0 : index
    %20 = vector.load %arg9[%c1_28, %c2_29, %c0_30] : memref<18x18x4xf32, #tpu.memory_space<vmem>>, vector<16x16x4xf32>
    %21 = vector.shape_cast %20 : vector<16x16x4xf32> to vector<256x4xf32>
    %c0_31 = arith.constant 0 : index
    %c20 = arith.constant 20 : index
    %22 = vector.load %arg11[%c0_31, %c20] : memref<256x72xf32, #tpu.memory_space<vmem>>, vector<256x4xf32>
    tpu.vector_store %arg11[%c0_31, %c20], %21 {strides = array<i32>} : memref<256x72xf32, #tpu.memory_space<vmem>>, vector<256x4xf32>,
    %c2_32 = arith.constant 2 : index
    %c0_33 = arith.constant 0 : index
    %c0_34 = arith.constant 0 : index
    %23 = vector.load %arg9[%c2_32, %c0_33, %c0_34] : memref<18x18x4xf32, #tpu.memory_space<vmem>>, vector<16x16x4xf32>
    %24 = vector.shape_cast %23 : vector<16x16x4xf32> to vector<256x4xf32>
    %c0_35 = arith.constant 0 : index
    %c24 = arith.constant 24 : index
    %25 = vector.load %arg11[%c0_35, %c24] : memref<256x72xf32, #tpu.memory_space<vmem>>, vector<256x4xf32>
    tpu.vector_store %arg11[%c0_35, %c24], %24 {strides = array<i32>} : memref<256x72xf32, #tpu.memory_space<vmem>>, vector<256x4xf32>,
    %c2_36 = arith.constant 2 : index
    %c1_37 = arith.constant 1 : index
    %c0_38 = arith.constant 0 : index
    %26 = vector.load %arg9[%c2_36, %c1_37, %c0_38] : memref<18x18x4xf32, #tpu.memory_space<vmem>>, vector<16x16x4xf32>
    %27 = vector.shape_cast %26 : vector<16x16x4xf32> to vector<256x4xf32>
    %c0_39 = arith.constant 0 : index
    %c28 = arith.constant 28 : index
    %28 = vector.load %arg11[%c0_39, %c28] : memref<256x72xf32, #tpu.memory_space<vmem>>, vector<256x4xf32>
    tpu.vector_store %arg11[%c0_39, %c28], %27 {strides = array<i32>} : memref<256x72xf32, #tpu.memory_space<vmem>>, vector<256x4xf32>,
    %c2_40 = arith.constant 2 : index
    %c2_41 = arith.constant 2 : index
    %c0_42 = arith.constant 0 : index
    %29 = vector.load %arg9[%c2_40, %c2_41, %c0_42] : memref<18x18x4xf32, #tpu.memory_space<vmem>>, vector<16x16x4xf32>
    %30 = vector.shape_cast %29 : vector<16x16x4xf32> to vector<256x4xf32>
    %c0_43 = arith.constant 0 : index
    %c32 = arith.constant 32 : index
    %31 = vector.load %arg11[%c0_43, %c32] : memref<256x72xf32, #tpu.memory_space<vmem>>, vector<256x4xf32>
    tpu.vector_store %arg11[%c0_43, %c32], %30 {strides = array<i32>} : memref<256x72xf32, #tpu.memory_space<vmem>>, vector<256x4xf32>,
    %c0_44 = arith.constant 0 : index
    %c0_45 = arith.constant 0 : index
    %32 = vector.load %arg11[%c0_44, %c0_45] : memref<256x72xf32, #tpu.memory_space<vmem>>, vector<256x36xf32>
    %c0_46 = arith.constant 0 : index
    %c0_47 = arith.constant 0 : index
    %33 = vector.load %arg2[%c0_46, %c0_47] : memref<36x8xf32, #tpu.memory_space<vmem>>, vector<36x8xf32>
    %cst_48 = arith.constant dense<0.000000e+00> : vector<256x8xf32>
    %34 = tpu.matmul %32, %33, %cst_48 {dimension_numbers = #tpu.dot_dimension_numbers<[1], [0], [0], [1], [0, 0, 1, 1], [], []>} : vector<256x36xf32>, vector<36x8xf32>, vector<256x8xf32> -> vector<256x8xf32>
    %c0_49 = arith.constant 0 : index
    %c0_50 = arith.constant 0 : index
    %35 = vector.load %arg3[%c0_49, %c0_50] : memref<1x8xf32, #tpu.memory_space<vmem>>, vector<1x8xf32>
    %36 = vector.broadcast %35 : vector<1x8xf32> to vector<256x8xf32>
    %37 = arith.addf %34, %36 : vector<256x8xf32>
    %cst_51 = arith.constant 0.000000e+00 : f32
    %38 = vector.broadcast %cst_51 : f32 to vector<256x8xf32>
    %39 = arith.maximumf %37, %38 : vector<256x8xf32>
    %cst_52 = arith.constant 0.000000e+00 : f32
    %40 = vector.broadcast %cst_52 : f32 to vector<18x18x8xf32>
    %c0_53 = arith.constant 0 : index
    %c0_54 = arith.constant 0 : index
    %c0_55 = arith.constant 0 : index
    %41 = vector.load %arg10[%c0_53, %c0_54, %c0_55] : memref<18x18x8xf32, #tpu.memory_space<vmem>>, vector<18x18x8xf32>
    tpu.vector_store %arg10[%c0_53, %c0_54, %c0_55], %40 {strides = array<i32>} : memref<18x18x8xf32, #tpu.memory_space<vmem>>, vector<18x18x8xf32>,
    %42 = vector.shape_cast %39 : vector<256x8xf32> to vector<16x16x8xf32>
    %c1_56 = arith.constant 1 : index
    %c1_57 = arith.constant 1 : index
    %c0_58 = arith.constant 0 : index
    %43 = vector.load %arg10[%c1_56, %c1_57, %c0_58] : memref<18x18x8xf32, #tpu.memory_space<vmem>>, vector<16x16x8xf32>
    tpu.vector_store %arg10[%c1_56, %c1_57, %c0_58], %42 {strides = array<i32>} : memref<18x18x8xf32, #tpu.memory_space<vmem>>, vector<16x16x8xf32>,
    %c0_59 = arith.constant 0 : index
    %c0_60 = arith.constant 0 : index
    %c0_61 = arith.constant 0 : index
    %44 = vector.load %arg10[%c0_59, %c0_60, %c0_61] : memref<18x18x8xf32, #tpu.memory_space<vmem>>, vector<16x16x8xf32>
    %45 = vector.shape_cast %44 : vector<16x16x8xf32> to vector<256x8xf32>
    %c0_62 = arith.constant 0 : index
    %c0_63 = arith.constant 0 : index
    %46 = vector.load %arg11[%c0_62, %c0_63] : memref<256x72xf32, #tpu.memory_space<vmem>>, vector<256x8xf32>
    tpu.vector_store %arg11[%c0_62, %c0_63], %45 {strides = array<i32>} : memref<256x72xf32, #tpu.memory_space<vmem>>, vector<256x8xf32>,
    %c0_64 = arith.constant 0 : index
    %c1_65 = arith.constant 1 : index
    %c0_66 = arith.constant 0 : index
    %47 = vector.load %arg10[%c0_64, %c1_65, %c0_66] : memref<18x18x8xf32, #tpu.memory_space<vmem>>, vector<16x16x8xf32>
    %48 = vector.shape_cast %47 : vector<16x16x8xf32> to vector<256x8xf32>
    %c0_67 = arith.constant 0 : index
    %c8_68 = arith.constant 8 : index
    %49 = vector.load %arg11[%c0_67, %c8_68] : memref<256x72xf32, #tpu.memory_space<vmem>>, vector<256x8xf32>
    tpu.vector_store %arg11[%c0_67, %c8_68], %48 {strides = array<i32>} : memref<256x72xf32, #tpu.memory_space<vmem>>, vector<256x8xf32>,
    %c0_69 = arith.constant 0 : index
    %c2_70 = arith.constant 2 : index
    %c0_71 = arith.constant 0 : index
    %50 = vector.load %arg10[%c0_69, %c2_70, %c0_71] : memref<18x18x8xf32, #tpu.memory_space<vmem>>, vector<16x16x8xf32>
    %51 = vector.shape_cast %50 : vector<16x16x8xf32> to vector<256x8xf32>
    %c0_72 = arith.constant 0 : index
    %c16_73 = arith.constant 16 : index
    %52 = vector.load %arg11[%c0_72, %c16_73] : memref<256x72xf32, #tpu.memory_space<vmem>>, vector<256x8xf32>
    tpu.vector_store %arg11[%c0_72, %c16_73], %51 {strides = array<i32>} : memref<256x72xf32, #tpu.memory_space<vmem>>, vector<256x8xf32>,
    %c1_74 = arith.constant 1 : index
    %c0_75 = arith.constant 0 : index
    %c0_76 = arith.constant 0 : index
    %53 = vector.load %arg10[%c1_74, %c0_75, %c0_76] : memref<18x18x8xf32, #tpu.memory_space<vmem>>, vector<16x16x8xf32>
    %54 = vector.shape_cast %53 : vector<16x16x8xf32> to vector<256x8xf32>
    %c0_77 = arith.constant 0 : index
    %c24_78 = arith.constant 24 : index
    %55 = vector.load %arg11[%c0_77, %c24_78] : memref<256x72xf32, #tpu.memory_space<vmem>>, vector<256x8xf32>
    tpu.vector_store %arg11[%c0_77, %c24_78], %54 {strides = array<i32>} : memref<256x72xf32, #tpu.memory_space<vmem>>, vector<256x8xf32>,
    %c1_79 = arith.constant 1 : index
    %c1_80 = arith.constant 1 : index
    %c0_81 = arith.constant 0 : index
    %56 = vector.load %arg10[%c1_79, %c1_80, %c0_81] : memref<18x18x8xf32, #tpu.memory_space<vmem>>, vector<16x16x8xf32>
    %57 = vector.shape_cast %56 : vector<16x16x8xf32> to vector<256x8xf32>
    %c0_82 = arith.constant 0 : index
    %c32_83 = arith.constant 32 : index
    %58 = vector.load %arg11[%c0_82, %c32_83] : memref<256x72xf32, #tpu.memory_space<vmem>>, vector<256x8xf32>
    tpu.vector_store %arg11[%c0_82, %c32_83], %57 {strides = array<i32>} : memref<256x72xf32, #tpu.memory_space<vmem>>, vector<256x8xf32>,
    %c1_84 = arith.constant 1 : index
    %c2_85 = arith.constant 2 : index
    %c0_86 = arith.constant 0 : index
    %59 = vector.load %arg10[%c1_84, %c2_85, %c0_86] : memref<18x18x8xf32, #tpu.memory_space<vmem>>, vector<16x16x8xf32>
    %60 = vector.shape_cast %59 : vector<16x16x8xf32> to vector<256x8xf32>
    %c0_87 = arith.constant 0 : index
    %c40 = arith.constant 40 : index
    %61 = vector.load %arg11[%c0_87, %c40] : memref<256x72xf32, #tpu.memory_space<vmem>>, vector<256x8xf32>
    tpu.vector_store %arg11[%c0_87, %c40], %60 {strides = array<i32>} : memref<256x72xf32, #tpu.memory_space<vmem>>, vector<256x8xf32>,
    %c2_88 = arith.constant 2 : index
    %c0_89 = arith.constant 0 : index
    %c0_90 = arith.constant 0 : index
    %62 = vector.load %arg10[%c2_88, %c0_89, %c0_90] : memref<18x18x8xf32, #tpu.memory_space<vmem>>, vector<16x16x8xf32>
    %63 = vector.shape_cast %62 : vector<16x16x8xf32> to vector<256x8xf32>
    %c0_91 = arith.constant 0 : index
    %c48 = arith.constant 48 : index
    %64 = vector.load %arg11[%c0_91, %c48] : memref<256x72xf32, #tpu.memory_space<vmem>>, vector<256x8xf32>
    tpu.vector_store %arg11[%c0_91, %c48], %63 {strides = array<i32>} : memref<256x72xf32, #tpu.memory_space<vmem>>, vector<256x8xf32>,
    %c2_92 = arith.constant 2 : index
    %c1_93 = arith.constant 1 : index
    %c0_94 = arith.constant 0 : index
    %65 = vector.load %arg10[%c2_92, %c1_93, %c0_94] : memref<18x18x8xf32, #tpu.memory_space<vmem>>, vector<16x16x8xf32>
    %66 = vector.shape_cast %65 : vector<16x16x8xf32> to vector<256x8xf32>
    %c0_95 = arith.constant 0 : index
    %c56 = arith.constant 56 : index
    %67 = vector.load %arg11[%c0_95, %c56] : memref<256x72xf32, #tpu.memory_space<vmem>>, vector<256x8xf32>
    tpu.vector_store %arg11[%c0_95, %c56], %66 {strides = array<i32>} : memref<256x72xf32, #tpu.memory_space<vmem>>, vector<256x8xf32>,
    %c2_96 = arith.constant 2 : index
    %c2_97 = arith.constant 2 : index
    %c0_98 = arith.constant 0 : index
    %68 = vector.load %arg10[%c2_96, %c2_97, %c0_98] : memref<18x18x8xf32, #tpu.memory_space<vmem>>, vector<16x16x8xf32>
    %69 = vector.shape_cast %68 : vector<16x16x8xf32> to vector<256x8xf32>
    %c0_99 = arith.constant 0 : index
    %c64 = arith.constant 64 : index
    %70 = vector.load %arg11[%c0_99, %c64] : memref<256x72xf32, #tpu.memory_space<vmem>>, vector<256x8xf32>
    tpu.vector_store %arg11[%c0_99, %c64], %69 {strides = array<i32>} : memref<256x72xf32, #tpu.memory_space<vmem>>, vector<256x8xf32>,
    %c0_100 = arith.constant 0 : index
    %c0_101 = arith.constant 0 : index
    %71 = vector.load %arg11[%c0_100, %c0_101] : memref<256x72xf32, #tpu.memory_space<vmem>>, vector<256x72xf32>
    %c0_102 = arith.constant 0 : index
    %c0_103 = arith.constant 0 : index
    %72 = vector.load %arg4[%c0_102, %c0_103] : memref<72x8xf32, #tpu.memory_space<vmem>>, vector<72x8xf32>
    %cst_104 = arith.constant dense<0.000000e+00> : vector<256x8xf32>
    %73 = tpu.matmul %71, %72, %cst_104 {dimension_numbers = #tpu.dot_dimension_numbers<[1], [0], [0], [1], [0, 0, 1, 1], [], []>} : vector<256x72xf32>, vector<72x8xf32>, vector<256x8xf32> -> vector<256x8xf32>
    %c0_105 = arith.constant 0 : index
    %c0_106 = arith.constant 0 : index
    %74 = vector.load %arg5[%c0_105, %c0_106] : memref<1x8xf32, #tpu.memory_space<vmem>>, vector<1x8xf32>
    %75 = vector.broadcast %74 : vector<1x8xf32> to vector<256x8xf32>
    %76 = arith.addf %73, %75 : vector<256x8xf32>
    %77 = vector.shape_cast %1 : vector<16x16x4xf32> to vector<256x4xf32>
    %c0_107 = arith.constant 0 : index
    %c0_108 = arith.constant 0 : index
    %78 = vector.load %arg6[%c0_107, %c0_108] : memref<4x8xf32, #tpu.memory_space<vmem>>, vector<4x8xf32>
    %cst_109 = arith.constant dense<0.000000e+00> : vector<256x8xf32>
    %79 = tpu.matmul %77, %78, %cst_109 {dimension_numbers = #tpu.dot_dimension_numbers<[1], [0], [0], [1], [0, 0, 1, 1], [], []>} : vector<256x4xf32>, vector<4x8xf32>, vector<256x8xf32> -> vector<256x8xf32>
    %80 = arith.addf %76, %79 : vector<256x8xf32>
    %c0_110 = arith.constant 0 : index
    %c0_111 = arith.constant 0 : index
    %81 = vector.load %arg7[%c0_110, %c0_111] : memref<1x8xf32, #tpu.memory_space<vmem>>, vector<1x8xf32>
    %82 = vector.broadcast %81 : vector<1x8xf32> to vector<256x8xf32>
    %83 = arith.addf %80, %82 : vector<256x8xf32>
    %c0_112 = arith.constant 0 : index
    %c0_113 = arith.constant 0 : index
    %c0_114 = arith.constant 0 : index
    %84 = vector.load %arg8[%c0_112, %c0_113, %c0_114] : memref<1x256x8xf32, #tpu.memory_space<vmem>>, vector<1x256x8xf32>
    %85 = vector.shape_cast %84 : vector<1x256x8xf32> to vector<256x8xf32>
    %86 = vector.shape_cast %83 : vector<256x8xf32> to vector<1x256x8xf32>
    tpu.vector_store %arg8[%c0_112, %c0_113, %c0_114], %86 {strides = array<i32>} : memref<1x256x8xf32, #tpu.memory_space<vmem>>, vector<1x256x8xf32>,
    return
  }
  func.func @transform_0(%arg0: i32) -> (i32, i32, i32, i32) {
    %c0_i32 = arith.constant 0 : i32
    %c0_i32_0 = arith.constant 0 : i32
    %c0_i32_1 = arith.constant 0 : i32
    %c0_i32_2 = arith.constant 0 : i32
    return %arg0, %c0_i32, %c0_i32_0, %c0_i32_1 : i32, i32, i32, i32
  }
  func.func @transform_1(%arg0: i32) -> (i32, i32) {
    %c0_i32 = arith.constant 0 : i32
    %c0_i32_0 = arith.constant 0 : i32
    %c0_i32_1 = arith.constant 0 : i32
    return %c0_i32, %c0_i32_0 : i32, i32
  }
  func.func @transform_2(%arg0: i32) -> (i32, i32) {
    %c0_i32 = arith.constant 0 : i32
    %c0_i32_0 = arith.constant 0 : i32
    %c0_i32_1 = arith.constant 0 : i32
    return %c0_i32, %c0_i32_0 : i32, i32
  }
  func.func @transform_3(%arg0: i32) -> (i32, i32) {
    %c0_i32 = arith.constant 0 : i32
    %c0_i32_0 = arith.constant 0 : i32
    %c0_i32_1 = arith.constant 0 : i32
    return %c0_i32, %c0_i32_0 : i32, i32
  }
  func.func @transform_4(%arg0: i32) -> (i32, i32) {
    %c0_i32 = arith.constant 0 : i32
    %c0_i32_0 = arith.constant 0 : i32
    %c0_i32_1 = arith.constant 0 : i32
    return %c0_i32, %c0_i32_0 : i32, i32
  }
  func.func @transform_5(%arg0: i32) -> (i32, i32) {
    %c0_i32 = arith.constant 0 : i32
    %c0_i32_0 = arith.constant 0 : i32
    %c0_i32_1 = arith.constant 0 : i32
    return %c0_i32, %c0_i32_0 : i32, i32
  }
  func.func @transform_6(%arg0: i32) -> (i32, i32) {
    %c0_i32 = arith.constant 0 : i32
    %c0_i32_0 = arith.constant 0 : i32
    %c0_i32_1 = arith.constant 0 : i32
    return %c0_i32, %c0_i32_0 : i32, i32
  }
  func.func @transform_7(%arg0: i32) -> (i32, i32, i32) {
    %c0_i32 = arith.constant 0 : i32
    %c0_i32_0 = arith.constant 0 : i32
    %c0_i32_1 = arith.constant 0 : i32
    return %arg0, %c0_i32, %c0_i32_0 : i32, i32, i32
  }
}

</mosaic_0001>

<llo_original>
// kernel: tpu_custom_call.1
$region0: #{tpu_custom_call.1}
  #allocation0 [shape = 'u32[]', space=smem, size = 0x4, offset = 0x4, fixed_abs, tag = 'smem constant byte address 0x4 - core index']
  #allocation1 [shape = 'u32[144,128]{1,0:T(1,128)}', space=vmem, size = 0x12000, scoped, tag = 'internal scratch']
  #allocation2 [shape = 'f32[18,18,4]{2,1,0:T(8,128)}', space=vmem, size = 0x36000, scoped, tag = 'scratch operand']
  #allocation3 [shape = 'f32[18,18,8]{2,1,0:T(8,128)}', space=vmem, size = 0x36000, scoped, tag = 'scratch operand']
  #allocation4 [shape = 'f32[256,72]{1,0:T(8,128)}', space=vmem, size = 0x20000, scoped, tag = 'scratch operand']
  %s0 = inlined_call_operand.vmem [shape: f32[2,16,16,4], index: 0, kind: input, shape index: {}]
  %s1 = inlined_call_operand.vmem [shape: f32[36,8], index: 1, kind: input, shape index: {}]
  %s2 = inlined_call_operand.vmem [shape: f32[1,8], index: 2, kind: input, shape index: {}]
  %s3 = inlined_call_operand.vmem [shape: f32[72,8], index: 3, kind: input, shape index: {}]
  %s4 = inlined_call_operand.vmem [shape: f32[1,8], index: 4, kind: input, shape index: {}]
  %s5 = inlined_call_operand.vmem [shape: f32[4,8], index: 5, kind: input, shape index: {}]
  %s6 = inlined_call_operand.vmem [shape: f32[1,8], index: 6, kind: input, shape index: {}]
  %s7 = inlined_call_operand.vmem [shape: f32[2,256,8], index: 7, kind: output, shape index: {}]
  %s8 = sld [smem:[#allocation0]]
  $region61: #{tpu_custom_call.1} parent=0
    _
  %s10 = ssub.s32 1, %s8
  %s11 = scalar_select 0, %s10, %s8
  loop: start=0, step=1, limit=4
  $region2: #{tpu_custom_call.1} parent=0 // loop_pre_header
    _
  $region3: #{tpu_custom_call.1} parent=0 // loop_header
    %s13 = sphi 0, %s17
    %p14 = scmp.ge.s32.totalorder %s13, 4
    %s23 = sphi 0, %s25
    %s26 = sphi 0, %s23
    %s27 = sphi 0, %s26
    %s43 = sphi 0, %s27
    %s47 = sphi 0, %s47
    %s49 = sphi 0, %s47
    %s50 = sphi 0, %s49
    %s64 = sphi 0, %s50
    %s68 = sphi 0, %s68
    %s70 = sphi 0, %s68
    %s71 = sphi 0, %s70
    %s85 = sphi 0, %s71
    %s89 = sphi 0, %s89
    %s91 = sphi 0, %s89
    %s92 = sphi 0, %s91
    %s106 = sphi 0, %s92
    %s110 = sphi 0, %s110
    %s112 = sphi 0, %s110
    %s113 = sphi 0, %s112
    %s127 = sphi 0, %s113
    %s131 = sphi 0, %s131
    %s133 = sphi 0, %s131
    %s134 = sphi 0, %s133
    %s148 = sphi 0, %s134
    %s152 = sphi 0, %s152
    %s154 = sphi 0, %s152
    %s155 = sphi 0, %s154
    %s169 = sphi 0, %s155
    %s175 = sphi 0, %s177
    %s178 = sphi 0, %s175
    %s179 = sphi 0, %s178
    %s195 = sphi 0, %s179
  $region4: #{tpu_custom_call.1} parent=0 // loop_header_branch
    %16 = sbr.rel (%p14) target = $region8
  $region5: #{tpu_custom_call.1} parent=0 // loop_body
    %s18 = ssub.s32 %s13, 1
    %s19 = ssub.s32 %s13, 2
    %s20 = sadd.s32 %s13, 1
    %s21 = ssub.s32 %s13, %s20
    %p22 = scmp.eq.s32.totalorder %s21, 0
    %s24 = sadd.s32 %s23, 1
    %s25 = scalar_select %p22, %s23, %s24
    %p28 = pneg %p22
    %p29 = scmp.eq.s32.totalorder %s13, 1
    %p30 = por %p28, %p29
    %p31 = scmp.ne.s32.totalorder %s23, %s26
    %p32 = scmp.eq.s32.totalorder %s13, 0
    %p33 = por %p31, %p32
    %p34 = scmp.ne.s32.totalorder %s23, %s26
    %p35 = scmp.eq.s32.totalorder %s18, 1
    %p36 = por %p34, %p35
    %p37 = scmp.ne.s32.totalorder %s26, %s27
    %p38 = scmp.eq.s32.totalorder %s18, 0
    %p39 = por %p37, %p38
    %p40 = scmp.ne.s32.totalorder %s26, %s27
    %p41 = scmp.eq.s32.totalorder %s19, 1
    %p42 = por %p40, %p41
    %p44 = scmp.ne.s32.totalorder %s27, %s43
    %p45 = scmp.eq.s32.totalorder %s19, 0
    %p46 = por %p44, %p45
    %s48 = sadd.s32 %s47, 1
    %p51 = scmp.eq.s32.totalorder %s13, 1
    %p52 = scmp.ne.s32.totalorder %s47, %s49
    %p53 = scmp.eq.s32.totalorder %s13, 0
    %p54 = por %p52, %p53
    %p55 = scmp.ne.s32.totalorder %s47, %s49
    %p56 = scmp.eq.s32.totalorder %s18, 1
    %p57 = por %p55, %p56
    %p58 = scmp.ne.s32.totalorder %s49, %s50
    %p59 = scmp.eq.s32.totalorder %s18, 0
    %p60 = por %p58, %p59
    %p61 = scmp.ne.s32.totalorder %s49, %s50
    %p62 = scmp.eq.s32.totalorder %s19, 1
    %p63 = por %p61, %p62
    %p65 = scmp.ne.s32.totalorder %s50, %s64
    %p66 = scmp.eq.s32.totalorder %s19, 0
    %p67 = por %p65, %p66
    %s69 = sadd.s32 %s68, 1
    %p72 = scmp.eq.s32.totalorder %s13, 1
    %p73 = scmp.ne.s32.totalorder %s68, %s70
    %p74 = scmp.eq.s32.totalorder %s13, 0
    %p75 = por %p73, %p74
    %p76 = scmp.ne.s32.totalorder %s68, %s70
    %p77 = scmp.eq.s32.totalorder %s18, 1
    %p78 = por %p76, %p77
    %p79 = scmp.ne.s32.totalorder %s70, %s71
    %p80 = scmp.eq.s32.totalorder %s18, 0
    %p81 = por %p79, %p80
    %p82 = scmp.ne.s32.totalorder %s70, %s71
    %p83 = scmp.eq.s32.totalorder %s19, 1
    %p84 = por %p82, %p83
    %p86 = scmp.ne.s32.totalorder %s71, %s85
    %p87 = scmp.eq.s32.totalorder %s19, 0
    %p88 = por %p86, %p87
    %s90 = sadd.s32 %s89, 1
    %p93 = scmp.eq.s32.totalorder %s13, 1
    %p94 = scmp.ne.s32.totalorder %s89, %s91
    %p95 = scmp.eq.s32.totalorder %s13, 0
    %p96 = por %p94, %p95
    %p97 = scmp.ne.s32.totalorder %s89, %s91
    %p98 = scmp.eq.s32.totalorder %s18, 1
    %p99 = por %p97, %p98
    %p100 = scmp.ne.s32.totalorder %s91, %s92
    %p101 = scmp.eq.s32.totalorder %s18, 0
    %p102 = por %p100, %p101
    %p103 = scmp.ne.s32.totalorder %s91, %s92
    %p104 = scmp.eq.s32.totalorder %s19, 1
    %p105 = por %p103, %p104
    %p107 = scmp.ne.s32.totalorder %s92, %s106
    %p108 = scmp.eq.s32.totalorder %s19, 0
    %p109 = por %p107, %p108
    %s111 = sadd.s32 %s110, 1
    %p114 = scmp.eq.s32.totalorder %s13, 1
    %p115 = scmp.ne.s32.totalorder %s110, %s112
    %p116 = scmp.eq.s32.totalorder %s13, 0
    %p117 = por %p115, %p116
    %p118 = scmp.ne.s32.totalorder %s110, %s112
    %p119 = scmp.eq.s32.totalorder %s18, 1
    %p120 = por %p118, %p119
    %p121 = scmp.ne.s32.totalorder %s112, %s113
    %p122 = scmp.eq.s32.totalorder %s18, 0
    %p123 = por %p121, %p122
    %p124 = scmp.ne.s32.totalorder %s112, %s113
    %p125 = scmp.eq.s32.totalorder %s19, 1
    %p126 = por %p124, %p125
    %p128 = scmp.ne.s32.totalorder %s113, %s127
    %p129 = scmp.eq.s32.totalorder %s19, 0
    %p130 = por %p128, %p129
    %s132 = sadd.s32 %s131, 1
    %p135 = scmp.eq.s32.totalorder %s13, 1
    %p136 = scmp.ne.s32.totalorder %s131, %s133
    %p137 = scmp.eq.s32.totalorder %s13, 0
    %p138 = por %p136, %p137
    %p139 = scmp.ne.s32.totalorder %s131, %s133
    %p140 = scmp.eq.s32.totalorder %s18, 1
    %p141 = por %p139, %p140
    %p142 = scmp.ne.s32.totalorder %s133, %s134
    %p143 = scmp.eq.s32.totalorder %s18, 0
    %p144 = por %p142, %p143
    %p145 = scmp.ne.s32.totalorder %s133, %s134
    %p146 = scmp.eq.s32.totalorder %s19, 1
    %p147 = por %p145, %p146
    %p149 = scmp.ne.s32.totalorder %s134, %s148
    %p150 = scmp.eq.s32.totalorder %s19, 0
    %p151 = por %p149, %p150
    %s153 = sadd.s32 %s152, 1
    %p156 = scmp.eq.s32.totalorder %s13, 1
    %p157 = scmp.ne.s32.totalorder %s152, %s154
    %p158 = scmp.eq.s32.totalorder %s13, 0
    %p159 = por %p157, %p158
    %p160 = scmp.ne.s32.totalorder %s152, %s154
    %p161 = scmp.eq.s32.totalorder %s18, 1
    %p162 = por %p160, %p161
    %p163 = scmp.ne.s32.totalorder %s154, %s155
    %p164 = scmp.eq.s32.totalorder %s18, 0
    %p165 = por %p163, %p164
    %p166 = scmp.ne.s32.totalorder %s154, %s155
    %p167 = scmp.eq.s32.totalorder %s19, 1
    %p168 = por %p166, %p167
    %p170 = scmp.ne.s32.totalorder %s155, %s169
    %p171 = scmp.eq.s32.totalorder %s19, 0
    %p172 = por %p170, %p171
    %s173 = ssub.s32 %s13, %s20
    %p174 = scmp.eq.s32.totalorder %s173, 0
    %s176 = sadd.s32 %s175, 1
    %s177 = scalar_select %p174, %s175, %s176
    %p180 = pneg %p174
    %p181 = scmp.eq.s32.totalorder %s13, 1
    %p182 = por %p180, %p181
    %p183 = scmp.ne.s32.totalorder %s175, %s178
    %p184 = scmp.eq.s32.totalorder %s13, 0
    %p185 = por %p183, %p184
    %p186 = scmp.ne.s32.totalorder %s175, %s178
    %p187 = scmp.eq.s32.totalorder %s18, 1
    %p188 = por %p186, %p187
    %p189 = scmp.ne.s32.totalorder %s178, %s179
    %p190 = scmp.eq.s32.totalorder %s18, 0
    %p191 = por %p189, %p190
    %p192 = scmp.ne.s32.totalorder %s178, %s179
    %p193 = scmp.eq.s32.totalorder %s19, 1
    %p194 = por %p192, %p193
    %p196 = scmp.ne.s32.totalorder %s179, %s195
    %p197 = scmp.eq.s32.totalorder %s19, 0
    %p198 = por %p196, %p197
    %p199 = scmp.le.s32.totalorder 1, %s13
    %p200 = scmp.lt.s32.totalorder %s13, 3
    %p201 = pnand %p199, %p200
    %p202 = pneg %p201
    // Predicated region
    $region9: #{tpu_custom_call.1} parent=5 // pred_check
      _
    $region10: #{tpu_custom_call.1} parent=5 // pred_check_branch
      %204 = sbr.rel (%p201) target = $region12
    $region11: #{tpu_custom_call.1} parent=5 // pred_region
      %s205 = ssub.s32 %s13, 1
      // Predicated region
      $region13: #{tpu_custom_call.1} parent=11 // pred_check
        %p206 = pneg %p60
      $region14: #{tpu_custom_call.1} parent=11 // pred_check_branch
        %208 = sbr.rel (%p206) target = $region16
      $region15: #{tpu_custom_call.1} parent=11 // pred_region
        _
      $region16: #{tpu_custom_call.1} parent=11 // pred_fallthru
        _
      // Predicated region
      $region17: #{tpu_custom_call.1} parent=11 // pred_check
        %p209 = pneg %p81
      $region18: #{tpu_custom_call.1} parent=11 // pred_check_branch
        %211 = sbr.rel (%p209) target = $region20
      $region19: #{tpu_custom_call.1} parent=11 // pred_region
        _
      $region20: #{tpu_custom_call.1} parent=11 // pred_fallthru
        _
      // Predicated region
      $region21: #{tpu_custom_call.1} parent=11 // pred_check
        %p212 = pneg %p102
      $region22: #{tpu_custom_call.1} parent=11 // pred_check_branch
        %214 = sbr.rel (%p212) target = $region24
      $region23: #{tpu_custom_call.1} parent=11 // pred_region
        _
      $region24: #{tpu_custom_call.1} parent=11 // pred_fallthru
        _
      // Predicated region
      $region25: #{tpu_custom_call.1} parent=11 // pred_check
        %p215 = pneg %p123
      $region26: #{tpu_custom_call.1} parent=11 // pred_check_branch
        %217 = sbr.rel (%p215) target = $region28
      $region27: #{tpu_custom_call.1} parent=11 // pred_region
        _
      $region28: #{tpu_custom_call.1} parent=11 // pred_fallthru
        _
      // Predicated region
      $region29: #{tpu_custom_call.1} parent=11 // pred_check
        %p218 = pneg %p144
      $region30: #{tpu_custom_call.1} parent=11 // pred_check_branch
        %220 = sbr.rel (%p218) target = $region32
      $region31: #{tpu_custom_call.1} parent=11 // pred_region
        _
      $region32: #{tpu_custom_call.1} parent=11 // pred_fallthru
        _
      // Predicated region
      $region33: #{tpu_custom_call.1} parent=11 // pred_check
        %p221 = pneg %p165
      $region34: #{tpu_custom_call.1} parent=11 // pred_check_branch
        %223 = sbr.rel (%p221) target = $region36
      $region35: #{tpu_custom_call.1} parent=11 // pred_region
        _
      $region36: #{tpu_custom_call.1} parent=11 // pred_fallthru
        _
    $region12: #{tpu_custom_call.1} parent=5 // pred_fallthru
      _
    %p224 = scmp.lt.s32.totalorder %s13, 2
    // Predicated region
    $region37: #{tpu_custom_call.1} parent=5 // pred_check
      %p225 = pneg %p224
    $region38: #{tpu_custom_call.1} parent=5 // pred_check_branch
      %227 = sbr.rel (%p225) target = $region40
    $region39: #{tpu_custom_call.1} parent=5 // pred_region
      // Predicated region
      $region41: #{tpu_custom_call.1} parent=39 // pred_check
        %p228 = pneg %p33
      $region42: #{tpu_custom_call.1} parent=39 // pred_check_branch
        %230 = sbr.rel (%p228) target = $region44
      $region43: #{tpu_custom_call.1} parent=39 // pred_region
        %p231 = scmp.lt.s32.totalorder %s13, 1
        %s232 = scalar_select %p231, %s13, 1
        %s233 = smul.addr %s232, 32
        %s234 = smul.addr %s233, 8
        %s235 = scalar_lea.vmem %s0, %s234
      $region44: #{tpu_custom_call.1} parent=39 // pred_fallthru
        _
    $region40: #{tpu_custom_call.1} parent=5 // pred_fallthru
      _
    %p236 = scmp.le.s32.totalorder 1, %s13
    %p237 = scmp.lt.s32.totalorder %s13, 3
    %p238 = pnand %p236, %p237
    %p239 = pneg %p238
    // Predicated region
    $region45: #{tpu_custom_call.1} parent=5 // pred_check
      _
    $region46: #{tpu_custom_call.1} parent=5 // pred_check_branch
      %241 = sbr.rel (%p238) target = $region48
    $region47: #{tpu_custom_call.1} parent=5 // pred_region
      %s242 = ssub.s32 %s13, 1
      %p243 = scmp.lt.s32.totalorder %s18, 1
      %s244 = scalar_select %p243, %s18, 1
      %s245 = smul.addr %s244, 32
      %s246 = smul.addr %s245, 8
      %s247 = scalar_lea.vmem %s0, %s246
      %p248 = pneg %p39
      %p249 = pneg %p36
      %p250 = pneg %p60
      %p251 = pneg %p57
      %p252 = pneg %p81
      %p253 = pneg %p78
      %p254 = pneg %p102
      %p255 = pneg %p99
      %p256 = pneg %p123
      %p257 = pneg %p120
      %p258 = pneg %p144
      %p259 = pneg %p141
      %p260 = pneg %p165
      %p261 = pneg %p162
      %p262 = pneg %p191
      %p263 = pneg %p188
      %p264 = scmp.lt.s32.totalorder %s18, 1
      %s265 = scalar_select %p264, %s18, 1
      %s266 = smul.addr %s265, 32
      %s267 = smul.addr %s266, 8
      %s268 = scalar_lea.vmem %s7, %s267
      %p269 = scmp.lt.s32.totalorder %s18, 1
      %s270 = scalar_select %p269, %s18, 1
      %s271 = smul.addr %s270, 32
      %s272 = smul.addr %s271, 8
      %s273 = scalar_lea.vmem %s0, %s272
      %p274 = scmp.lt.s32.totalorder %s18, 1
      %s275 = scalar_select %p274, %s18, 1
      %s276 = smul.addr %s275, 32
      %s277 = smul.addr %s276, 8
      %s278 = scalar_lea.vmem %s7, %s277
      %v279 = vld [vmem:[%s273] sm:$0xff]
      %v280 = vld [vmem:[%s273 + $0x8] sm:$0xff]
      %v281 = vld [vmem:[%s273 + $0x10] sm:$0xff]
      %v282 = vld [vmem:[%s273 + $0x18] sm:$0xff]
      %v283 = vld [vmem:[%s273 + $0x20] sm:$0xff]
      %v284 = vld [vmem:[%s273 + $0x28] sm:$0xff]
      %v285 = vld [vmem:[%s273 + $0x30] sm:$0xff]
      %v286 = vld [vmem:[%s273 + $0x38] sm:$0xff]
      %v287 = vld [vmem:[%s273 + $0x40] sm:$0xff]
      %v288 = vld [vmem:[%s273 + $0x48] sm:$0xff]
      %v289 = vld [vmem:[%s273 + $0x50] sm:$0xff]
      %v290 = vld [vmem:[%s273 + $0x58] sm:$0xff]
      %v291 = vld [vmem:[%s273 + $0x60] sm:$0xff]
      %v292 = vld [vmem:[%s273 + $0x68] sm:$0xff]
      %v293 = vld [vmem:[%s273 + $0x70] sm:$0xff]
      %v294 = vld [vmem:[%s273 + $0x78] sm:$0xff]
      %v295 = vld [vmem:[%s273 + $0x80] sm:$0xff]
      %v296 = vld [vmem:[%s273 + $0x88] sm:$0xff]
      %v297 = vld [vmem:[%s273 + $0x90] sm:$0xff]
      %v298 = vld [vmem:[%s273 + $0x98] sm:$0xff]
      %v299 = vld [vmem:[%s273 + $0xa0] sm:$0xff]
      %v300 = vld [vmem:[%s273 + $0xa8] sm:$0xff]
      %v301 = vld [vmem:[%s273 + $0xb0] sm:$0xff]
      %v302 = vld [vmem:[%s273 + $0xb8] sm:$0xff]
      %v303 = vld [vmem:[%s273 + $0xc0] sm:$0xff]
      %v304 = vld [vmem:[%s273 + $0xc8] sm:$0xff]
      %v305 = vld [vmem:[%s273 + $0xd0] sm:$0xff]
      %v306 = vld [vmem:[%s273 + $0xd8] sm:$0xff]
      %v307 = vld [vmem:[%s273 + $0xe0] sm:$0xff]
      %v308 = vld [vmem:[%s273 + $0xe8] sm:$0xff]
      %v309 = vld [vmem:[%s273 + $0xf0] sm:$0xff]
      %v310 = vld [vmem:[%s273 + $0xf8] sm:$0xff]
      %vm311 = vcmask 31744
      %312 = vst.msk [vmem:[#allocation2] sm:$0xff] %vm311, 0.0
      %313 = vst.msk [vmem:[#allocation2 + $0x8] sm:$0xff] %vm311, 0.0
      %vm314 = vcmask 25600
      %315 = vst.msk [vmem:[#allocation2 + $0x10] sm:$0x3] %vm314, 0.0
      %316 = vst.msk [vmem:[#allocation2 + $0x18] sm:$0xff] %vm311, 0.0
      %317 = vst.msk [vmem:[#allocation2 + $0x20] sm:$0xff] %vm311, 0.0
      %318 = vst.msk [vmem:[#allocation2 + $0x28] sm:$0x3] %vm314, 0.0
      %319 = vst.msk [vmem:[#allocation2 + $0x30] sm:$0xff] %vm311, 0.0
      %320 = vst.msk [vmem:[#allocation2 + $0x38] sm:$0xff] %vm311, 0.0
      %321 = vst.msk [vmem:[#allocation2 + $0x40] sm:$0x3] %vm314, 0.0
      %322 = vst.msk [vmem:[#allocation2 + $0x48] sm:$0xff] %vm311, 0.0
      %323 = vst.msk [vmem:[#allocation2 + $0x50] sm:$0xff] %vm311, 0.0
      %324 = vst.msk [vmem:[#allocation2 + $0x58] sm:$0x3] %vm314, 0.0
      %325 = vst.msk [vmem:[#allocation2 + $0x60] sm:$0xff] %vm311, 0.0
      %326 = vst.msk [vmem:[#allocation2 + $0x68] sm:$0xff] %vm311, 0.0
      %327 = vst.msk [vmem:[#allocation2 + $0x70] sm:$0x3] %vm314, 0.0
      %328 = vst.msk [vmem:[#allocation2 + $0x78] sm:$0xff] %vm311, 0.0
      %329 = vst.msk [vmem:[#allocation2 + $0x80] sm:$0xff] %vm311, 0.0
      %330 = vst.msk [vmem:[#allocation2 + $0x88] sm:$0x3] %vm314, 0.0
      %331 = vst.msk [vmem:[#allocation2 + $0x90] sm:$0xff] %vm311, 0.0
      %332 = vst.msk [vmem:[#allocation2 + $0x98] sm:$0xff] %vm311, 0.0
      %333 = vst.msk [vmem:[#allocation2 + $0xa0] sm:$0x3] %vm314, 0.0
      %334 = vst.msk [vmem:[#allocation2 + $0xa8] sm:$0xff] %vm311, 0.0
      %335 = vst.msk [vmem:[#allocation2 + $0xb0] sm:$0xff] %vm311, 0.0
      %336 = vst.msk [vmem:[#allocation2 + $0xb8] sm:$0x3] %vm314, 0.0
      %337 = vst.msk [vmem:[#allocation2 + $0xc0] sm:$0xff] %vm311, 0.0
      %338 = vst.msk [vmem:[#allocation2 + $0xc8] sm:$0xff] %vm311, 0.0
      %339 = vst.msk [vmem:[#allocation2 + $0xd0] sm:$0x3] %vm314, 0.0
      %340 = vst.msk [vmem:[#allocation2 + $0xd8] sm:$0xff] %vm311, 0.0
      %341 = vst.msk [vmem:[#allocation2 + $0xe0] sm:$0xff] %vm311, 0.0
      %342 = vst.msk [vmem:[#allocation2 + $0xe8] sm:$0x3] %vm314, 0.0
      %343 = vst.msk [vmem:[#allocation2 + $0xf0] sm:$0xff] %vm311, 0.0
      %344 = vst.msk [vmem:[#allocation2 + $0xf8] sm:$0xff] %vm311, 0.0
      %345 = vst.msk [vmem:[#allocation2 + $0x100] sm:$0x3] %vm314, 0.0
      %346 = vst.msk [vmem:[#allocation2 + $0x108] sm:$0xff] %vm311, 0.0
      %347 = vst.msk [vmem:[#allocation2 + $0x110] sm:$0xff] %vm311, 0.0
      %348 = vst.msk [vmem:[#allocation2 + $0x118] sm:$0x3] %vm314, 0.0
      %349 = vst.msk [vmem:[#allocation2 + $0x120] sm:$0xff] %vm311, 0.0
      %350 = vst.msk [vmem:[#allocation2 + $0x128] sm:$0xff] %vm311, 0.0
      %351 = vst.msk [vmem:[#allocation2 + $0x130] sm:$0x3] %vm314, 0.0
      %352 = vst.msk [vmem:[#allocation2 + $0x138] sm:$0xff] %vm311, 0.0
      %353 = vst.msk [vmem:[#allocation2 + $0x140] sm:$0xff] %vm311, 0.0
      %354 = vst.msk [vmem:[#allocation2 + $0x148] sm:$0x3] %vm314, 0.0
      %355 = vst.msk [vmem:[#allocation2 + $0x150] sm:$0xff] %vm311, 0.0
      %356 = vst.msk [vmem:[#allocation2 + $0x158] sm:$0xff] %vm311, 0.0
      %357 = vst.msk [vmem:[#allocation2 + $0x160] sm:$0x3] %vm314, 0.0
      %358 = vst.msk [vmem:[#allocation2 + $0x168] sm:$0xff] %vm311, 0.0
      %359 = vst.msk [vmem:[#allocation2 + $0x170] sm:$0xff] %vm311, 0.0
      %360 = vst.msk [vmem:[#allocation2 + $0x178] sm:$0x3] %vm314, 0.0
      %361 = vst.msk [vmem:[#allocation2 + $0x180] sm:$0xff] %vm311, 0.0
      %362 = vst.msk [vmem:[#allocation2 + $0x188] sm:$0xff] %vm311, 0.0
      %363 = vst.msk [vmem:[#allocation2 + $0x190] sm:$0x3] %vm314, 0.0
      %364 = vst.msk [vmem:[#allocation2 + $0x198] sm:$0xff] %vm311, 0.0
      %365 = vst.msk [vmem:[#allocation2 + $0x1a0] sm:$0xff] %vm311, 0.0
      %366 = vst.msk [vmem:[#allocation2 + $0x1a8] sm:$0x3] %vm314, 0.0
      %s367 = scalar_lea.vmem [#allocation2], 24
      %368 = vst.msk [vmem:[%s367 + $0x1] sm:$0xff] %vm311, %v279
      %369 = vst.msk [vmem:[%s367 + $0x9] sm:$0xff] %vm311, %v280
      %370 = vst.msk [vmem:[%s367 + $0x19] sm:$0xff] %vm311, %v281
      %371 = vst.msk [vmem:[%s367 + $0x21] sm:$0xff] %vm311, %v282
      %372 = vst.msk [vmem:[%s367 + $0x31] sm:$0xff] %vm311, %v283
      %373 = vst.msk [vmem:[%s367 + $0x39] sm:$0xff] %vm311, %v284
      %374 = vst.msk [vmem:[%s367 + $0x49] sm:$0xff] %vm311, %v285
      %375 = vst.msk [vmem:[%s367 + $0x51] sm:$0xff] %vm311, %v286
      %376 = vst.msk [vmem:[%s367 + $0x61] sm:$0xff] %vm311, %v287
      %377 = vst.msk [vmem:[%s367 + $0x69] sm:$0xff] %vm311, %v288
      %378 = vst.msk [vmem:[%s367 + $0x79] sm:$0xff] %vm311, %v289
      %379 = vst.msk [vmem:[%s367 + $0x81] sm:$0xff] %vm311, %v290
      %380 = vst.msk [vmem:[%s367 + $0x91] sm:$0xff] %vm311, %v291
      %381 = vst.msk [vmem:[%s367 + $0x99] sm:$0xff] %vm311, %v292
      %382 = vst.msk [vmem:[%s367 + $0xa9] sm:$0xff] %vm311, %v293
      %383 = vst.msk [vmem:[%s367 + $0xb1] sm:$0xff] %vm311, %v294
      %384 = vst.msk [vmem:[%s367 + $0xc1] sm:$0xff] %vm311, %v295
      %385 = vst.msk [vmem:[%s367 + $0xc9] sm:$0xff] %vm311, %v296
      %386 = vst.msk [vmem:[%s367 + $0xd9] sm:$0xff] %vm311, %v297
      %387 = vst.msk [vmem:[%s367 + $0xe1] sm:$0xff] %vm311, %v298
      %388 = vst.msk [vmem:[%s367 + $0xf1] sm:$0xff] %vm311, %v299
      %389 = vst.msk [vmem:[%s367 + $0xf9] sm:$0xff] %vm311, %v300
      %390 = vst.msk [vmem:[%s367 + $0x109] sm:$0xff] %vm311, %v301
      %391 = vst.msk [vmem:[%s367 + $0x111] sm:$0xff] %vm311, %v302
      %392 = vst.msk [vmem:[%s367 + $0x121] sm:$0xff] %vm311, %v303
      %393 = vst.msk [vmem:[%s367 + $0x129] sm:$0xff] %vm311, %v304
      %394 = vst.msk [vmem:[%s367 + $0x139] sm:$0xff] %vm311, %v305
      %395 = vst.msk [vmem:[%s367 + $0x141] sm:$0xff] %vm311, %v306
      %396 = vst.msk [vmem:[%s367 + $0x151] sm:$0xff] %vm311, %v307
      %397 = vst.msk [vmem:[%s367 + $0x159] sm:$0xff] %vm311, %v308
      %398 = vst.msk [vmem:[%s367 + $0x169] sm:$0xff] %vm311, %v309
      %399 = vst.msk [vmem:[%s367 + $0x171] sm:$0xff] %vm311, %v310
      %v400 = vld [vmem:[#allocation2] sm:$0xff]
      %v401 = vld [vmem:[#allocation2 + $0x8] sm:$0xff]
      %v402 = vld [vmem:[#allocation2 + $0x18] sm:$0xff]
      %v403 = vld [vmem:[#allocation2 + $0x20] sm:$0xff]
      %v404 = vld [vmem:[#allocation2 + $0x30] sm:$0xff]
      %v405 = vld [vmem:[#allocation2 + $0x38] sm:$0xff]
      %v406 = vld [vmem:[#allocation2 + $0x48] sm:$0xff]
      %v407 = vld [vmem:[#allocation2 + $0x50] sm:$0xff]
      %v408 = vld [vmem:[#allocation2 + $0x60] sm:$0xff]
      %v409 = vld [vmem:[#allocation2 + $0x68] sm:$0xff]
      %v410 = vld [vmem:[#allocation2 + $0x78] sm:$0xff]
      %v411 = vld [vmem:[#allocation2 + $0x80] sm:$0xff]
      %v412 = vld [vmem:[#allocation2 + $0x90] sm:$0xff]
      %v413 = vld [vmem:[#allocation2 + $0x98] sm:$0xff]
      %v414 = vld [vmem:[#allocation2 + $0xa8] sm:$0xff]
      %v415 = vld [vmem:[#allocation2 + $0xb0] sm:$0xff]
      %v416 = vld [vmem:[#allocation2 + $0xc0] sm:$0xff]
      %v417 = vld [vmem:[#allocation2 + $0xc8] sm:$0xff]
      %v418 = vld [vmem:[#allocation2 + $0xd8] sm:$0xff]
      %v419 = vld [vmem:[#allocation2 + $0xe0] sm:$0xff]
      %v420 = vld [vmem:[#allocation2 + $0xf0] sm:$0xff]
      %v421 = vld [vmem:[#allocation2 + $0xf8] sm:$0xff]
      %v422 = vld [vmem:[#allocation2 + $0x108] sm:$0xff]
      %v423 = vld [vmem:[#allocation2 + $0x110] sm:$0xff]
      %v424 = vld [vmem:[#allocation2 + $0x120] sm:$0xff]
      %v425 = vld [vmem:[#allocation2 + $0x128] sm:$0xff]
      %v426 = vld [vmem:[#allocation2 + $0x138] sm:$0xff]
      %v427 = vld [vmem:[#allocation2 + $0x140] sm:$0xff]
      %v428 = vld [vmem:[#allocation2 + $0x150] sm:$0xff]
      %v429 = vld [vmem:[#allocation2 + $0x158] sm:$0xff]
      %v430 = vld [vmem:[#allocation2 + $0x168] sm:$0xff]
      %v431 = vld [vmem:[#allocation2 + $0x170] sm:$0xff]
      %432 = vst.msk [vmem:[#allocation4] sm:$0xff] %vm311, %v400
      %433 = vst.msk [vmem:[#allocation4 + $0x8] sm:$0xff] %vm311, %v401
      %434 = vst.msk [vmem:[#allocation4 + $0x10] sm:$0xff] %vm311, %v402
      %435 = vst.msk [vmem:[#allocation4 + $0x18] sm:$0xff] %vm311, %v403
      %436 = vst.msk [vmem:[#allocation4 + $0x20] sm:$0xff] %vm311, %v404
      %437 = vst.msk [vmem:[#allocation4 + $0x28] sm:$0xff] %vm311, %v405
      %438 = vst.msk [vmem:[#allocation4 + $0x30] sm:$0xff] %vm311, %v406
      %439 = vst.msk [vmem:[#allocation4 + $0x38] sm:$0xff] %vm311, %v407
      %440 = vst.msk [vmem:[#allocation4 + $0x40] sm:$0xff] %vm311, %v408
      %441 = vst.msk [vmem:[#allocation4 + $0x48] sm:$0xff] %vm311, %v409
      %442 = vst.msk [vmem:[#allocation4 + $0x50] sm:$0xff] %vm311, %v410
      %443 = vst.msk [vmem:[#allocation4 + $0x58] sm:$0xff] %vm311, %v411
      %444 = vst.msk [vmem:[#allocation4 + $0x60] sm:$0xff] %vm311, %v412
      %445 = vst.msk [vmem:[#allocation4 + $0x68] sm:$0xff] %vm311, %v413
      %446 = vst.msk [vmem:[#allocation4 + $0x70] sm:$0xff] %vm311, %v414
      %447 = vst.msk [vmem:[#allocation4 + $0x78] sm:$0xff] %vm311, %v415
      %448 = vst.msk [vmem:[#allocation4 + $0x80] sm:$0xff] %vm311, %v416
      %449 = vst.msk [vmem:[#allocation4 + $0x88] sm:$0xff] %vm311, %v417
      %450 = vst.msk [vmem:[#allocation4 + $0x90] sm:$0xff] %vm311, %v418
      %451 = vst.msk [vmem:[#allocation4 + $0x98] sm:$0xff] %vm311, %v419
      %452 = vst.msk [vmem:[#allocation4 + $0xa0] sm:$0xff] %vm311, %v420
      %453 = vst.msk [vmem:[#allocation4 + $0xa8] sm:$0xff] %vm311, %v421
      %454 = vst.msk [vmem:[#allocation4 + $0xb0] sm:$0xff] %vm311, %v422
      %455 = vst.msk [vmem:[#allocation4 + $0xb8] sm:$0xff] %vm311, %v423
      %456 = vst.msk [vmem:[#allocation4 + $0xc0] sm:$0xff] %vm311, %v424
      %457 = vst.msk [vmem:[#allocation4 + $0xc8] sm:$0xff] %vm311, %v425
      %458 = vst.msk [vmem:[#allocation4 + $0xd0] sm:$0xff] %vm311, %v426
      %459 = vst.msk [vmem:[#allocation4 + $0xd8] sm:$0xff] %vm311, %v427
      %460 = vst.msk [vmem:[#allocation4 + $0xe0] sm:$0xff] %vm311, %v428
      %461 = vst.msk [vmem:[#allocation4 + $0xe8] sm:$0xff] %vm311, %v429
      %462 = vst.msk [vmem:[#allocation4 + $0xf0] sm:$0xff] %vm311, %v430
      %463 = vst.msk [vmem:[#allocation4 + $0xf8] sm:$0xff] %vm311, %v431
      %v464 = vld [vmem:[#allocation2 + $0x1] sm:$0xff]
      %v465 = vld [vmem:[#allocation2 + $0x9] sm:$0xff]
      %v466 = vld [vmem:[#allocation2 + $0x19] sm:$0xff]
      %v467 = vld [vmem:[#allocation2 + $0x21] sm:$0xff]
      %v468 = vld [vmem:[#allocation2 + $0x31] sm:$0xff]
      %v469 = vld [vmem:[#allocation2 + $0x39] sm:$0xff]
      %v470 = vld [vmem:[#allocation2 + $0x49] sm:$0xff]
      %v471 = vld [vmem:[#allocation2 + $0x51] sm:$0xff]
      %v472 = vld [vmem:[#allocation2 + $0x61] sm:$0xff]
      %v473 = vld [vmem:[#allocation2 + $0x69] sm:$0xff]
      %v474 = vld [vmem:[#allocation2 + $0x79] sm:$0xff]
      %v475 = vld [vmem:[#allocation2 + $0x81] sm:$0xff]
      %v476 = vld [vmem:[#allocation2 + $0x91] sm:$0xff]
      %v477 = vld [vmem:[#allocation2 + $0x99] sm:$0xff]
      %v478 = vld [vmem:[#allocation2 + $0xa9] sm:$0xff]
      %v479 = vld [vmem:[#allocation2 + $0xb1] sm:$0xff]
      %v480 = vld [vmem:[#allocation2 + $0xc1] sm:$0xff]
      %v481 = vld [vmem:[#allocation2 + $0xc9] sm:$0xff]
      %v482 = vld [vmem:[#allocation2 + $0xd9] sm:$0xff]
      %v483 = vld [vmem:[#allocation2 + $0xe1] sm:$0xff]
      %v484 = vld [vmem:[#allocation2 + $0xf1] sm:$0xff]
      %v485 = vld [vmem:[#allocation2 + $0xf9] sm:$0xff]
      %v486 = vld [vmem:[#allocation2 + $0x109] sm:$0xff]
      %v487 = vld [vmem:[#allocation2 + $0x111] sm:$0xff]
      %v488 = vld [vmem:[#allocation2 + $0x121] sm:$0xff]
      %v489 = vld [vmem:[#allocation2 + $0x129] sm:$0xff]
      %v490 = vld [vmem:[#allocation2 + $0x139] sm:$0xff]
      %v491 = vld [vmem:[#allocation2 + $0x141] sm:$0xff]
      %v492 = vld [vmem:[#allocation2 + $0x151] sm:$0xff]
      %v493 = vld [vmem:[#allocation2 + $0x159] sm:$0xff]
      %v494 = vld [vmem:[#allocation2 + $0x169] sm:$0xff]
      %v495 = vld [vmem:[#allocation2 + $0x171] sm:$0xff]
      %528 = vrot.lane.b32.xlu0 %v464, 4
      %v529 = vpop.permute.xlu0 %528
      %530 = vrot.lane.b32.xlu0 %v465, 4
      %v531 = vpop.permute.xlu0 %530
      %532 = vrot.lane.b32.xlu0 %v466, 4
      %v533 = vpop.permute.xlu0 %532
      %534 = vrot.lane.b32.xlu0 %v467, 4
      %v535 = vpop.permute.xlu0 %534
      %536 = vrot.lane.b32.xlu0 %v468, 4
      %v537 = vpop.permute.xlu0 %536
      %538 = vrot.lane.b32.xlu0 %v469, 4
      %v539 = vpop.permute.xlu0 %538
      %540 = vrot.lane.b32.xlu0 %v470, 4
      %v541 = vpop.permute.xlu0 %540
      %542 = vrot.lane.b32.xlu0 %v471, 4
      %v543 = vpop.permute.xlu0 %542
      %544 = vrot.lane.b32.xlu0 %v472, 4
      %v545 = vpop.permute.xlu0 %544
      %546 = vrot.lane.b32.xlu0 %v473, 4
      %v547 = vpop.permute.xlu0 %546
      %548 = vrot.lane.b32.xlu0 %v474, 4
      %v549 = vpop.permute.xlu0 %548
      %550 = vrot.lane.b32.xlu0 %v475, 4
      %v551 = vpop.permute.xlu0 %550
      %552 = vrot.lane.b32.xlu0 %v476, 4
      %v553 = vpop.permute.xlu0 %552
      %554 = vrot.lane.b32.xlu0 %v477, 4
      %v555 = vpop.permute.xlu0 %554
      %556 = vrot.lane.b32.xlu0 %v478, 4
      %v557 = vpop.permute.xlu0 %556
      %558 = vrot.lane.b32.xlu0 %v479, 4
      %v559 = vpop.permute.xlu0 %558
      %560 = vrot.lane.b32.xlu0 %v480, 4
      %v561 = vpop.permute.xlu0 %560
      %562 = vrot.lane.b32.xlu0 %v481, 4
      %v563 = vpop.permute.xlu0 %562
      %564 = vrot.lane.b32.xlu0 %v482, 4
      %v565 = vpop.permute.xlu0 %564
      %566 = vrot.lane.b32.xlu0 %v483, 4
      %v567 = vpop.permute.xlu0 %566
      %568 = vrot.lane.b32.xlu0 %v484, 4
      %v569 = vpop.permute.xlu0 %568
      %570 = vrot.lane.b32.xlu0 %v485, 4
      %v571 = vpop.permute.xlu0 %570
      %572 = vrot.lane.b32.xlu0 %v486, 4
      %v573 = vpop.permute.xlu0 %572
      %574 = vrot.lane.b32.xlu0 %v487, 4
      %v575 = vpop.permute.xlu0 %574
      %576 = vrot.lane.b32.xlu0 %v488, 4
      %v577 = vpop.permute.xlu0 %576
      %578 = vrot.lane.b32.xlu0 %v489, 4
      %v579 = vpop.permute.xlu0 %578
      %580 = vrot.lane.b32.xlu0 %v490, 4
      %v581 = vpop.permute.xlu0 %580
      %582 = vrot.lane.b32.xlu0 %v491, 4
      %v583 = vpop.permute.xlu0 %582
      %584 = vrot.lane.b32.xlu0 %v492, 4
      %v585 = vpop.permute.xlu0 %584
      %586 = vrot.lane.b32.xlu0 %v493, 4
      %v587 = vpop.permute.xlu0 %586
      %588 = vrot.lane.b32.xlu0 %v494, 4
      %v589 = vpop.permute.xlu0 %588
      %590 = vrot.lane.b32.xlu0 %v495, 4
      %v591 = vpop.permute.xlu0 %590
      %vm624 = vcmask 64544
      %625 = vst.msk [vmem:[#allocation4] sm:$0xff] %vm624, %v529
      %626 = vst.msk [vmem:[#allocation4 + $0x8] sm:$0xff] %vm624, %v531
      %627 = vst.msk [vmem:[#allocation4 + $0x10] sm:$0xff] %vm624, %v533
      %628 = vst.msk [vmem:[#allocation4 + $0x18] sm:$0xff] %vm624, %v535
      %629 = vst.msk [vmem:[#allocation4 + $0x20] sm:$0xff] %vm624, %v537
      %630 = vst.msk [vmem:[#allocation4 + $0x28] sm:$0xff] %vm624, %v539
      %631 = vst.msk [vmem:[#allocation4 + $0x30] sm:$0xff] %vm624, %v541
      %632 = vst.msk [vmem:[#allocation4 + $0x38] sm:$0xff] %vm624, %v543
      %633 = vst.msk [vmem:[#allocation4 + $0x40] sm:$0xff] %vm624, %v545
      %634 = vst.msk [vmem:[#allocation4 + $0x48] sm:$0xff] %vm624, %v547
      %635 = vst.msk [vmem:[#allocation4 + $0x50] sm:$0xff] %vm624, %v549
      %636 = vst.msk [vmem:[#allocation4 + $0x58] sm:$0xff] %vm624, %v551
      %637 = vst.msk [vmem:[#allocation4 + $0x60] sm:$0xff] %vm624, %v553
      %638 = vst.msk [vmem:[#allocation4 + $0x68] sm:$0xff] %vm624, %v555
      %639 = vst.msk [vmem:[#allocation4 + $0x70] sm:$0xff] %vm624, %v557
      %640 = vst.msk [vmem:[#allocation4 + $0x78] sm:$0xff] %vm624, %v559
      %641 = vst.msk [vmem:[#allocation4 + $0x80] sm:$0xff] %vm624, %v561
      %642 = vst.msk [vmem:[#allocation4 + $0x88] sm:$0xff] %vm624, %v563
      %643 = vst.msk [vmem:[#allocation4 + $0x90] sm:$0xff] %vm624, %v565
      %644 = vst.msk [vmem:[#allocation4 + $0x98] sm:$0xff] %vm624, %v567
      %645 = vst.msk [vmem:[#allocation4 + $0xa0] sm:$0xff] %vm624, %v569
      %646 = vst.msk [vmem:[#allocation4 + $0xa8] sm:$0xff] %vm624, %v571
      %647 = vst.msk [vmem:[#allocation4 + $0xb0] sm:$0xff] %vm624, %v573
      %648 = vst.msk [vmem:[#allocation4 + $0xb8] sm:$0xff] %vm624, %v575
      %649 = vst.msk [vmem:[#allocation4 + $0xc0] sm:$0xff] %vm624, %v577
      %650 = vst.msk [vmem:[#allocation4 + $0xc8] sm:$0xff] %vm624, %v579
      %651 = vst.msk [vmem:[#allocation4 + $0xd0] sm:$0xff] %vm624, %v581
      %652 = vst.msk [vmem:[#allocation4 + $0xd8] sm:$0xff] %vm624, %v583
      %653 = vst.msk [vmem:[#allocation4 + $0xe0] sm:$0xff] %vm624, %v585
      %654 = vst.msk [vmem:[#allocation4 + $0xe8] sm:$0xff] %vm624, %v587
      %655 = vst.msk [vmem:[#allocation4 + $0xf0] sm:$0xff] %vm624, %v589
      %656 = vst.msk [vmem:[#allocation4 + $0xf8] sm:$0xff] %vm624, %v591
      %v657 = vld [vmem:[#allocation2 + $0x2] sm:$0xff]
      %v658 = vld [vmem:[#allocation2 + $0xa] sm:$0xff]
      %v659 = vld [vmem:[#allocation2 + $0x1a] sm:$0xff]
      %v660 = vld [vmem:[#allocation2 + $0x22] sm:$0xff]
      %v661 = vld [vmem:[#allocation2 + $0x32] sm:$0xff]
      %v662 = vld [vmem:[#allocation2 + $0x3a] sm:$0xff]
      %v663 = vld [vmem:[#allocation2 + $0x4a] sm:$0xff]
      %v664 = vld [vmem:[#allocation2 + $0x52] sm:$0xff]
      %v665 = vld [vmem:[#allocation2 + $0x62] sm:$0xff]
      %v666 = vld [vmem:[#allocation2 + $0x6a] sm:$0xff]
      %v667 = vld [vmem:[#allocation2 + $0x7a] sm:$0xff]
      %v668 = vld [vmem:[#allocation2 + $0x82] sm:$0xff]
      %v669 = vld [vmem:[#allocation2 + $0x92] sm:$0xff]
      %v670 = vld [vmem:[#allocation2 + $0x9a] sm:$0xff]
      %v671 = vld [vmem:[#allocation2 + $0xaa] sm:$0xff]
      %v672 = vld [vmem:[#allocation2 + $0xb2] sm:$0xff]
      %v673 = vld [vmem:[#allocation2 + $0xc2] sm:$0xff]
      %v674 = vld [vmem:[#allocation2 + $0xca] sm:$0xff]
      %v675 = vld [vmem:[#allocation2 + $0xda] sm:$0xff]
      %v676 = vld [vmem:[#allocation2 + $0xe2] sm:$0xff]
      %v677 = vld [vmem:[#allocation2 + $0xf2] sm:$0xff]
      %v678 = vld [vmem:[#allocation2 + $0xfa] sm:$0xff]
      %v679 = vld [vmem:[#allocation2 + $0x10a] sm:$0xff]
      %v680 = vld [vmem:[#allocation2 + $0x112] sm:$0xff]
      %v681 = vld [vmem:[#allocation2 + $0x122] sm:$0xff]
      %v682 = vld [vmem:[#allocation2 + $0x12a] sm:$0xff]
      %v683 = vld [vmem:[#allocation2 + $0x13a] sm:$0xff]
      %v684 = vld [vmem:[#allocation2 + $0x142] sm:$0xff]
      %v685 = vld [vmem:[#allocation2 + $0x152] sm:$0xff]
      %v686 = vld [vmem:[#allocation2 + $0x15a] sm:$0xff]
      %v687 = vld [vmem:[#allocation2 + $0x16a] sm:$0xff]
      %v688 = vld [vmem:[#allocation2 + $0x172] sm:$0xff]
      %721 = vrot.lane.b32.xlu0 %v657, 8
      %v722 = vpop.permute.xlu0 %721
      %723 = vrot.lane.b32.xlu0 %v658, 8
      %v724 = vpop.permute.xlu0 %723
      %725 = vrot.lane.b32.xlu0 %v659, 8
      %v726 = vpop.permute.xlu0 %725
      %727 = vrot.lane.b32.xlu0 %v660, 8
      %v728 = vpop.permute.xlu0 %727
      %729 = vrot.lane.b32.xlu0 %v661, 8
      %v730 = vpop.permute.xlu0 %729
      %731 = vrot.lane.b32.xlu0 %v662, 8
      %v732 = vpop.permute.xlu0 %731
      %733 = vrot.lane.b32.xlu0 %v663, 8
      %v734 = vpop.permute.xlu0 %733
      %735 = vrot.lane.b32.xlu0 %v664, 8
      %v736 = vpop.permute.xlu0 %735
      %737 = vrot.lane.b32.xlu0 %v665, 8
      %v738 = vpop.permute.xlu0 %737
      %739 = vrot.lane.b32.xlu0 %v666, 8
      %v740 = vpop.permute.xlu0 %739
      %741 = vrot.lane.b32.xlu0 %v667, 8
      %v742 = vpop.permute.xlu0 %741
      %743 = vrot.lane.b32.xlu0 %v668, 8
      %v744 = vpop.permute.xlu0 %743
      %745 = vrot.lane.b32.xlu0 %v669, 8
      %v746 = vpop.permute.xlu0 %745
      %747 = vrot.lane.b32.xlu0 %v670, 8
      %v748 = vpop.permute.xlu0 %747
      %749 = vrot.lane.b32.xlu0 %v671, 8
      %v750 = vpop.permute.xlu0 %749
      %751 = vrot.lane.b32.xlu0 %v672, 8
      %v752 = vpop.permute.xlu0 %751
      %753 = vrot.lane.b32.xlu0 %v673, 8
      %v754 = vpop.permute.xlu0 %753
      %755 = vrot.lane.b32.xlu0 %v674, 8
      %v756 = vpop.permute.xlu0 %755
      %757 = vrot.lane.b32.xlu0 %v675, 8
      %v758 = vpop.permute.xlu0 %757
      %759 = vrot.lane.b32.xlu0 %v676, 8
      %v760 = vpop.permute.xlu0 %759
      %761 = vrot.lane.b32.xlu0 %v677, 8
      %v762 = vpop.permute.xlu0 %761
      %763 = vrot.lane.b32.xlu0 %v678, 8
      %v764 = vpop.permute.xlu0 %763
      %765 = vrot.lane.b32.xlu0 %v679, 8
      %v766 = vpop.permute.xlu0 %765
      %767 = vrot.lane.b32.xlu0 %v680, 8
      %v768 = vpop.permute.xlu0 %767
      %769 = vrot.lane.b32.xlu0 %v681, 8
      %v770 = vpop.permute.xlu0 %769
      %771 = vrot.lane.b32.xlu0 %v682, 8
      %v772 = vpop.permute.xlu0 %771
      %773 = vrot.lane.b32.xlu0 %v683, 8
      %v774 = vpop.permute.xlu0 %773
      %775 = vrot.lane.b32.xlu0 %v684, 8
      %v776 = vpop.permute.xlu0 %775
      %777 = vrot.lane.b32.xlu0 %v685, 8
      %v778 = vpop.permute.xlu0 %777
      %779 = vrot.lane.b32.xlu0 %v686, 8
      %v780 = vpop.permute.xlu0 %779
      %781 = vrot.lane.b32.xlu0 %v687, 8
      %v782 = vpop.permute.xlu0 %781
      %783 = vrot.lane.b32.xlu0 %v688, 8
      %v784 = vpop.permute.xlu0 %783
      %vm817 = vcmask 97344
      %818 = vst.msk [vmem:[#allocation4] sm:$0xff] %vm817, %v722
      %819 = vst.msk [vmem:[#allocation4 + $0x8] sm:$0xff] %vm817, %v724
      %820 = vst.msk [vmem:[#allocation4 + $0x10] sm:$0xff] %vm817, %v726
      %821 = vst.msk [vmem:[#allocation4 + $0x18] sm:$0xff] %vm817, %v728
      %822 = vst.msk [vmem:[#allocation4 + $0x20] sm:$0xff] %vm817, %v730
      %823 = vst.msk [vmem:[#allocation4 + $0x28] sm:$0xff] %vm817, %v732
      %824 = vst.msk [vmem:[#allocation4 + $0x30] sm:$0xff] %vm817, %v734
      %825 = vst.msk [vmem:[#allocation4 + $0x38] sm:$0xff] %vm817, %v736
      %826 = vst.msk [vmem:[#allocation4 + $0x40] sm:$0xff] %vm817, %v738
      %827 = vst.msk [vmem:[#allocation4 + $0x48] sm:$0xff] %vm817, %v740
      %828 = vst.msk [vmem:[#allocation4 + $0x50] sm:$0xff] %vm817, %v742
      %829 = vst.msk [vmem:[#allocation4 + $0x58] sm:$0xff] %vm817, %v744
      %830 = vst.msk [vmem:[#allocation4 + $0x60] sm:$0xff] %vm817, %v746
      %831 = vst.msk [vmem:[#allocation4 + $0x68] sm:$0xff] %vm817, %v748
      %832 = vst.msk [vmem:[#allocation4 + $0x70] sm:$0xff] %vm817, %v750
      %833 = vst.msk [vmem:[#allocation4 + $0x78] sm:$0xff] %vm817, %v752
      %834 = vst.msk [vmem:[#allocation4 + $0x80] sm:$0xff] %vm817, %v754
      %835 = vst.msk [vmem:[#allocation4 + $0x88] sm:$0xff] %vm817, %v756
      %836 = vst.msk [vmem:[#allocation4 + $0x90] sm:$0xff] %vm817, %v758
      %837 = vst.msk [vmem:[#allocation4 + $0x98] sm:$0xff] %vm817, %v760
      %838 = vst.msk [vmem:[#allocation4 + $0xa0] sm:$0xff] %vm817, %v762
      %839 = vst.msk [vmem:[#allocation4 + $0xa8] sm:$0xff] %vm817, %v764
      %840 = vst.msk [vmem:[#allocation4 + $0xb0] sm:$0xff] %vm817, %v766
      %841 = vst.msk [vmem:[#allocation4 + $0xb8] sm:$0xff] %vm817, %v768
      %842 = vst.msk [vmem:[#allocation4 + $0xc0] sm:$0xff] %vm817, %v770
      %843 = vst.msk [vmem:[#allocation4 + $0xc8] sm:$0xff] %vm817, %v772
      %844 = vst.msk [vmem:[#allocation4 + $0xd0] sm:$0xff] %vm817, %v774
      %845 = vst.msk [vmem:[#allocation4 + $0xd8] sm:$0xff] %vm817, %v776
      %846 = vst.msk [vmem:[#allocation4 + $0xe0] sm:$0xff] %vm817, %v778
      %847 = vst.msk [vmem:[#allocation4 + $0xe8] sm:$0xff] %vm817, %v780
      %848 = vst.msk [vmem:[#allocation4 + $0xf0] sm:$0xff] %vm817, %v782
      %849 = vst.msk [vmem:[#allocation4 + $0xf8] sm:$0xff] %vm817, %v784
      %v850 = vld [vmem:[%s367] sm:$0xff]
      %v851 = vld [vmem:[%s367 + $0x8] sm:$0xff]
      %v852 = vld [vmem:[%s367 + $0x18] sm:$0xff]
      %v853 = vld [vmem:[%s367 + $0x20] sm:$0xff]
      %v854 = vld [vmem:[%s367 + $0x30] sm:$0xff]
      %v855 = vld [vmem:[%s367 + $0x38] sm:$0xff]
      %v856 = vld [vmem:[%s367 + $0x48] sm:$0xff]
      %v857 = vld [vmem:[%s367 + $0x50] sm:$0xff]
      %v858 = vld [vmem:[%s367 + $0x60] sm:$0xff]
      %v859 = vld [vmem:[%s367 + $0x68] sm:$0xff]
      %v860 = vld [vmem:[%s367 + $0x78] sm:$0xff]
      %v861 = vld [vmem:[%s367 + $0x80] sm:$0xff]
      %v862 = vld [vmem:[%s367 + $0x90] sm:$0xff]
      %v863 = vld [vmem:[%s367 + $0x98] sm:$0xff]
      %v864 = vld [vmem:[%s367 + $0xa8] sm:$0xff]
      %v865 = vld [vmem:[%s367 + $0xb0] sm:$0xff]
      %v866 = vld [vmem:[%s367 + $0xc0] sm:$0xff]
      %v867 = vld [vmem:[%s367 + $0xc8] sm:$0xff]
      %v868 = vld [vmem:[%s367 + $0xd8] sm:$0xff]
      %v869 = vld [vmem:[%s367 + $0xe0] sm:$0xff]
      %v870 = vld [vmem:[%s367 + $0xf0] sm:$0xff]
      %v871 = vld [vmem:[%s367 + $0xf8] sm:$0xff]
      %v872 = vld [vmem:[%s367 + $0x108] sm:$0xff]
      %v873 = vld [vmem:[%s367 + $0x110] sm:$0xff]
      %v874 = vld [vmem:[%s367 + $0x120] sm:$0xff]
      %v875 = vld [vmem:[%s367 + $0x128] sm:$0xff]
      %v876 = vld [vmem:[%s367 + $0x138] sm:$0xff]
      %v877 = vld [vmem:[%s367 + $0x140] sm:$0xff]
      %v878 = vld [vmem:[%s367 + $0x150] sm:$0xff]
      %v879 = vld [vmem:[%s367 + $0x158] sm:$0xff]
      %v880 = vld [vmem:[%s367 + $0x168] sm:$0xff]
      %v881 = vld [vmem:[%s367 + $0x170] sm:$0xff]
      %914 = vrot.lane.b32.xlu0 %v850, 12
      %v915 = vpop.permute.xlu0 %914
      %916 = vrot.lane.b32.xlu0 %v851, 12
      %v917 = vpop.permute.xlu0 %916
      %918 = vrot.lane.b32.xlu0 %v852, 12
      %v919 = vpop.permute.xlu0 %918
      %920 = vrot.lane.b32.xlu0 %v853, 12
      %v921 = vpop.permute.xlu0 %920
      %922 = vrot.lane.b32.xlu0 %v854, 12
      %v923 = vpop.permute.xlu0 %922
      %924 = vrot.lane.b32.xlu0 %v855, 12
      %v925 = vpop.permute.xlu0 %924
      %926 = vrot.lane.b32.xlu0 %v856, 12
      %v927 = vpop.permute.xlu0 %926
      %928 = vrot.lane.b32.xlu0 %v857, 12
      %v929 = vpop.permute.xlu0 %928
      %930 = vrot.lane.b32.xlu0 %v858, 12
      %v931 = vpop.permute.xlu0 %930
      %932 = vrot.lane.b32.xlu0 %v859, 12
      %v933 = vpop.permute.xlu0 %932
      %934 = vrot.lane.b32.xlu0 %v860, 12
      %v935 = vpop.permute.xlu0 %934
      %936 = vrot.lane.b32.xlu0 %v861, 12
      %v937 = vpop.permute.xlu0 %936
      %938 = vrot.lane.b32.xlu0 %v862, 12
      %v939 = vpop.permute.xlu0 %938
      %940 = vrot.lane.b32.xlu0 %v863, 12
      %v941 = vpop.permute.xlu0 %940
      %942 = vrot.lane.b32.xlu0 %v864, 12
      %v943 = vpop.permute.xlu0 %942
      %944 = vrot.lane.b32.xlu0 %v865, 12
      %v945 = vpop.permute.xlu0 %944
      %946 = vrot.lane.b32.xlu0 %v866, 12
      %v947 = vpop.permute.xlu0 %946
      %948 = vrot.lane.b32.xlu0 %v867, 12
      %v949 = vpop.permute.xlu0 %948
      %950 = vrot.lane.b32.xlu0 %v868, 12
      %v951 = vpop.permute.xlu0 %950
      %952 = vrot.lane.b32.xlu0 %v869, 12
      %v953 = vpop.permute.xlu0 %952
      %954 = vrot.lane.b32.xlu0 %v870, 12
      %v955 = vpop.permute.xlu0 %954
      %956 = vrot.lane.b32.xlu0 %v871, 12
      %v957 = vpop.permute.xlu0 %956
      %958 = vrot.lane.b32.xlu0 %v872, 12
      %v959 = vpop.permute.xlu0 %958
      %960 = vrot.lane.b32.xlu0 %v873, 12
      %v961 = vpop.permute.xlu0 %960
      %962 = vrot.lane.b32.xlu0 %v874, 12
      %v963 = vpop.permute.xlu0 %962
      %964 = vrot.lane.b32.xlu0 %v875, 12
      %v965 = vpop.permute.xlu0 %964
      %966 = vrot.lane.b32.xlu0 %v876, 12
      %v967 = vpop.permute.xlu0 %966
      %968 = vrot.lane.b32.xlu0 %v877, 12
      %v969 = vpop.permute.xlu0 %968
      %970 = vrot.lane.b32.xlu0 %v878, 12
      %v971 = vpop.permute.xlu0 %970
      %972 = vrot.lane.b32.xlu0 %v879, 12
      %v973 = vpop.permute.xlu0 %972
      %974 = vrot.lane.b32.xlu0 %v880, 12
      %v975 = vpop.permute.xlu0 %974
      %976 = vrot.lane.b32.xlu0 %v881, 12
      %v977 = vpop.permute.xlu0 %976
      %vm1010 = vcmask 130144
      %1011 = vst.msk [vmem:[#allocation4] sm:$0xff] %vm1010, %v915
      %1012 = vst.msk [vmem:[#allocation4 + $0x8] sm:$0xff] %vm1010, %v917
      %1013 = vst.msk [vmem:[#allocation4 + $0x10] sm:$0xff] %vm1010, %v919
      %1014 = vst.msk [vmem:[#allocation4 + $0x18] sm:$0xff] %vm1010, %v921
      %1015 = vst.msk [vmem:[#allocation4 + $0x20] sm:$0xff] %vm1010, %v923
      %1016 = vst.msk [vmem:[#allocation4 + $0x28] sm:$0xff] %vm1010, %v925
      %1017 = vst.msk [vmem:[#allocation4 + $0x30] sm:$0xff] %vm1010, %v927
      %1018 = vst.msk [vmem:[#allocation4 + $0x38] sm:$0xff] %vm1010, %v929
      %1019 = vst.msk [vmem:[#allocation4 + $0x40] sm:$0xff] %vm1010, %v931
      %1020 = vst.msk [vmem:[#allocation4 + $0x48] sm:$0xff] %vm1010, %v933
      %1021 = vst.msk [vmem:[#allocation4 + $0x50] sm:$0xff] %vm1010, %v935
      %1022 = vst.msk [vmem:[#allocation4 + $0x58] sm:$0xff] %vm1010, %v937
      %1023 = vst.msk [vmem:[#allocation4 + $0x60] sm:$0xff] %vm1010, %v939
      %1024 = vst.msk [vmem:[#allocation4 + $0x68] sm:$0xff] %vm1010, %v941
      %1025 = vst.msk [vmem:[#allocation4 + $0x70] sm:$0xff] %vm1010, %v943
      %1026 = vst.msk [vmem:[#allocation4 + $0x78] sm:$0xff] %vm1010, %v945
      %1027 = vst.msk [vmem:[#allocation4 + $0x80] sm:$0xff] %vm1010, %v947
      %1028 = vst.msk [vmem:[#allocation4 + $0x88] sm:$0xff] %vm1010, %v949
      %1029 = vst.msk [vmem:[#allocation4 + $0x90] sm:$0xff] %vm1010, %v951
      %1030 = vst.msk [vmem:[#allocation4 + $0x98] sm:$0xff] %vm1010, %v953
      %1031 = vst.msk [vmem:[#allocation4 + $0xa0] sm:$0xff] %vm1010, %v955
      %1032 = vst.msk [vmem:[#allocation4 + $0xa8] sm:$0xff] %vm1010, %v957
      %1033 = vst.msk [vmem:[#allocation4 + $0xb0] sm:$0xff] %vm1010, %v959
      %1034 = vst.msk [vmem:[#allocation4 + $0xb8] sm:$0xff] %vm1010, %v961
      %1035 = vst.msk [vmem:[#allocation4 + $0xc0] sm:$0xff] %vm1010, %v963
      %1036 = vst.msk [vmem:[#allocation4 + $0xc8] sm:$0xff] %vm1010, %v965
      %1037 = vst.msk [vmem:[#allocation4 + $0xd0] sm:$0xff] %vm1010, %v967
      %1038 = vst.msk [vmem:[#allocation4 + $0xd8] sm:$0xff] %vm1010, %v969
      %1039 = vst.msk [vmem:[#allocation4 + $0xe0] sm:$0xff] %vm1010, %v971
      %1040 = vst.msk [vmem:[#allocation4 + $0xe8] sm:$0xff] %vm1010, %v973
      %1041 = vst.msk [vmem:[#allocation4 + $0xf0] sm:$0xff] %vm1010, %v975
      %1042 = vst.msk [vmem:[#allocation4 + $0xf8] sm:$0xff] %vm1010, %v977
      %v1043 = vld [vmem:[%s367 + $0x1] sm:$0xff]
      %v1044 = vld [vmem:[%s367 + $0x9] sm:$0xff]
      %v1045 = vld [vmem:[%s367 + $0x19] sm:$0xff]
      %v1046 = vld [vmem:[%s367 + $0x21] sm:$0xff]
      %v1047 = vld [vmem:[%s367 + $0x31] sm:$0xff]
      %v1048 = vld [vmem:[%s367 + $0x39] sm:$0xff]
      %v1049 = vld [vmem:[%s367 + $0x49] sm:$0xff]
      %v1050 = vld [vmem:[%s367 + $0x51] sm:$0xff]
      %v1051 = vld [vmem:[%s367 + $0x61] sm:$0xff]
      %v1052 = vld [vmem:[%s367 + $0x69] sm:$0xff]
      %v1053 = vld [vmem:[%s367 + $0x79] sm:$0xff]
      %v1054 = vld [vmem:[%s367 + $0x81] sm:$0xff]
      %v1055 = vld [vmem:[%s367 + $0x91] sm:$0xff]
      %v1056 = vld [vmem:[%s367 + $0x99] sm:$0xff]
      %v1057 = vld [vmem:[%s367 + $0xa9] sm:$0xff]
      %v1058 = vld [vmem:[%s367 + $0xb1] sm:$0xff]
      %v1059 = vld [vmem:[%s367 + $0xc1] sm:$0xff]
      %v1060 = vld [vmem:[%s367 + $0xc9] sm:$0xff]
      %v1061 = vld [vmem:[%s367 + $0xd9] sm:$0xff]
      %v1062 = vld [vmem:[%s367 + $0xe1] sm:$0xff]
      %v1063 = vld [vmem:[%s367 + $0xf1] sm:$0xff]
      %v1064 = vld [vmem:[%s367 + $0xf9] sm:$0xff]
      %v1065 = vld [vmem:[%s367 + $0x109] sm:$0xff]
      %v1066 = vld [vmem:[%s367 + $0x111] sm:$0xff]
      %v1067 = vld [vmem:[%s367 + $0x121] sm:$0xff]
      %v1068 = vld [vmem:[%s367 + $0x129] sm:$0xff]
      %v1069 = vld [vmem:[%s367 + $0x139] sm:$0xff]
      %v1070 = vld [vmem:[%s367 + $0x141] sm:$0xff]
      %v1071 = vld [vmem:[%s367 + $0x151] sm:$0xff]
      %v1072 = vld [vmem:[%s367 + $0x159] sm:$0xff]
      %v1073 = vld [vmem:[%s367 + $0x169] sm:$0xff]
      %v1074 = vld [vmem:[%s367 + $0x171] sm:$0xff]
      %1107 = vrot.lane.b32.xlu0 %v1043, 16
      %v1108 = vpop.permute.xlu0 %1107
      %1109 = vrot.lane.b32.xlu0 %v1044, 16
      %v1110 = vpop.permute.xlu0 %1109
      %1111 = vrot.lane.b32.xlu0 %v1045, 16
      %v1112 = vpop.permute.xlu0 %1111
      %1113 = vrot.lane.b32.xlu0 %v1046, 16
      %v1114 = vpop.permute.xlu0 %1113
      %1115 = vrot.lane.b32.xlu0 %v1047, 16
      %v1116 = vpop.permute.xlu0 %1115
      %1117 = vrot.lane.b32.xlu0 %v1048, 16
      %v1118 = vpop.permute.xlu0 %1117
      %1119 = vrot.lane.b32.xlu0 %v1049, 16
      %v1120 = vpop.permute.xlu0 %1119
      %1121 = vrot.lane.b32.xlu0 %v1050, 16
      %v1122 = vpop.permute.xlu0 %1121
      %1123 = vrot.lane.b32.xlu0 %v1051, 16
      %v1124 = vpop.permute.xlu0 %1123
      %1125 = vrot.lane.b32.xlu0 %v1052, 16
      %v1126 = vpop.permute.xlu0 %1125
      %1127 = vrot.lane.b32.xlu0 %v1053, 16
      %v1128 = vpop.permute.xlu0 %1127
      %1129 = vrot.lane.b32.xlu0 %v1054, 16
      %v1130 = vpop.permute.xlu0 %1129
      %1131 = vrot.lane.b32.xlu0 %v1055, 16
      %v1132 = vpop.permute.xlu0 %1131
      %1133 = vrot.lane.b32.xlu0 %v1056, 16
      %v1134 = vpop.permute.xlu0 %1133
      %1135 = vrot.lane.b32.xlu0 %v1057, 16
      %v1136 = vpop.permute.xlu0 %1135
      %1137 = vrot.lane.b32.xlu0 %v1058, 16
      %v1138 = vpop.permute.xlu0 %1137
      %1139 = vrot.lane.b32.xlu0 %v1059, 16
      %v1140 = vpop.permute.xlu0 %1139
      %1141 = vrot.lane.b32.xlu0 %v1060, 16
      %v1142 = vpop.permute.xlu0 %1141
      %1143 = vrot.lane.b32.xlu0 %v1061, 16
      %v1144 = vpop.permute.xlu0 %1143
      %1145 = vrot.lane.b32.xlu0 %v1062, 16
      %v1146 = vpop.permute.xlu0 %1145
      %1147 = vrot.lane.b32.xlu0 %v1063, 16
      %v1148 = vpop.permute.xlu0 %1147
      %1149 = vrot.lane.b32.xlu0 %v1064, 16
      %v1150 = vpop.permute.xlu0 %1149
      %1151 = vrot.lane.b32.xlu0 %v1065, 16
      %v1152 = vpop.permute.xlu0 %1151
      %1153 = vrot.lane.b32.xlu0 %v1066, 16
      %v1154 = vpop.permute.xlu0 %1153
      %1155 = vrot.lane.b32.xlu0 %v1067, 16
      %v1156 = vpop.permute.xlu0 %1155
      %1157 = vrot.lane.b32.xlu0 %v1068, 16
      %v1158 = vpop.permute.xlu0 %1157
      %1159 = vrot.lane.b32.xlu0 %v1069, 16
      %v1160 = vpop.permute.xlu0 %1159
      %1161 = vrot.lane.b32.xlu0 %v1070, 16
      %v1162 = vpop.permute.xlu0 %1161
      %1163 = vrot.lane.b32.xlu0 %v1071, 16
      %v1164 = vpop.permute.xlu0 %1163
      %1165 = vrot.lane.b32.xlu0 %v1072, 16
      %v1166 = vpop.permute.xlu0 %1165
      %1167 = vrot.lane.b32.xlu0 %v1073, 16
      %v1168 = vpop.permute.xlu0 %1167
      %1169 = vrot.lane.b32.xlu0 %v1074, 16
      %v1170 = vpop.permute.xlu0 %1169
      %vm1203 = vcmask 162944
      %1204 = vst.msk [vmem:[#allocation4] sm:$0xff] %vm1203, %v1108
      %1205 = vst.msk [vmem:[#allocation4 + $0x8] sm:$0xff] %vm1203, %v1110
      %1206 = vst.msk [vmem:[#allocation4 + $0x10] sm:$0xff] %vm1203, %v1112
      %1207 = vst.msk [vmem:[#allocation4 + $0x18] sm:$0xff] %vm1203, %v1114
      %1208 = vst.msk [vmem:[#allocation4 + $0x20] sm:$0xff] %vm1203, %v1116
      %1209 = vst.msk [vmem:[#allocation4 + $0x28] sm:$0xff] %vm1203, %v1118
      %1210 = vst.msk [vmem:[#allocation4 + $0x30] sm:$0xff] %vm1203, %v1120
      %1211 = vst.msk [vmem:[#allocation4 + $0x38] sm:$0xff] %vm1203, %v1122
      %1212 = vst.msk [vmem:[#allocation4 + $0x40] sm:$0xff] %vm1203, %v1124
      %1213 = vst.msk [vmem:[#allocation4 + $0x48] sm:$0xff] %vm1203, %v1126
      %1214 = vst.msk [vmem:[#allocation4 + $0x50] sm:$0xff] %vm1203, %v1128
      %1215 = vst.msk [vmem:[#allocation4 + $0x58] sm:$0xff] %vm1203, %v1130
      %1216 = vst.msk [vmem:[#allocation4 + $0x60] sm:$0xff] %vm1203, %v1132
      %1217 = vst.msk [vmem:[#allocation4 + $0x68] sm:$0xff] %vm1203, %v1134
      %1218 = vst.msk [vmem:[#allocation4 + $0x70] sm:$0xff] %vm1203, %v1136
      %1219 = vst.msk [vmem:[#allocation4 + $0x78] sm:$0xff] %vm1203, %v1138
      %1220 = vst.msk [vmem:[#allocation4 + $0x80] sm:$0xff] %vm1203, %v1140
      %1221 = vst.msk [vmem:[#allocation4 + $0x88] sm:$0xff] %vm1203, %v1142
      %1222 = vst.msk [vmem:[#allocation4 + $0x90] sm:$0xff] %vm1203, %v1144
      %1223 = vst.msk [vmem:[#allocation4 + $0x98] sm:$0xff] %vm1203, %v1146
      %1224 = vst.msk [vmem:[#allocation4 + $0xa0] sm:$0xff] %vm1203, %v1148
      %1225 = vst.msk [vmem:[#allocation4 + $0xa8] sm:$0xff] %vm1203, %v1150
      %1226 = vst.msk [vmem:[#allocation4 + $0xb0] sm:$0xff] %vm1203, %v1152
      %1227 = vst.msk [vmem:[#allocation4 + $0xb8] sm:$0xff] %vm1203, %v1154
      %1228 = vst.msk [vmem:[#allocation4 + $0xc0] sm:$0xff] %vm1203, %v1156
      %1229 = vst.msk [vmem:[#allocation4 + $0xc8] sm:$0xff] %vm1203, %v1158
      %1230 = vst.msk [vmem:[#allocation4 + $0xd0] sm:$0xff] %vm1203, %v1160
      %1231 = vst.msk [vmem:[#allocation4 + $0xd8] sm:$0xff] %vm1203, %v1162
      %1232 = vst.msk [vmem:[#allocation4 + $0xe0] sm:$0xff] %vm1203, %v1164
      %1233 = vst.msk [vmem:[#allocation4 + $0xe8] sm:$0xff] %vm1203, %v1166
      %1234 = vst.msk [vmem:[#allocation4 + $0xf0] sm:$0xff] %vm1203, %v1168
      %1235 = vst.msk [vmem:[#allocation4 + $0xf8] sm:$0xff] %vm1203, %v1170
      %v1236 = vld [vmem:[%s367 + $0x2] sm:$0xff]
      %v1237 = vld [vmem:[%s367 + $0xa] sm:$0xff]
      %v1238 = vld [vmem:[%s367 + $0x1a] sm:$0xff]
      %v1239 = vld [vmem:[%s367 + $0x22] sm:$0xff]
      %v1240 = vld [vmem:[%s367 + $0x32] sm:$0xff]
      %v1241 = vld [vmem:[%s367 + $0x3a] sm:$0xff]
      %v1242 = vld [vmem:[%s367 + $0x4a] sm:$0xff]
      %v1243 = vld [vmem:[%s367 + $0x52] sm:$0xff]
      %v1244 = vld [vmem:[%s367 + $0x62] sm:$0xff]
      %v1245 = vld [vmem:[%s367 + $0x6a] sm:$0xff]
      %v1246 = vld [vmem:[%s367 + $0x7a] sm:$0xff]
      %v1247 = vld [vmem:[%s367 + $0x82] sm:$0xff]
      %v1248 = vld [vmem:[%s367 + $0x92] sm:$0xff]
      %v1249 = vld [vmem:[%s367 + $0x9a] sm:$0xff]
      %v1250 = vld [vmem:[%s367 + $0xaa] sm:$0xff]
      %v1251 = vld [vmem:[%s367 + $0xb2] sm:$0xff]
      %v1252 = vld [vmem:[%s367 + $0xc2] sm:$0xff]
      %v1253 = vld [vmem:[%s367 + $0xca] sm:$0xff]
      %v1254 = vld [vmem:[%s367 + $0xda] sm:$0xff]
      %v1255 = vld [vmem:[%s367 + $0xe2] sm:$0xff]
      %v1256 = vld [vmem:[%s367 + $0xf2] sm:$0xff]
      %v1257 = vld [vmem:[%s367 + $0xfa] sm:$0xff]
      %v1258 = vld [vmem:[%s367 + $0x10a] sm:$0xff]
      %v1259 = vld [vmem:[%s367 + $0x112] sm:$0xff]
      %v1260 = vld [vmem:[%s367 + $0x122] sm:$0xff]
      %v1261 = vld [vmem:[%s367 + $0x12a] sm:$0xff]
      %v1262 = vld [vmem:[%s367 + $0x13a] sm:$0xff]
      %v1263 = vld [vmem:[%s367 + $0x142] sm:$0xff]
      %v1264 = vld [vmem:[%s367 + $0x152] sm:$0xff]
      %v1265 = vld [vmem:[%s367 + $0x15a] sm:$0xff]
      %v1266 = vld [vmem:[%s367 + $0x16a] sm:$0xff]
      %v1267 = vld [vmem:[%s367 + $0x172] sm:$0xff]
      %1300 = vrot.lane.b32.xlu0 %v1236, 20
      %v1301 = vpop.permute.xlu0 %1300
      %1302 = vrot.lane.b32.xlu0 %v1237, 20
      %v1303 = vpop.permute.xlu0 %1302
      %1304 = vrot.lane.b32.xlu0 %v1238, 20
      %v1305 = vpop.permute.xlu0 %1304
      %1306 = vrot.lane.b32.xlu0 %v1239, 20
      %v1307 = vpop.permute.xlu0 %1306
      %1308 = vrot.lane.b32.xlu0 %v1240, 20
      %v1309 = vpop.permute.xlu0 %1308
      %1310 = vrot.lane.b32.xlu0 %v1241, 20
      %v1311 = vpop.permute.xlu0 %1310
      %1312 = vrot.lane.b32.xlu0 %v1242, 20
      %v1313 = vpop.permute.xlu0 %1312
      %1314 = vrot.lane.b32.xlu0 %v1243, 20
      %v1315 = vpop.permute.xlu0 %1314
      %1316 = vrot.lane.b32.xlu0 %v1244, 20
      %v1317 = vpop.permute.xlu0 %1316
      %1318 = vrot.lane.b32.xlu0 %v1245, 20
      %v1319 = vpop.permute.xlu0 %1318
      %1320 = vrot.lane.b32.xlu0 %v1246, 20
      %v1321 = vpop.permute.xlu0 %1320
      %1322 = vrot.lane.b32.xlu0 %v1247, 20
      %v1323 = vpop.permute.xlu0 %1322
      %1324 = vrot.lane.b32.xlu0 %v1248, 20
      %v1325 = vpop.permute.xlu0 %1324
      %1326 = vrot.lane.b32.xlu0 %v1249, 20
      %v1327 = vpop.permute.xlu0 %1326
      %1328 = vrot.lane.b32.xlu0 %v1250, 20
      %v1329 = vpop.permute.xlu0 %1328
      %1330 = vrot.lane.b32.xlu0 %v1251, 20
      %v1331 = vpop.permute.xlu0 %1330
      %1332 = vrot.lane.b32.xlu0 %v1252, 20
      %v1333 = vpop.permute.xlu0 %1332
      %1334 = vrot.lane.b32.xlu0 %v1253, 20
      %v1335 = vpop.permute.xlu0 %1334
      %1336 = vrot.lane.b32.xlu0 %v1254, 20
      %v1337 = vpop.permute.xlu0 %1336
      %1338 = vrot.lane.b32.xlu0 %v1255, 20
      %v1339 = vpop.permute.xlu0 %1338
      %1340 = vrot.lane.b32.xlu0 %v1256, 20
      %v1341 = vpop.permute.xlu0 %1340
      %1342 = vrot.lane.b32.xlu0 %v1257, 20
      %v1343 = vpop.permute.xlu0 %1342
      %1344 = vrot.lane.b32.xlu0 %v1258, 20
      %v1345 = vpop.permute.xlu0 %1344
      %1346 = vrot.lane.b32.xlu0 %v1259, 20
      %v1347 = vpop.permute.xlu0 %1346
      %1348 = vrot.lane.b32.xlu0 %v1260, 20
      %v1349 = vpop.permute.xlu0 %1348
      %1350 = vrot.lane.b32.xlu0 %v1261, 20
      %v1351 = vpop.permute.xlu0 %1350
      %1352 = vrot.lane.b32.xlu0 %v1262, 20
      %v1353 = vpop.permute.xlu0 %1352
      %1354 = vrot.lane.b32.xlu0 %v1263, 20
      %v1355 = vpop.permute.xlu0 %1354
      %1356 = vrot.lane.b32.xlu0 %v1264, 20
      %v1357 = vpop.permute.xlu0 %1356
      %1358 = vrot.lane.b32.xlu0 %v1265, 20
      %v1359 = vpop.permute.xlu0 %1358
      %1360 = vrot.lane.b32.xlu0 %v1266, 20
      %v1361 = vpop.permute.xlu0 %1360
      %1362 = vrot.lane.b32.xlu0 %v1267, 20
      %v1363 = vpop.permute.xlu0 %1362
      %vm1396 = vcmask 195744
      %1397 = vst.msk [vmem:[#allocation4] sm:$0xff] %vm1396, %v1301
      %1398 = vst.msk [vmem:[#allocation4 + $0x8] sm:$0xff] %vm1396, %v1303
      %1399 = vst.msk [vmem:[#allocation4 + $0x10] sm:$0xff] %vm1396, %v1305
      %1400 = vst.msk [vmem:[#allocation4 + $0x18] sm:$0xff] %vm1396, %v1307
      %1401 = vst.msk [vmem:[#allocation4 + $0x20] sm:$0xff] %vm1396, %v1309
      %1402 = vst.msk [vmem:[#allocation4 + $0x28] sm:$0xff] %vm1396, %v1311
      %1403 = vst.msk [vmem:[#allocation4 + $0x30] sm:$0xff] %vm1396, %v1313
      %1404 = vst.msk [vmem:[#allocation4 + $0x38] sm:$0xff] %vm1396, %v1315
      %1405 = vst.msk [vmem:[#allocation4 + $0x40] sm:$0xff] %vm1396, %v1317
      %1406 = vst.msk [vmem:[#allocation4 + $0x48] sm:$0xff] %vm1396, %v1319
      %1407 = vst.msk [vmem:[#allocation4 + $0x50] sm:$0xff] %vm1396, %v1321
      %1408 = vst.msk [vmem:[#allocation4 + $0x58] sm:$0xff] %vm1396, %v1323
      %1409 = vst.msk [vmem:[#allocation4 + $0x60] sm:$0xff] %vm1396, %v1325
      %1410 = vst.msk [vmem:[#allocation4 + $0x68] sm:$0xff] %vm1396, %v1327
      %1411 = vst.msk [vmem:[#allocation4 + $0x70] sm:$0xff] %vm1396, %v1329
      %1412 = vst.msk [vmem:[#allocation4 + $0x78] sm:$0xff] %vm1396, %v1331
      %1413 = vst.msk [vmem:[#allocation4 + $0x80] sm:$0xff] %vm1396, %v1333
      %1414 = vst.msk [vmem:[#allocation4 + $0x88] sm:$0xff] %vm1396, %v1335
      %1415 = vst.msk [vmem:[#allocation4 + $0x90] sm:$0xff] %vm1396, %v1337
      %1416 = vst.msk [vmem:[#allocation4 + $0x98] sm:$0xff] %vm1396, %v1339
      %1417 = vst.msk [vmem:[#allocation4 + $0xa0] sm:$0xff] %vm1396, %v1341
      %1418 = vst.msk [vmem:[#allocation4 + $0xa8] sm:$0xff] %vm1396, %v1343
      %1419 = vst.msk [vmem:[#allocation4 + $0xb0] sm:$0xff] %vm1396, %v1345
      %1420 = vst.msk [vmem:[#allocation4 + $0xb8] sm:$0xff] %vm1396, %v1347
      %1421 = vst.msk [vmem:[#allocation4 + $0xc0] sm:$0xff] %vm1396, %v1349
      %1422 = vst.msk [vmem:[#allocation4 + $0xc8] sm:$0xff] %vm1396, %v1351
      %1423 = vst.msk [vmem:[#allocation4 + $0xd0] sm:$0xff] %vm1396, %v1353
      %1424 = vst.msk [vmem:[#allocation4 + $0xd8] sm:$0xff] %vm1396, %v1355
      %1425 = vst.msk [vmem:[#allocation4 + $0xe0] sm:$0xff] %vm1396, %v1357
      %1426 = vst.msk [vmem:[#allocation4 + $0xe8] sm:$0xff] %vm1396, %v1359
      %1427 = vst.msk [vmem:[#allocation4 + $0xf0] sm:$0xff] %vm1396, %v1361
      %1428 = vst.msk [vmem:[#allocation4 + $0xf8] sm:$0xff] %vm1396, %v1363
      %s1429 = scalar_lea.vmem [#allocation2], 48
      %v1430 = vld [vmem:[%s1429] sm:$0xff]
      %v1431 = vld [vmem:[%s1429 + $0x8] sm:$0xff]
      %v1432 = vld [vmem:[%s1429 + $0x18] sm:$0xff]
      %v1433 = vld [vmem:[%s1429 + $0x20] sm:$0xff]
      %v1434 = vld [vmem:[%s1429 + $0x30] sm:$0xff]
      %v1435 = vld [vmem:[%s1429 + $0x38] sm:$0xff]
      %v1436 = vld [vmem:[%s1429 + $0x48] sm:$0xff]
      %v1437 = vld [vmem:[%s1429 + $0x50] sm:$0xff]
      %v1438 = vld [vmem:[%s1429 + $0x60] sm:$0xff]
      %v1439 = vld [vmem:[%s1429 + $0x68] sm:$0xff]
      %v1440 = vld [vmem:[%s1429 + $0x78] sm:$0xff]
      %v1441 = vld [vmem:[%s1429 + $0x80] sm:$0xff]
      %v1442 = vld [vmem:[%s1429 + $0x90] sm:$0xff]
      %v1443 = vld [vmem:[%s1429 + $0x98] sm:$0xff]
      %v1444 = vld [vmem:[%s1429 + $0xa8] sm:$0xff]
      %v1445 = vld [vmem:[%s1429 + $0xb0] sm:$0xff]
      %v1446 = vld [vmem:[%s1429 + $0xc0] sm:$0xff]
      %v1447 = vld [vmem:[%s1429 + $0xc8] sm:$0xff]
      %v1448 = vld [vmem:[%s1429 + $0xd8] sm:$0xff]
      %v1449 = vld [vmem:[%s1429 + $0xe0] sm:$0xff]
      %v1450 = vld [vmem:[%s1429 + $0xf0] sm:$0xff]
      %v1451 = vld [vmem:[%s1429 + $0xf8] sm:$0xff]
      %v1452 = vld [vmem:[%s1429 + $0x108] sm:$0xff]
      %v1453 = vld [vmem:[%s1429 + $0x110] sm:$0xff]
      %v1454 = vld [vmem:[%s1429 + $0x120] sm:$0xff]
      %v1455 = vld [vmem:[%s1429 + $0x128] sm:$0xff]
      %v1456 = vld [vmem:[%s1429 + $0x138] sm:$0xff]
      %v1457 = vld [vmem:[%s1429 + $0x140] sm:$0xff]
      %v1458 = vld [vmem:[%s1429 + $0x150] sm:$0xff]
      %v1459 = vld [vmem:[%s1429 + $0x158] sm:$0xff]
      %v1460 = vld [vmem:[%s1429 + $0x168] sm:$0xff]
      %v1461 = vld [vmem:[%s1429 + $0x170] sm:$0xff]
      %1494 = vrot.lane.b32.xlu0 %v1430, 24
      %v1495 = vpop.permute.xlu0 %1494
      %1496 = vrot.lane.b32.xlu0 %v1431, 24
      %v1497 = vpop.permute.xlu0 %1496
      %1498 = vrot.lane.b32.xlu0 %v1432, 24
      %v1499 = vpop.permute.xlu0 %1498
      %1500 = vrot.lane.b32.xlu0 %v1433, 24
      %v1501 = vpop.permute.xlu0 %1500
      %1502 = vrot.lane.b32.xlu0 %v1434, 24
      %v1503 = vpop.permute.xlu0 %1502
      %1504 = vrot.lane.b32.xlu0 %v1435, 24
      %v1505 = vpop.permute.xlu0 %1504
      %1506 = vrot.lane.b32.xlu0 %v1436, 24
      %v1507 = vpop.permute.xlu0 %1506
      %1508 = vrot.lane.b32.xlu0 %v1437, 24
      %v1509 = vpop.permute.xlu0 %1508
      %1510 = vrot.lane.b32.xlu0 %v1438, 24
      %v1511 = vpop.permute.xlu0 %1510
      %1512 = vrot.lane.b32.xlu0 %v1439, 24
      %v1513 = vpop.permute.xlu0 %1512
      %1514 = vrot.lane.b32.xlu0 %v1440, 24
      %v1515 = vpop.permute.xlu0 %1514
      %1516 = vrot.lane.b32.xlu0 %v1441, 24
      %v1517 = vpop.permute.xlu0 %1516
      %1518 = vrot.lane.b32.xlu0 %v1442, 24
      %v1519 = vpop.permute.xlu0 %1518
      %1520 = vrot.lane.b32.xlu0 %v1443, 24
      %v1521 = vpop.permute.xlu0 %1520
      %1522 = vrot.lane.b32.xlu0 %v1444, 24
      %v1523 = vpop.permute.xlu0 %1522
      %1524 = vrot.lane.b32.xlu0 %v1445, 24
      %v1525 = vpop.permute.xlu0 %1524
      %1526 = vrot.lane.b32.xlu0 %v1446, 24
      %v1527 = vpop.permute.xlu0 %1526
      %1528 = vrot.lane.b32.xlu0 %v1447, 24
      %v1529 = vpop.permute.xlu0 %1528
      %1530 = vrot.lane.b32.xlu0 %v1448, 24
      %v1531 = vpop.permute.xlu0 %1530
      %1532 = vrot.lane.b32.xlu0 %v1449, 24
      %v1533 = vpop.permute.xlu0 %1532
      %1534 = vrot.lane.b32.xlu0 %v1450, 24
      %v1535 = vpop.permute.xlu0 %1534
      %1536 = vrot.lane.b32.xlu0 %v1451, 24
      %v1537 = vpop.permute.xlu0 %1536
      %1538 = vrot.lane.b32.xlu0 %v1452, 24
      %v1539 = vpop.permute.xlu0 %1538
      %1540 = vrot.lane.b32.xlu0 %v1453, 24
      %v1541 = vpop.permute.xlu0 %1540
      %1542 = vrot.lane.b32.xlu0 %v1454, 24
      %v1543 = vpop.permute.xlu0 %1542
      %1544 = vrot.lane.b32.xlu0 %v1455, 24
      %v1545 = vpop.permute.xlu0 %1544
      %1546 = vrot.lane.b32.xlu0 %v1456, 24
      %v1547 = vpop.permute.xlu0 %1546
      %1548 = vrot.lane.b32.xlu0 %v1457, 24
      %v1549 = vpop.permute.xlu0 %1548
      %1550 = vrot.lane.b32.xlu0 %v1458, 24
      %v1551 = vpop.permute.xlu0 %1550
      %1552 = vrot.lane.b32.xlu0 %v1459, 24
      %v1553 = vpop.permute.xlu0 %1552
      %1554 = vrot.lane.b32.xlu0 %v1460, 24
      %v1555 = vpop.permute.xlu0 %1554
      %1556 = vrot.lane.b32.xlu0 %v1461, 24
      %v1557 = vpop.permute.xlu0 %1556
      %vm1590 = vcmask 228544
      %1591 = vst.msk [vmem:[#allocation4] sm:$0xff] %vm1590, %v1495
      %1592 = vst.msk [vmem:[#allocation4 + $0x8] sm:$0xff] %vm1590, %v1497
      %1593 = vst.msk [vmem:[#allocation4 + $0x10] sm:$0xff] %vm1590, %v1499
      %1594 = vst.msk [vmem:[#allocation4 + $0x18] sm:$0xff] %vm1590, %v1501
      %1595 = vst.msk [vmem:[#allocation4 + $0x20] sm:$0xff] %vm1590, %v1503
      %1596 = vst.msk [vmem:[#allocation4 + $0x28] sm:$0xff] %vm1590, %v1505
      %1597 = vst.msk [vmem:[#allocation4 + $0x30] sm:$0xff] %vm1590, %v1507
      %1598 = vst.msk [vmem:[#allocation4 + $0x38] sm:$0xff] %vm1590, %v1509
      %1599 = vst.msk [vmem:[#allocation4 + $0x40] sm:$0xff] %vm1590, %v1511
      %1600 = vst.msk [vmem:[#allocation4 + $0x48] sm:$0xff] %vm1590, %v1513
      %1601 = vst.msk [vmem:[#allocation4 + $0x50] sm:$0xff] %vm1590, %v1515
      %1602 = vst.msk [vmem:[#allocation4 + $0x58] sm:$0xff] %vm1590, %v1517
      %1603 = vst.msk [vmem:[#allocation4 + $0x60] sm:$0xff] %vm1590, %v1519
      %1604 = vst.msk [vmem:[#allocation4 + $0x68] sm:$0xff] %vm1590, %v1521
      %1605 = vst.msk [vmem:[#allocation4 + $0x70] sm:$0xff] %vm1590, %v1523
      %1606 = vst.msk [vmem:[#allocation4 + $0x78] sm:$0xff] %vm1590, %v1525
      %1607 = vst.msk [vmem:[#allocation4 + $0x80] sm:$0xff] %vm1590, %v1527
      %1608 = vst.msk [vmem:[#allocation4 + $0x88] sm:$0xff] %vm1590, %v1529
      %1609 = vst.msk [vmem:[#allocation4 + $0x90] sm:$0xff] %vm1590, %v1531
      %1610 = vst.msk [vmem:[#allocation4 + $0x98] sm:$0xff] %vm1590, %v1533
      %1611 = vst.msk [vmem:[#allocation4 + $0xa0] sm:$0xff] %vm1590, %v1535
      %1612 = vst.msk [vmem:[#allocation4 + $0xa8] sm:$0xff] %vm1590, %v1537
      %1613 = vst.msk [vmem:[#allocation4 + $0xb0] sm:$0xff] %vm1590, %v1539
      %1614 = vst.msk [vmem:[#allocation4 + $0xb8] sm:$0xff] %vm1590, %v1541
      %1615 = vst.msk [vmem:[#allocation4 + $0xc0] sm:$0xff] %vm1590, %v1543
      %1616 = vst.msk [vmem:[#allocation4 + $0xc8] sm:$0xff] %vm1590, %v1545
      %1617 = vst.msk [vmem:[#allocation4 + $0xd0] sm:$0xff] %vm1590, %v1547
      %1618 = vst.msk [vmem:[#allocation4 + $0xd8] sm:$0xff] %vm1590, %v1549
      %1619 = vst.msk [vmem:[#allocation4 + $0xe0] sm:$0xff] %vm1590, %v1551
      %1620 = vst.msk [vmem:[#allocation4 + $0xe8] sm:$0xff] %vm1590, %v1553
      %1621 = vst.msk [vmem:[#allocation4 + $0xf0] sm:$0xff] %vm1590, %v1555
      %1622 = vst.msk [vmem:[#allocation4 + $0xf8] sm:$0xff] %vm1590, %v1557
      %v1623 = vld [vmem:[%s1429 + $0x1] sm:$0xff]
      %v1624 = vld [vmem:[%s1429 + $0x9] sm:$0xff]
      %v1625 = vld [vmem:[%s1429 + $0x19] sm:$0xff]
      %v1626 = vld [vmem:[%s1429 + $0x21] sm:$0xff]
      %v1627 = vld [vmem:[%s1429 + $0x31] sm:$0xff]
      %v1628 = vld [vmem:[%s1429 + $0x39] sm:$0xff]
      %v1629 = vld [vmem:[%s1429 + $0x49] sm:$0xff]
      %v1630 = vld [vmem:[%s1429 + $0x51] sm:$0xff]
      %v1631 = vld [vmem:[%s1429 + $0x61] sm:$0xff]
      %v1632 = vld [vmem:[%s1429 + $0x69] sm:$0xff]
      %v1633 = vld [vmem:[%s1429 + $0x79] sm:$0xff]
      %v1634 = vld [vmem:[%s1429 + $0x81] sm:$0xff]
      %v1635 = vld [vmem:[%s1429 + $0x91] sm:$0xff]
      %v1636 = vld [vmem:[%s1429 + $0x99] sm:$0xff]
      %v1637 = vld [vmem:[%s1429 + $0xa9] sm:$0xff]
      %v1638 = vld [vmem:[%s1429 + $0xb1] sm:$0xff]
      %v1639 = vld [vmem:[%s1429 + $0xc1] sm:$0xff]
      %v1640 = vld [vmem:[%s1429 + $0xc9] sm:$0xff]
      %v1641 = vld [vmem:[%s1429 + $0xd9] sm:$0xff]
      %v1642 = vld [vmem:[%s1429 + $0xe1] sm:$0xff]
      %v1643 = vld [vmem:[%s1429 + $0xf1] sm:$0xff]
      %v1644 = vld [vmem:[%s1429 + $0xf9] sm:$0xff]
      %v1645 = vld [vmem:[%s1429 + $0x109] sm:$0xff]
      %v1646 = vld [vmem:[%s1429 + $0x111] sm:$0xff]
      %v1647 = vld [vmem:[%s1429 + $0x121] sm:$0xff]
      %v1648 = vld [vmem:[%s1429 + $0x129] sm:$0xff]
      %v1649 = vld [vmem:[%s1429 + $0x139] sm:$0xff]
      %v1650 = vld [vmem:[%s1429 + $0x141] sm:$0xff]
      %v1651 = vld [vmem:[%s1429 + $0x151] sm:$0xff]
      %v1652 = vld [vmem:[%s1429 + $0x159] sm:$0xff]
      %v1653 = vld [vmem:[%s1429 + $0x169] sm:$0xff]
      %v1654 = vld [vmem:[%s1429 + $0x171] sm:$0xff]
      %1687 = vrot.lane.b32.xlu0 %v1623, 28
      %v1688 = vpop.permute.xlu0 %1687
      %1689 = vrot.lane.b32.xlu0 %v1624, 28
      %v1690 = vpop.permute.xlu0 %1689
      %1691 = vrot.lane.b32.xlu0 %v1625, 28
      %v1692 = vpop.permute.xlu0 %1691
      %1693 = vrot.lane.b32.xlu0 %v1626, 28
      %v1694 = vpop.permute.xlu0 %1693
      %1695 = vrot.lane.b32.xlu0 %v1627, 28
      %v1696 = vpop.permute.xlu0 %1695
      %1697 = vrot.lane.b32.xlu0 %v1628, 28
      %v1698 = vpop.permute.xlu0 %1697
      %1699 = vrot.lane.b32.xlu0 %v1629, 28
      %v1700 = vpop.permute.xlu0 %1699
      %1701 = vrot.lane.b32.xlu0 %v1630, 28
      %v1702 = vpop.permute.xlu0 %1701
      %1703 = vrot.lane.b32.xlu0 %v1631, 28
      %v1704 = vpop.permute.xlu0 %1703
      %1705 = vrot.lane.b32.xlu0 %v1632, 28
      %v1706 = vpop.permute.xlu0 %1705
      %1707 = vrot.lane.b32.xlu0 %v1633, 28
      %v1708 = vpop.permute.xlu0 %1707
      %1709 = vrot.lane.b32.xlu0 %v1634, 28
      %v1710 = vpop.permute.xlu0 %1709
      %1711 = vrot.lane.b32.xlu0 %v1635, 28
      %v1712 = vpop.permute.xlu0 %1711
      %1713 = vrot.lane.b32.xlu0 %v1636, 28
      %v1714 = vpop.permute.xlu0 %1713
      %1715 = vrot.lane.b32.xlu0 %v1637, 28
      %v1716 = vpop.permute.xlu0 %1715
      %1717 = vrot.lane.b32.xlu0 %v1638, 28
      %v1718 = vpop.permute.xlu0 %1717
      %1719 = vrot.lane.b32.xlu0 %v1639, 28
      %v1720 = vpop.permute.xlu0 %1719
      %1721 = vrot.lane.b32.xlu0 %v1640, 28
      %v1722 = vpop.permute.xlu0 %1721
      %1723 = vrot.lane.b32.xlu0 %v1641, 28
      %v1724 = vpop.permute.xlu0 %1723
      %1725 = vrot.lane.b32.xlu0 %v1642, 28
      %v1726 = vpop.permute.xlu0 %1725
      %1727 = vrot.lane.b32.xlu0 %v1643, 28
      %v1728 = vpop.permute.xlu0 %1727
      %1729 = vrot.lane.b32.xlu0 %v1644, 28
      %v1730 = vpop.permute.xlu0 %1729
      %1731 = vrot.lane.b32.xlu0 %v1645, 28
      %v1732 = vpop.permute.xlu0 %1731
      %1733 = vrot.lane.b32.xlu0 %v1646, 28
      %v1734 = vpop.permute.xlu0 %1733
      %1735 = vrot.lane.b32.xlu0 %v1647, 28
      %v1736 = vpop.permute.xlu0 %1735
      %1737 = vrot.lane.b32.xlu0 %v1648, 28
      %v1738 = vpop.permute.xlu0 %1737
      %1739 = vrot.lane.b32.xlu0 %v1649, 28
      %v1740 = vpop.permute.xlu0 %1739
      %1741 = vrot.lane.b32.xlu0 %v1650, 28
      %v1742 = vpop.permute.xlu0 %1741
      %1743 = vrot.lane.b32.xlu0 %v1651, 28
      %v1744 = vpop.permute.xlu0 %1743
      %1745 = vrot.lane.b32.xlu0 %v1652, 28
      %v1746 = vpop.permute.xlu0 %1745
      %1747 = vrot.lane.b32.xlu0 %v1653, 28
      %v1748 = vpop.permute.xlu0 %1747
      %1749 = vrot.lane.b32.xlu0 %v1654, 28
      %v1750 = vpop.permute.xlu0 %1749
      %vm1783 = vcmask 261344
      %1784 = vst.msk [vmem:[#allocation4] sm:$0xff] %vm1783, %v1688
      %1785 = vst.msk [vmem:[#allocation4 + $0x8] sm:$0xff] %vm1783, %v1690
      %1786 = vst.msk [vmem:[#allocation4 + $0x10] sm:$0xff] %vm1783, %v1692
      %1787 = vst.msk [vmem:[#allocation4 + $0x18] sm:$0xff] %vm1783, %v1694
      %1788 = vst.msk [vmem:[#allocation4 + $0x20] sm:$0xff] %vm1783, %v1696
      %1789 = vst.msk [vmem:[#allocation4 + $0x28] sm:$0xff] %vm1783, %v1698
      %1790 = vst.msk [vmem:[#allocation4 + $0x30] sm:$0xff] %vm1783, %v1700
      %1791 = vst.msk [vmem:[#allocation4 + $0x38] sm:$0xff] %vm1783, %v1702
      %1792 = vst.msk [vmem:[#allocation4 + $0x40] sm:$0xff] %vm1783, %v1704
      %1793 = vst.msk [vmem:[#allocation4 + $0x48] sm:$0xff] %vm1783, %v1706
      %1794 = vst.msk [vmem:[#allocation4 + $0x50] sm:$0xff] %vm1783, %v1708
      %1795 = vst.msk [vmem:[#allocation4 + $0x58] sm:$0xff] %vm1783, %v1710
      %1796 = vst.msk [vmem:[#allocation4 + $0x60] sm:$0xff] %vm1783, %v1712
      %1797 = vst.msk [vmem:[#allocation4 + $0x68] sm:$0xff] %vm1783, %v1714
      %1798 = vst.msk [vmem:[#allocation4 + $0x70] sm:$0xff] %vm1783, %v1716
      %1799 = vst.msk [vmem:[#allocation4 + $0x78] sm:$0xff] %vm1783, %v1718
      %1800 = vst.msk [vmem:[#allocation4 + $0x80] sm:$0xff] %vm1783, %v1720
      %1801 = vst.msk [vmem:[#allocation4 + $0x88] sm:$0xff] %vm1783, %v1722
      %1802 = vst.msk [vmem:[#allocation4 + $0x90] sm:$0xff] %vm1783, %v1724
      %1803 = vst.msk [vmem:[#allocation4 + $0x98] sm:$0xff] %vm1783, %v1726
      %1804 = vst.msk [vmem:[#allocation4 + $0xa0] sm:$0xff] %vm1783, %v1728
      %1805 = vst.msk [vmem:[#allocation4 + $0xa8] sm:$0xff] %vm1783, %v1730
      %1806 = vst.msk [vmem:[#allocation4 + $0xb0] sm:$0xff] %vm1783, %v1732
      %1807 = vst.msk [vmem:[#allocation4 + $0xb8] sm:$0xff] %vm1783, %v1734
      %1808 = vst.msk [vmem:[#allocation4 + $0xc0] sm:$0xff] %vm1783, %v1736
      %1809 = vst.msk [vmem:[#allocation4 + $0xc8] sm:$0xff] %vm1783, %v1738
      %1810 = vst.msk [vmem:[#allocation4 + $0xd0] sm:$0xff] %vm1783, %v1740
      %1811 = vst.msk [vmem:[#allocation4 + $0xd8] sm:$0xff] %vm1783, %v1742
      %1812 = vst.msk [vmem:[#allocation4 + $0xe0] sm:$0xff] %vm1783, %v1744
      %1813 = vst.msk [vmem:[#allocation4 + $0xe8] sm:$0xff] %vm1783, %v1746
      %1814 = vst.msk [vmem:[#allocation4 + $0xf0] sm:$0xff] %vm1783, %v1748
      %1815 = vst.msk [vmem:[#allocation4 + $0xf8] sm:$0xff] %vm1783, %v1750
      %v1816 = vld [vmem:[%s1429 + $0x2] sm:$0xff]
      %v1817 = vld [vmem:[%s1429 + $0xa] sm:$0xff]
      %v1818 = vld [vmem:[%s1429 + $0x1a] sm:$0xff]
      %v1819 = vld [vmem:[%s1429 + $0x22] sm:$0xff]
      %v1820 = vld [vmem:[%s1429 + $0x32] sm:$0xff]
      %v1821 = vld [vmem:[%s1429 + $0x3a] sm:$0xff]
      %v1822 = vld [vmem:[%s1429 + $0x4a] sm:$0xff]
      %v1823 = vld [vmem:[%s1429 + $0x52] sm:$0xff]
      %v1824 = vld [vmem:[%s1429 + $0x62] sm:$0xff]
      %v1825 = vld [vmem:[%s1429 + $0x6a] sm:$0xff]
      %v1826 = vld [vmem:[%s1429 + $0x7a] sm:$0xff]
      %v1827 = vld [vmem:[%s1429 + $0x82] sm:$0xff]
      %v1828 = vld [vmem:[%s1429 + $0x92] sm:$0xff]
      %v1829 = vld [vmem:[%s1429 + $0x9a] sm:$0xff]
      %v1830 = vld [vmem:[%s1429 + $0xaa] sm:$0xff]
      %v1831 = vld [vmem:[%s1429 + $0xb2] sm:$0xff]
      %v1832 = vld [vmem:[%s1429 + $0xc2] sm:$0xff]
      %v1833 = vld [vmem:[%s1429 + $0xca] sm:$0xff]
      %v1834 = vld [vmem:[%s1429 + $0xda] sm:$0xff]
      %v1835 = vld [vmem:[%s1429 + $0xe2] sm:$0xff]
      %v1836 = vld [vmem:[%s1429 + $0xf2] sm:$0xff]
      %v1837 = vld [vmem:[%s1429 + $0xfa] sm:$0xff]
      %v1838 = vld [vmem:[%s1429 + $0x10a] sm:$0xff]
      %v1839 = vld [vmem:[%s1429 + $0x112] sm:$0xff]
      %v1840 = vld [vmem:[%s1429 + $0x122] sm:$0xff]
      %v1841 = vld [vmem:[%s1429 + $0x12a] sm:$0xff]
      %v1842 = vld [vmem:[%s1429 + $0x13a] sm:$0xff]
      %v1843 = vld [vmem:[%s1429 + $0x142] sm:$0xff]
      %v1844 = vld [vmem:[%s1429 + $0x152] sm:$0xff]
      %v1845 = vld [vmem:[%s1429 + $0x15a] sm:$0xff]
      %v1846 = vld [vmem:[%s1429 + $0x16a] sm:$0xff]
      %v1847 = vld [vmem:[%s1429 + $0x172] sm:$0xff]
      %1880 = vrot.lane.b32.xlu0 %v1816, 32
      %v1881 = vpop.permute.xlu0 %1880
      %1882 = vrot.lane.b32.xlu0 %v1817, 32
      %v1883 = vpop.permute.xlu0 %1882
      %1884 = vrot.lane.b32.xlu0 %v1818, 32
      %v1885 = vpop.permute.xlu0 %1884
      %1886 = vrot.lane.b32.xlu0 %v1819, 32
      %v1887 = vpop.permute.xlu0 %1886
      %1888 = vrot.lane.b32.xlu0 %v1820, 32
      %v1889 = vpop.permute.xlu0 %1888
      %1890 = vrot.lane.b32.xlu0 %v1821, 32
      %v1891 = vpop.permute.xlu0 %1890
      %1892 = vrot.lane.b32.xlu0 %v1822, 32
      %v1893 = vpop.permute.xlu0 %1892
      %1894 = vrot.lane.b32.xlu0 %v1823, 32
      %v1895 = vpop.permute.xlu0 %1894
      %1896 = vrot.lane.b32.xlu0 %v1824, 32
      %v1897 = vpop.permute.xlu0 %1896
      %1898 = vrot.lane.b32.xlu0 %v1825, 32
      %v1899 = vpop.permute.xlu0 %1898
      %1900 = vrot.lane.b32.xlu0 %v1826, 32
      %v1901 = vpop.permute.xlu0 %1900
      %1902 = vrot.lane.b32.xlu0 %v1827, 32
      %v1903 = vpop.permute.xlu0 %1902
      %1904 = vrot.lane.b32.xlu0 %v1828, 32
      %v1905 = vpop.permute.xlu0 %1904
      %1906 = vrot.lane.b32.xlu0 %v1829, 32
      %v1907 = vpop.permute.xlu0 %1906
      %1908 = vrot.lane.b32.xlu0 %v1830, 32
      %v1909 = vpop.permute.xlu0 %1908
      %1910 = vrot.lane.b32.xlu0 %v1831, 32
      %v1911 = vpop.permute.xlu0 %1910
      %1912 = vrot.lane.b32.xlu0 %v1832, 32
      %v1913 = vpop.permute.xlu0 %1912
      %1914 = vrot.lane.b32.xlu0 %v1833, 32
      %v1915 = vpop.permute.xlu0 %1914
      %1916 = vrot.lane.b32.xlu0 %v1834, 32
      %v1917 = vpop.permute.xlu0 %1916
      %1918 = vrot.lane.b32.xlu0 %v1835, 32
      %v1919 = vpop.permute.xlu0 %1918
      %1920 = vrot.lane.b32.xlu0 %v1836, 32
      %v1921 = vpop.permute.xlu0 %1920
      %1922 = vrot.lane.b32.xlu0 %v1837, 32
      %v1923 = vpop.permute.xlu0 %1922
      %1924 = vrot.lane.b32.xlu0 %v1838, 32
      %v1925 = vpop.permute.xlu0 %1924
      %1926 = vrot.lane.b32.xlu0 %v1839, 32
      %v1927 = vpop.permute.xlu0 %1926
      %1928 = vrot.lane.b32.xlu0 %v1840, 32
      %v1929 = vpop.permute.xlu0 %1928
      %1930 = vrot.lane.b32.xlu0 %v1841, 32
      %v1931 = vpop.permute.xlu0 %1930
      %1932 = vrot.lane.b32.xlu0 %v1842, 32
      %v1933 = vpop.permute.xlu0 %1932
      %1934 = vrot.lane.b32.xlu0 %v1843, 32
      %v1935 = vpop.permute.xlu0 %1934
      %1936 = vrot.lane.b32.xlu0 %v1844, 32
      %v1937 = vpop.permute.xlu0 %1936
      %1938 = vrot.lane.b32.xlu0 %v1845, 32
      %v1939 = vpop.permute.xlu0 %1938
      %1940 = vrot.lane.b32.xlu0 %v1846, 32
      %v1941 = vpop.permute.xlu0 %1940
      %1942 = vrot.lane.b32.xlu0 %v1847, 32
      %v1943 = vpop.permute.xlu0 %1942
      %vm1976 = vcmask 294144
      %1977 = vst.msk [vmem:[#allocation4] sm:$0xff] %vm1976, %v1881
      %1978 = vst.msk [vmem:[#allocation4 + $0x8] sm:$0xff] %vm1976, %v1883
      %1979 = vst.msk [vmem:[#allocation4 + $0x10] sm:$0xff] %vm1976, %v1885
      %1980 = vst.msk [vmem:[#allocation4 + $0x18] sm:$0xff] %vm1976, %v1887
      %1981 = vst.msk [vmem:[#allocation4 + $0x20] sm:$0xff] %vm1976, %v1889
      %1982 = vst.msk [vmem:[#allocation4 + $0x28] sm:$0xff] %vm1976, %v1891
      %1983 = vst.msk [vmem:[#allocation4 + $0x30] sm:$0xff] %vm1976, %v1893
      %1984 = vst.msk [vmem:[#allocation4 + $0x38] sm:$0xff] %vm1976, %v1895
      %1985 = vst.msk [vmem:[#allocation4 + $0x40] sm:$0xff] %vm1976, %v1897
      %1986 = vst.msk [vmem:[#allocation4 + $0x48] sm:$0xff] %vm1976, %v1899
      %1987 = vst.msk [vmem:[#allocation4 + $0x50] sm:$0xff] %vm1976, %v1901
      %1988 = vst.msk [vmem:[#allocation4 + $0x58] sm:$0xff] %vm1976, %v1903
      %1989 = vst.msk [vmem:[#allocation4 + $0x60] sm:$0xff] %vm1976, %v1905
      %1990 = vst.msk [vmem:[#allocation4 + $0x68] sm:$0xff] %vm1976, %v1907
      %1991 = vst.msk [vmem:[#allocation4 + $0x70] sm:$0xff] %vm1976, %v1909
      %1992 = vst.msk [vmem:[#allocation4 + $0x78] sm:$0xff] %vm1976, %v1911
      %1993 = vst.msk [vmem:[#allocation4 + $0x80] sm:$0xff] %vm1976, %v1913
      %1994 = vst.msk [vmem:[#allocation4 + $0x88] sm:$0xff] %vm1976, %v1915
      %1995 = vst.msk [vmem:[#allocation4 + $0x90] sm:$0xff] %vm1976, %v1917
      %1996 = vst.msk [vmem:[#allocation4 + $0x98] sm:$0xff] %vm1976, %v1919
      %1997 = vst.msk [vmem:[#allocation4 + $0xa0] sm:$0xff] %vm1976, %v1921
      %1998 = vst.msk [vmem:[#allocation4 + $0xa8] sm:$0xff] %vm1976, %v1923
      %1999 = vst.msk [vmem:[#allocation4 + $0xb0] sm:$0xff] %vm1976, %v1925
      %2000 = vst.msk [vmem:[#allocation4 + $0xb8] sm:$0xff] %vm1976, %v1927
      %2001 = vst.msk [vmem:[#allocation4 + $0xc0] sm:$0xff] %vm1976, %v1929
      %2002 = vst.msk [vmem:[#allocation4 + $0xc8] sm:$0xff] %vm1976, %v1931
      %2003 = vst.msk [vmem:[#allocation4 + $0xd0] sm:$0xff] %vm1976, %v1933
      %2004 = vst.msk [vmem:[#allocation4 + $0xd8] sm:$0xff] %vm1976, %v1935
      %2005 = vst.msk [vmem:[#allocation4 + $0xe0] sm:$0xff] %vm1976, %v1937
      %2006 = vst.msk [vmem:[#allocation4 + $0xe8] sm:$0xff] %vm1976, %v1939
      %2007 = vst.msk [vmem:[#allocation4 + $0xf0] sm:$0xff] %vm1976, %v1941
      %2008 = vst.msk [vmem:[#allocation4 + $0xf8] sm:$0xff] %vm1976, %v1943
      %v2009 = vld [vmem:[#allocation4] sm:$0xff]
      %v2010 = vld [vmem:[#allocation4 + $0x8] sm:$0xff]
      %v2011 = vld [vmem:[#allocation4 + $0x10] sm:$0xff]
      %v2012 = vld [vmem:[#allocation4 + $0x18] sm:$0xff]
      %v2013 = vld [vmem:[#allocation4 + $0x20] sm:$0xff]
      %v2014 = vld [vmem:[#allocation4 + $0x28] sm:$0xff]
      %v2015 = vld [vmem:[#allocation4 + $0x30] sm:$0xff]
      %v2016 = vld [vmem:[#allocation4 + $0x38] sm:$0xff]
      %v2017 = vld [vmem:[#allocation4 + $0x40] sm:$0xff]
      %v2018 = vld [vmem:[#allocation4 + $0x48] sm:$0xff]
      %v2019 = vld [vmem:[#allocation4 + $0x50] sm:$0xff]
      %v2020 = vld [vmem:[#allocation4 + $0x58] sm:$0xff]
      %v2021 = vld [vmem:[#allocation4 + $0x60] sm:$0xff]
      %v2022 = vld [vmem:[#allocation4 + $0x68] sm:$0xff]
      %v2023 = vld [vmem:[#allocation4 + $0x70] sm:$0xff]
      %v2024 = vld [vmem:[#allocation4 + $0x78] sm:$0xff]
      %v2025 = vld [vmem:[#allocation4 + $0x80] sm:$0xff]
      %v2026 = vld [vmem:[#allocation4 + $0x88] sm:$0xff]
      %v2027 = vld [vmem:[#allocation4 + $0x90] sm:$0xff]
      %v2028 = vld [vmem:[#allocation4 + $0x98] sm:$0xff]
      %v2029 = vld [vmem:[#allocation4 + $0xa0] sm:$0xff]
      %v2030 = vld [vmem:[#allocation4 + $0xa8] sm:$0xff]
      %v2031 = vld [vmem:[#allocation4 + $0xb0] sm:$0xff]
      %v2032 = vld [vmem:[#allocation4 + $0xb8] sm:$0xff]
      %v2033 = vld [vmem:[#allocation4 + $0xc0] sm:$0xff]
      %v2034 = vld [vmem:[#allocation4 + $0xc8] sm:$0xff]
      %v2035 = vld [vmem:[#allocation4 + $0xd0] sm:$0xff]
      %v2036 = vld [vmem:[#allocation4 + $0xd8] sm:$0xff]
      %v2037 = vld [vmem:[#allocation4 + $0xe0] sm:$0xff]
      %v2038 = vld [vmem:[#allocation4 + $0xe8] sm:$0xff]
      %v2039 = vld [vmem:[#allocation4 + $0xf0] sm:$0xff]
      %v2040 = vld [vmem:[#allocation4 + $0xf8] sm:$0xff]
      %v2041 = vld [vmem:[%s1] sm:$0xff]
      %v2042 = vld [vmem:[%s1 + $0x8] sm:$0xff]
      %v2043 = vld [vmem:[%s1 + $0x10] sm:$0xff]
      %v2044 = vld [vmem:[%s1 + $0x18] sm:$0xff]
      %v2045 = vld [vmem:[%s1 + $0x20] sm:$0xf]
      %v2046 = vld [vmem:[%s2] sm:$0x1]
      %v2048 = vlaneseq
      %v2049 = vshrl.u32 %v2048, 7
      %v2050 = vsub.s32 0, %v2049
      %v2051 = vrot.slane %v2046, %v2050
      %vm2053 = vcmask 293888
      %v2055 = vsel %vm2053, %v2009, 0
      %v2058 = vsel %vm2053, %v2010, 0
      %v2061 = vsel %vm2053, %v2011, 0
      %v2064 = vsel %vm2053, %v2012, 0
      %v2067 = vsel %vm2053, %v2013, 0
      %v2070 = vsel %vm2053, %v2014, 0
      %v2073 = vsel %vm2053, %v2015, 0
      %v2076 = vsel %vm2053, %v2016, 0
      %v2079 = vsel %vm2053, %v2017, 0
      %v2082 = vsel %vm2053, %v2018, 0
      %v2085 = vsel %vm2053, %v2019, 0
      %v2088 = vsel %vm2053, %v2020, 0
      %v2091 = vsel %vm2053, %v2021, 0
      %v2094 = vsel %vm2053, %v2022, 0
      %v2097 = vsel %vm2053, %v2023, 0
      %v2100 = vsel %vm2053, %v2024, 0
      %v2103 = vsel %vm2053, %v2025, 0
      %v2106 = vsel %vm2053, %v2026, 0
      %v2109 = vsel %vm2053, %v2027, 0
      %v2112 = vsel %vm2053, %v2028, 0
      %v2115 = vsel %vm2053, %v2029, 0
      %v2118 = vsel %vm2053, %v2030, 0
      %v2121 = vsel %vm2053, %v2031, 0
      %v2124 = vsel %vm2053, %v2032, 0
      %v2127 = vsel %vm2053, %v2033, 0
      %v2130 = vsel %vm2053, %v2034, 0
      %v2133 = vsel %vm2053, %v2035, 0
      %v2136 = vsel %vm2053, %v2036, 0
      %v2139 = vsel %vm2053, %v2037, 0
      %v2142 = vsel %vm2053, %v2038, 0
      %v2145 = vsel %vm2053, %v2039, 0
      %v2148 = vsel %vm2053, %v2040, 0
      %vm2150 = vcmask 1043456
      %v2152 = vsel %vm2150, %v2045, 0
      %2154 = vmatprep.subr.mxu0 0.0
      %2155 = vmatpush1.msra.mxu0 %v2041
      %2156 = vmatprep.subr.mxu0 0.0
      %2157 = vmatpush1.msra.mxu0 %v2042
      %2158 = vmatprep.subr.mxu0 0.0
      %2159 = vmatpush1.msra.mxu0 %v2043
      %2160 = vmatprep.subr.mxu0 0.0
      %2161 = vmatpush1.msra.mxu0 %v2044
      %2162 = vmatprep.subr.mxu0 0.0
      %2163 = vmatpush1.msra.mxu0 %v2152
      %2164 = vmatprep.subr.mxu0 0.0
      %2165 = vmatpush1.msra.mxu0 0.0
      %2166 = vmatprep.subr.mxu0 0.0
      %2167 = vmatpush1.msra.mxu0 0.0
      %2168 = vmatprep.subr.mxu0 0.0
      %2169 = vmatpush1.msra.mxu0 0.0
      %2170 = vmatprep.subr.mxu0 0.0
      %2171 = vmatpush1.msra.mxu0 0.0
      %2172 = vmatprep.subr.mxu0 0.0
      %2173 = vmatpush1.msra.mxu0 0.0
      %2174 = vmatprep.subr.mxu0 0.0
      %2175 = vmatpush1.msra.mxu0 0.0
      %2176 = vmatprep.subr.mxu0 0.0
      %2177 = vmatpush1.msra.mxu0 0.0
      %2178 = vmatprep.subr.mxu0 0.0
      %2179 = vmatpush1.msra.mxu0 0.0
      %2180 = vmatprep.subr.mxu0 0.0
      %2181 = vmatpush1.msra.mxu0 0.0
      %2182 = vmatprep.subr.mxu0 0.0
      %2183 = vmatpush1.msra.mxu0 0.0
      %2184 = vmatprep.subr.mxu0 0.0
      %2185 = vmatpush1.msra.mxu0 0.0
      %2186 = vmatprep.subr.mxu0 0.0
      %2187 = vmatpush1.msra.mxu0 0.0
      %2188 = vmatprep.subr.mxu0 0.0
      %2189 = vmatpush1.msra.mxu0 0.0
      %2190 = vmatprep.subr.mxu0 0.0
      %2191 = vmatpush1.msra.mxu0 0.0
      %2192 = vmatprep.subr.mxu0 0.0
      %2193 = vmatpush1.msra.mxu0 0.0
      %2194 = vmatprep.subr.mxu0 0.0
      %2195 = vmatpush1.msra.mxu0 0.0
      %2196 = vmatprep.subr.mxu0 0.0
      %2197 = vmatpush1.msra.mxu0 0.0
      %2198 = vmatprep.subr.mxu0 0.0
      %2199 = vmatpush1.msra.mxu0 0.0
      %2200 = vmatprep.subr.mxu0 0.0
      %2201 = vmatpush1.msra.mxu0 0.0
      %2202 = vmatprep.subr.mxu0 0.0
      %2203 = vmatpush1.msra.mxu0 0.0
      %2204 = vmatprep.subr.mxu0 0.0
      %2205 = vmatpush1.msra.mxu0 0.0
      %2206 = vmatprep.subr.mxu0 0.0
      %2207 = vmatpush1.msra.mxu0 0.0
      %2208 = vmatprep.subr.mxu0 0.0
      %2209 = vmatpush1.msra.mxu0 0.0
      %2210 = vmatprep.subr.mxu0 0.0
      %2211 = vmatpush1.msra.mxu0 0.0
      %2212 = vmatprep.subr.mxu0 0.0
      %2213 = vmatpush1.msra.mxu0 0.0
      %2214 = vmatprep.subr.mxu0 0.0
      %2215 = vmatpush1.msra.mxu0 0.0
      %2216 = vmatprep.subr.mxu0 0.0
      %2217 = vmatpush1.msra.mxu0 0.0
      %2218 = vmatprep.mubr.f32.mxu0 0.0
      %2219 = vmatmul.mubr.f32.gmra.mrb[0].mxu0 %v2055
      %v2220 = vpop.f32.mrb[0].mxu0
      %v2221 = vadd.f32 %v2051, %v2220
      %v2222 = vpop.f32.mrb[0].mxu0
      %2223 = vmatprep.mubr.f32.mxu0 0.0
      %2224 = vmatmul.mubr.f32.gmra.mrb[0].mxu0 %v2058
      %v2225 = vpop.f32.mrb[0].mxu0
      %v2226 = vadd.f32 %v2051, %v2225
      %v2227 = vpop.f32.mrb[0].mxu0
      %2228 = vmatprep.mubr.f32.mxu0 0.0
      %2229 = vmatmul.mubr.f32.gmra.mrb[0].mxu0 %v2061
      %v2230 = vpop.f32.mrb[0].mxu0
      %v2231 = vadd.f32 %v2051, %v2230
      %v2232 = vpop.f32.mrb[0].mxu0
      %2233 = vmatprep.mubr.f32.mxu0 0.0
      %2234 = vmatmul.mubr.f32.gmra.mrb[0].mxu0 %v2064
      %v2235 = vpop.f32.mrb[0].mxu0
      %v2236 = vadd.f32 %v2051, %v2235
      %v2237 = vpop.f32.mrb[0].mxu0
      %2238 = vmatprep.mubr.f32.mxu0 0.0
      %2239 = vmatmul.mubr.f32.gmra.mrb[0].mxu0 %v2067
      %v2240 = vpop.f32.mrb[0].mxu0
      %v2241 = vadd.f32 %v2051, %v2240
      %v2242 = vpop.f32.mrb[0].mxu0
      %2243 = vmatprep.mubr.f32.mxu0 0.0
      %2244 = vmatmul.mubr.f32.gmra.mrb[0].mxu0 %v2070
      %v2245 = vpop.f32.mrb[0].mxu0
      %v2246 = vadd.f32 %v2051, %v2245
      %v2247 = vpop.f32.mrb[0].mxu0
      %2248 = vmatprep.mubr.f32.mxu0 0.0
      %2249 = vmatmul.mubr.f32.gmra.mrb[0].mxu0 %v2073
      %v2250 = vpop.f32.mrb[0].mxu0
      %v2251 = vadd.f32 %v2051, %v2250
      %v2252 = vpop.f32.mrb[0].mxu0
      %2253 = vmatprep.mubr.f32.mxu0 0.0
      %2254 = vmatmul.mubr.f32.gmra.mrb[0].mxu0 %v2076
      %v2255 = vpop.f32.mrb[0].mxu0
      %v2256 = vadd.f32 %v2051, %v2255
      %v2257 = vpop.f32.mrb[0].mxu0
      %2258 = vmatprep.mubr.f32.mxu0 0.0
      %2259 = vmatmul.mubr.f32.gmra.mrb[0].mxu0 %v2079
      %v2260 = vpop.f32.mrb[0].mxu0
      %v2261 = vadd.f32 %v2051, %v2260
      %v2262 = vpop.f32.mrb[0].mxu0
      %2263 = vmatprep.mubr.f32.mxu0 0.0
      %2264 = vmatmul.mubr.f32.gmra.mrb[0].mxu0 %v2082
      %v2265 = vpop.f32.mrb[0].mxu0
      %v2266 = vadd.f32 %v2051, %v2265
      %v2267 = vpop.f32.mrb[0].mxu0
      %2268 = vmatprep.mubr.f32.mxu0 0.0
      %2269 = vmatmul.mubr.f32.gmra.mrb[0].mxu0 %v2085
      %v2270 = vpop.f32.mrb[0].mxu0
      %v2271 = vadd.f32 %v2051, %v2270
      %v2272 = vpop.f32.mrb[0].mxu0
      %2273 = vmatprep.mubr.f32.mxu0 0.0
      %2274 = vmatmul.mubr.f32.gmra.mrb[0].mxu0 %v2088
      %v2275 = vpop.f32.mrb[0].mxu0
      %v2276 = vadd.f32 %v2051, %v2275
      %v2277 = vpop.f32.mrb[0].mxu0
      %2278 = vmatprep.mubr.f32.mxu0 0.0
      %2279 = vmatmul.mubr.f32.gmra.mrb[0].mxu0 %v2091
      %v2280 = vpop.f32.mrb[0].mxu0
      %v2281 = vadd.f32 %v2051, %v2280
      %v2282 = vpop.f32.mrb[0].mxu0
      %2283 = vmatprep.mubr.f32.mxu0 0.0
      %2284 = vmatmul.mubr.f32.gmra.mrb[0].mxu0 %v2094
      %v2285 = vpop.f32.mrb[0].mxu0
      %v2286 = vadd.f32 %v2051, %v2285
      %v2287 = vpop.f32.mrb[0].mxu0
      %2288 = vmatprep.mubr.f32.mxu0 0.0
      %2289 = vmatmul.mubr.f32.gmra.mrb[0].mxu0 %v2097
      %v2290 = vpop.f32.mrb[0].mxu0
      %v2291 = vadd.f32 %v2051, %v2290
      %v2292 = vpop.f32.mrb[0].mxu0
      %2293 = vmatprep.mubr.f32.mxu0 0.0
      %2294 = vmatmul.mubr.f32.gmra.mrb[0].mxu0 %v2100
      %v2295 = vpop.f32.mrb[0].mxu0
      %v2296 = vadd.f32 %v2051, %v2295
      %v2297 = vpop.f32.mrb[0].mxu0
      %2298 = vmatprep.mubr.f32.mxu0 0.0
      %2299 = vmatmul.mubr.f32.gmra.mrb[0].mxu0 %v2103
      %v2300 = vpop.f32.mrb[0].mxu0
      %v2301 = vadd.f32 %v2051, %v2300
      %v2302 = vpop.f32.mrb[0].mxu0
      %2303 = vmatprep.mubr.f32.mxu0 0.0
      %2304 = vmatmul.mubr.f32.gmra.mrb[0].mxu0 %v2106
      %v2305 = vpop.f32.mrb[0].mxu0
      %v2306 = vadd.f32 %v2051, %v2305
      %v2307 = vpop.f32.mrb[0].mxu0
      %2308 = vmatprep.mubr.f32.mxu0 0.0
      %2309 = vmatmul.mubr.f32.gmra.mrb[0].mxu0 %v2109
      %v2310 = vpop.f32.mrb[0].mxu0
      %v2311 = vadd.f32 %v2051, %v2310
      %v2312 = vpop.f32.mrb[0].mxu0
      %2313 = vmatprep.mubr.f32.mxu0 0.0
      %2314 = vmatmul.mubr.f32.gmra.mrb[0].mxu0 %v2112
      %v2315 = vpop.f32.mrb[0].mxu0
      %v2316 = vadd.f32 %v2051, %v2315
      %v2317 = vpop.f32.mrb[0].mxu0
      %2318 = vmatprep.mubr.f32.mxu0 0.0
      %2319 = vmatmul.mubr.f32.gmra.mrb[0].mxu0 %v2115
      %v2320 = vpop.f32.mrb[0].mxu0
      %v2321 = vadd.f32 %v2051, %v2320
      %v2322 = vpop.f32.mrb[0].mxu0
      %2323 = vmatprep.mubr.f32.mxu0 0.0
      %2324 = vmatmul.mubr.f32.gmra.mrb[0].mxu0 %v2118
      %v2325 = vpop.f32.mrb[0].mxu0
      %v2326 = vadd.f32 %v2051, %v2325
      %v2327 = vpop.f32.mrb[0].mxu0
      %2328 = vmatprep.mubr.f32.mxu0 0.0
      %2329 = vmatmul.mubr.f32.gmra.mrb[0].mxu0 %v2121
      %v2330 = vpop.f32.mrb[0].mxu0
      %v2331 = vadd.f32 %v2051, %v2330
      %v2332 = vpop.f32.mrb[0].mxu0
      %2333 = vmatprep.mubr.f32.mxu0 0.0
      %2334 = vmatmul.mubr.f32.gmra.mrb[0].mxu0 %v2124
      %v2335 = vpop.f32.mrb[0].mxu0
      %v2336 = vadd.f32 %v2051, %v2335
      %v2337 = vpop.f32.mrb[0].mxu0
      %2338 = vmatprep.mubr.f32.mxu0 0.0
      %2339 = vmatmul.mubr.f32.gmra.mrb[0].mxu0 %v2127
      %v2340 = vpop.f32.mrb[0].mxu0
      %v2341 = vadd.f32 %v2051, %v2340
      %v2342 = vpop.f32.mrb[0].mxu0
      %2343 = vmatprep.mubr.f32.mxu0 0.0
      %2344 = vmatmul.mubr.f32.gmra.mrb[0].mxu0 %v2130
      %v2345 = vpop.f32.mrb[0].mxu0
      %v2346 = vadd.f32 %v2051, %v2345
      %v2347 = vpop.f32.mrb[0].mxu0
      %2348 = vmatprep.mubr.f32.mxu0 0.0
      %2349 = vmatmul.mubr.f32.gmra.mrb[0].mxu0 %v2133
      %v2350 = vpop.f32.mrb[0].mxu0
      %v2351 = vadd.f32 %v2051, %v2350
      %v2352 = vpop.f32.mrb[0].mxu0
      %2353 = vmatprep.mubr.f32.mxu0 0.0
      %2354 = vmatmul.mubr.f32.gmra.mrb[0].mxu0 %v2136
      %v2355 = vpop.f32.mrb[0].mxu0
      %v2356 = vadd.f32 %v2051, %v2355
      %v2357 = vpop.f32.mrb[0].mxu0
      %2358 = vmatprep.mubr.f32.mxu0 0.0
      %2359 = vmatmul.mubr.f32.gmra.mrb[0].mxu0 %v2139
      %v2360 = vpop.f32.mrb[0].mxu0
      %v2361 = vadd.f32 %v2051, %v2360
      %v2362 = vpop.f32.mrb[0].mxu0
      %2363 = vmatprep.mubr.f32.mxu0 0.0
      %2364 = vmatmul.mubr.f32.gmra.mrb[0].mxu0 %v2142
      %v2365 = vpop.f32.mrb[0].mxu0
      %v2366 = vadd.f32 %v2051, %v2365
      %v2367 = vpop.f32.mrb[0].mxu0
      %2368 = vmatprep.mubr.f32.mxu0 0.0
      %2369 = vmatmul.mubr.f32.gmra.mrb[0].mxu0 %v2145
      %v2370 = vpop.f32.mrb[0].mxu0
      %v2371 = vadd.f32 %v2051, %v2370
      %v2372 = vpop.f32.mrb[0].mxu0
      %2373 = vmatprep.mubr.f32.mxu0 0.0
      %2374 = vmatmul.mubr.f32.gmra.mrb[0].mxu0 %v2148
      %v2375 = vpop.f32.mrb[0].mxu0
      %v2376 = vadd.f32 %v2051, %v2375
      %v2377 = vpop.f32.mrb[0].mxu0
      %2378 = vdwg.mxu0
      %v2379 = vmax.f32 %v2221, 0.0
      %v2380 = vmax.f32 %v2226, 0.0
      %v2381 = vmax.f32 %v2231, 0.0
      %v2382 = vmax.f32 %v2236, 0.0
      %v2383 = vmax.f32 %v2241, 0.0
      %v2384 = vmax.f32 %v2246, 0.0
      %v2385 = vmax.f32 %v2251, 0.0
      %v2386 = vmax.f32 %v2256, 0.0
      %v2387 = vmax.f32 %v2261, 0.0
      %v2388 = vmax.f32 %v2266, 0.0
      %v2389 = vmax.f32 %v2271, 0.0
      %v2390 = vmax.f32 %v2276, 0.0
      %v2391 = vmax.f32 %v2281, 0.0
      %v2392 = vmax.f32 %v2286, 0.0
      %v2393 = vmax.f32 %v2291, 0.0
      %v2394 = vmax.f32 %v2296, 0.0
      %v2395 = vmax.f32 %v2301, 0.0
      %v2396 = vmax.f32 %v2306, 0.0
      %v2397 = vmax.f32 %v2311, 0.0
      %v2398 = vmax.f32 %v2316, 0.0
      %v2399 = vmax.f32 %v2321, 0.0
      %v2400 = vmax.f32 %v2326, 0.0
      %v2401 = vmax.f32 %v2331, 0.0
      %v2402 = vmax.f32 %v2336, 0.0
      %v2403 = vmax.f32 %v2341, 0.0
      %v2404 = vmax.f32 %v2346, 0.0
      %v2405 = vmax.f32 %v2351, 0.0
      %v2406 = vmax.f32 %v2356, 0.0
      %v2407 = vmax.f32 %v2361, 0.0
      %v2408 = vmax.f32 %v2366, 0.0
      %v2409 = vmax.f32 %v2371, 0.0
      %v2410 = vmax.f32 %v2376, 0.0
      %vm2411 = vcmask 64512
      %2412 = vst.msk [vmem:[#allocation3] sm:$0xff] %vm2411, 0.0
      %2413 = vst.msk [vmem:[#allocation3 + $0x8] sm:$0xff] %vm2411, 0.0
      %vm2414 = vcmask 58368
      %2415 = vst.msk [vmem:[#allocation3 + $0x10] sm:$0x3] %vm2414, 0.0
      %2416 = vst.msk [vmem:[#allocation3 + $0x18] sm:$0xff] %vm2411, 0.0
      %2417 = vst.msk [vmem:[#allocation3 + $0x20] sm:$0xff] %vm2411, 0.0
      %2418 = vst.msk [vmem:[#allocation3 + $0x28] sm:$0x3] %vm2414, 0.0
      %2419 = vst.msk [vmem:[#allocation3 + $0x30] sm:$0xff] %vm2411, 0.0
      %2420 = vst.msk [vmem:[#allocation3 + $0x38] sm:$0xff] %vm2411, 0.0
      %2421 = vst.msk [vmem:[#allocation3 + $0x40] sm:$0x3] %vm2414, 0.0
      %2422 = vst.msk [vmem:[#allocation3 + $0x48] sm:$0xff] %vm2411, 0.0
      %2423 = vst.msk [vmem:[#allocation3 + $0x50] sm:$0xff] %vm2411, 0.0
      %2424 = vst.msk [vmem:[#allocation3 + $0x58] sm:$0x3] %vm2414, 0.0
      %2425 = vst.msk [vmem:[#allocation3 + $0x60] sm:$0xff] %vm2411, 0.0
      %2426 = vst.msk [vmem:[#allocation3 + $0x68] sm:$0xff] %vm2411, 0.0
      %2427 = vst.msk [vmem:[#allocation3 + $0x70] sm:$0x3] %vm2414, 0.0
      %2428 = vst.msk [vmem:[#allocation3 + $0x78] sm:$0xff] %vm2411, 0.0
      %2429 = vst.msk [vmem:[#allocation3 + $0x80] sm:$0xff] %vm2411, 0.0
      %2430 = vst.msk [vmem:[#allocation3 + $0x88] sm:$0x3] %vm2414, 0.0
      %2431 = vst.msk [vmem:[#allocation3 + $0x90] sm:$0xff] %vm2411, 0.0
      %2432 = vst.msk [vmem:[#allocation3 + $0x98] sm:$0xff] %vm2411, 0.0
      %2433 = vst.msk [vmem:[#allocation3 + $0xa0] sm:$0x3] %vm2414, 0.0
      %2434 = vst.msk [vmem:[#allocation3 + $0xa8] sm:$0xff] %vm2411, 0.0
      %2435 = vst.msk [vmem:[#allocation3 + $0xb0] sm:$0xff] %vm2411, 0.0
      %2436 = vst.msk [vmem:[#allocation3 + $0xb8] sm:$0x3] %vm2414, 0.0
      %2437 = vst.msk [vmem:[#allocation3 + $0xc0] sm:$0xff] %vm2411, 0.0
      %2438 = vst.msk [vmem:[#allocation3 + $0xc8] sm:$0xff] %vm2411, 0.0
      %2439 = vst.msk [vmem:[#allocation3 + $0xd0] sm:$0x3] %vm2414, 0.0
      %2440 = vst.msk [vmem:[#allocation3 + $0xd8] sm:$0xff] %vm2411, 0.0
      %2441 = vst.msk [vmem:[#allocation3 + $0xe0] sm:$0xff] %vm2411, 0.0
      %2442 = vst.msk [vmem:[#allocation3 + $0xe8] sm:$0x3] %vm2414, 0.0
      %2443 = vst.msk [vmem:[#allocation3 + $0xf0] sm:$0xff] %vm2411, 0.0
      %2444 = vst.msk [vmem:[#allocation3 + $0xf8] sm:$0xff] %vm2411, 0.0
      %2445 = vst.msk [vmem:[#allocation3 + $0x100] sm:$0x3] %vm2414, 0.0
      %2446 = vst.msk [vmem:[#allocation3 + $0x108] sm:$0xff] %vm2411, 0.0
      %2447 = vst.msk [vmem:[#allocation3 + $0x110] sm:$0xff] %vm2411, 0.0
      %2448 = vst.msk [vmem:[#allocation3 + $0x118] sm:$0x3] %vm2414, 0.0
      %2449 = vst.msk [vmem:[#allocation3 + $0x120] sm:$0xff] %vm2411, 0.0
      %2450 = vst.msk [vmem:[#allocation3 + $0x128] sm:$0xff] %vm2411, 0.0
      %2451 = vst.msk [vmem:[#allocation3 + $0x130] sm:$0x3] %vm2414, 0.0
      %2452 = vst.msk [vmem:[#allocation3 + $0x138] sm:$0xff] %vm2411, 0.0
      %2453 = vst.msk [vmem:[#allocation3 + $0x140] sm:$0xff] %vm2411, 0.0
      %2454 = vst.msk [vmem:[#allocation3 + $0x148] sm:$0x3] %vm2414, 0.0
      %2455 = vst.msk [vmem:[#allocation3 + $0x150] sm:$0xff] %vm2411, 0.0
      %2456 = vst.msk [vmem:[#allocation3 + $0x158] sm:$0xff] %vm2411, 0.0
      %2457 = vst.msk [vmem:[#allocation3 + $0x160] sm:$0x3] %vm2414, 0.0
      %2458 = vst.msk [vmem:[#allocation3 + $0x168] sm:$0xff] %vm2411, 0.0
      %2459 = vst.msk [vmem:[#allocation3 + $0x170] sm:$0xff] %vm2411, 0.0
      %2460 = vst.msk [vmem:[#allocation3 + $0x178] sm:$0x3] %vm2414, 0.0
      %2461 = vst.msk [vmem:[#allocation3 + $0x180] sm:$0xff] %vm2411, 0.0
      %2462 = vst.msk [vmem:[#allocation3 + $0x188] sm:$0xff] %vm2411, 0.0
      %2463 = vst.msk [vmem:[#allocation3 + $0x190] sm:$0x3] %vm2414, 0.0
      %2464 = vst.msk [vmem:[#allocation3 + $0x198] sm:$0xff] %vm2411, 0.0
      %2465 = vst.msk [vmem:[#allocation3 + $0x1a0] sm:$0xff] %vm2411, 0.0
      %2466 = vst.msk [vmem:[#allocation3 + $0x1a8] sm:$0x3] %vm2414, 0.0
      %s2467 = scalar_lea.vmem [#allocation3], 24
      %2468 = vst.msk [vmem:[%s2467 + $0x1] sm:$0xff] %vm2411, %v2379
      %2469 = vst.msk [vmem:[%s2467 + $0x9] sm:$0xff] %vm2411, %v2380
      %2470 = vst.msk [vmem:[%s2467 + $0x19] sm:$0xff] %vm2411, %v2381
      %2471 = vst.msk [vmem:[%s2467 + $0x21] sm:$0xff] %vm2411, %v2382
      %2472 = vst.msk [vmem:[%s2467 + $0x31] sm:$0xff] %vm2411, %v2383
      %2473 = vst.msk [vmem:[%s2467 + $0x39] sm:$0xff] %vm2411, %v2384
      %2474 = vst.msk [vmem:[%s2467 + $0x49] sm:$0xff] %vm2411, %v2385
      %2475 = vst.msk [vmem:[%s2467 + $0x51] sm:$0xff] %vm2411, %v2386
      %2476 = vst.msk [vmem:[%s2467 + $0x61] sm:$0xff] %vm2411, %v2387
      %2477 = vst.msk [vmem:[%s2467 + $0x69] sm:$0xff] %vm2411, %v2388
      %2478 = vst.msk [vmem:[%s2467 + $0x79] sm:$0xff] %vm2411, %v2389
      %2479 = vst.msk [vmem:[%s2467 + $0x81] sm:$0xff] %vm2411, %v2390
      %2480 = vst.msk [vmem:[%s2467 + $0x91] sm:$0xff] %vm2411, %v2391
      %2481 = vst.msk [vmem:[%s2467 + $0x99] sm:$0xff] %vm2411, %v2392
      %2482 = vst.msk [vmem:[%s2467 + $0xa9] sm:$0xff] %vm2411, %v2393
      %2483 = vst.msk [vmem:[%s2467 + $0xb1] sm:$0xff] %vm2411, %v2394
      %2484 = vst.msk [vmem:[%s2467 + $0xc1] sm:$0xff] %vm2411, %v2395
      %2485 = vst.msk [vmem:[%s2467 + $0xc9] sm:$0xff] %vm2411, %v2396
      %2486 = vst.msk [vmem:[%s2467 + $0xd9] sm:$0xff] %vm2411, %v2397
      %2487 = vst.msk [vmem:[%s2467 + $0xe1] sm:$0xff] %vm2411, %v2398
      %2488 = vst.msk [vmem:[%s2467 + $0xf1] sm:$0xff] %vm2411, %v2399
      %2489 = vst.msk [vmem:[%s2467 + $0xf9] sm:$0xff] %vm2411, %v2400
      %2490 = vst.msk [vmem:[%s2467 + $0x109] sm:$0xff] %vm2411, %v2401
      %2491 = vst.msk [vmem:[%s2467 + $0x111] sm:$0xff] %vm2411, %v2402
      %2492 = vst.msk [vmem:[%s2467 + $0x121] sm:$0xff] %vm2411, %v2403
      %2493 = vst.msk [vmem:[%s2467 + $0x129] sm:$0xff] %vm2411, %v2404
      %2494 = vst.msk [vmem:[%s2467 + $0x139] sm:$0xff] %vm2411, %v2405
      %2495 = vst.msk [vmem:[%s2467 + $0x141] sm:$0xff] %vm2411, %v2406
      %2496 = vst.msk [vmem:[%s2467 + $0x151] sm:$0xff] %vm2411, %v2407
      %2497 = vst.msk [vmem:[%s2467 + $0x159] sm:$0xff] %vm2411, %v2408
      %2498 = vst.msk [vmem:[%s2467 + $0x169] sm:$0xff] %vm2411, %v2409
      %2499 = vst.msk [vmem:[%s2467 + $0x171] sm:$0xff] %vm2411, %v2410
      %v2500 = vld [vmem:[#allocation3] sm:$0xff]
      %v2501 = vld [vmem:[#allocation3 + $0x8] sm:$0xff]
      %v2502 = vld [vmem:[#allocation3 + $0x18] sm:$0xff]
      %v2503 = vld [vmem:[#allocation3 + $0x20] sm:$0xff]
      %v2504 = vld [vmem:[#allocation3 + $0x30] sm:$0xff]
      %v2505 = vld [vmem:[#allocation3 + $0x38] sm:$0xff]
      %v2506 = vld [vmem:[#allocation3 + $0x48] sm:$0xff]
      %v2507 = vld [vmem:[#allocation3 + $0x50] sm:$0xff]
      %v2508 = vld [vmem:[#allocation3 + $0x60] sm:$0xff]
      %v2509 = vld [vmem:[#allocation3 + $0x68] sm:$0xff]
      %v2510 = vld [vmem:[#allocation3 + $0x78] sm:$0xff]
      %v2511 = vld [vmem:[#allocation3 + $0x80] sm:$0xff]
      %v2512 = vld [vmem:[#allocation3 + $0x90] sm:$0xff]
      %v2513 = vld [vmem:[#allocation3 + $0x98] sm:$0xff]
      %v2514 = vld [vmem:[#allocation3 + $0xa8] sm:$0xff]
      %v2515 = vld [vmem:[#allocation3 + $0xb0] sm:$0xff]
      %v2516 = vld [vmem:[#allocation3 + $0xc0] sm:$0xff]
      %v2517 = vld [vmem:[#allocation3 + $0xc8] sm:$0xff]
      %v2518 = vld [vmem:[#allocation3 + $0xd8] sm:$0xff]
      %v2519 = vld [vmem:[#allocation3 + $0xe0] sm:$0xff]
      %v2520 = vld [vmem:[#allocation3 + $0xf0] sm:$0xff]
      %v2521 = vld [vmem:[#allocation3 + $0xf8] sm:$0xff]
      %v2522 = vld [vmem:[#allocation3 + $0x108] sm:$0xff]
      %v2523 = vld [vmem:[#allocation3 + $0x110] sm:$0xff]
      %v2524 = vld [vmem:[#allocation3 + $0x120] sm:$0xff]
      %v2525 = vld [vmem:[#allocation3 + $0x128] sm:$0xff]
      %v2526 = vld [vmem:[#allocation3 + $0x138] sm:$0xff]
      %v2527 = vld [vmem:[#allocation3 + $0x140] sm:$0xff]
      %v2528 = vld [vmem:[#allocation3 + $0x150] sm:$0xff]
      %v2529 = vld [vmem:[#allocation3 + $0x158] sm:$0xff]
      %v2530 = vld [vmem:[#allocation3 + $0x168] sm:$0xff]
      %v2531 = vld [vmem:[#allocation3 + $0x170] sm:$0xff]
      %2532 = vst.msk [vmem:[#allocation4] sm:$0xff] %vm2411, %v2500
      %2533 = vst.msk [vmem:[#allocation4 + $0x8] sm:$0xff] %vm2411, %v2501
      %2534 = vst.msk [vmem:[#allocation4 + $0x10] sm:$0xff] %vm2411, %v2502
      %2535 = vst.msk [vmem:[#allocation4 + $0x18] sm:$0xff] %vm2411, %v2503
      %2536 = vst.msk [vmem:[#allocation4 + $0x20] sm:$0xff] %vm2411, %v2504
      %2537 = vst.msk [vmem:[#allocation4 + $0x28] sm:$0xff] %vm2411, %v2505
      %2538 = vst.msk [vmem:[#allocation4 + $0x30] sm:$0xff] %vm2411, %v2506
      %2539 = vst.msk [vmem:[#allocation4 + $0x38] sm:$0xff] %vm2411, %v2507
      %2540 = vst.msk [vmem:[#allocation4 + $0x40] sm:$0xff] %vm2411, %v2508
      %2541 = vst.msk [vmem:[#allocation4 + $0x48] sm:$0xff] %vm2411, %v2509
      %2542 = vst.msk [vmem:[#allocation4 + $0x50] sm:$0xff] %vm2411, %v2510
      %2543 = vst.msk [vmem:[#allocation4 + $0x58] sm:$0xff] %vm2411, %v2511
      %2544 = vst.msk [vmem:[#allocation4 + $0x60] sm:$0xff] %vm2411, %v2512
      %2545 = vst.msk [vmem:[#allocation4 + $0x68] sm:$0xff] %vm2411, %v2513
      %2546 = vst.msk [vmem:[#allocation4 + $0x70] sm:$0xff] %vm2411, %v2514
      %2547 = vst.msk [vmem:[#allocation4 + $0x78] sm:$0xff] %vm2411, %v2515
      %2548 = vst.msk [vmem:[#allocation4 + $0x80] sm:$0xff] %vm2411, %v2516
      %2549 = vst.msk [vmem:[#allocation4 + $0x88] sm:$0xff] %vm2411, %v2517
      %2550 = vst.msk [vmem:[#allocation4 + $0x90] sm:$0xff] %vm2411, %v2518
      %2551 = vst.msk [vmem:[#allocation4 + $0x98] sm:$0xff] %vm2411, %v2519
      %2552 = vst.msk [vmem:[#allocation4 + $0xa0] sm:$0xff] %vm2411, %v2520
      %2553 = vst.msk [vmem:[#allocation4 + $0xa8] sm:$0xff] %vm2411, %v2521
      %2554 = vst.msk [vmem:[#allocation4 + $0xb0] sm:$0xff] %vm2411, %v2522
      %2555 = vst.msk [vmem:[#allocation4 + $0xb8] sm:$0xff] %vm2411, %v2523
      %2556 = vst.msk [vmem:[#allocation4 + $0xc0] sm:$0xff] %vm2411, %v2524
      %2557 = vst.msk [vmem:[#allocation4 + $0xc8] sm:$0xff] %vm2411, %v2525
      %2558 = vst.msk [vmem:[#allocation4 + $0xd0] sm:$0xff] %vm2411, %v2526
      %2559 = vst.msk [vmem:[#allocation4 + $0xd8] sm:$0xff] %vm2411, %v2527
      %2560 = vst.msk [vmem:[#allocation4 + $0xe0] sm:$0xff] %vm2411, %v2528
      %2561 = vst.msk [vmem:[#allocation4 + $0xe8] sm:$0xff] %vm2411, %v2529
      %2562 = vst.msk [vmem:[#allocation4 + $0xf0] sm:$0xff] %vm2411, %v2530
      %2563 = vst.msk [vmem:[#allocation4 + $0xf8] sm:$0xff] %vm2411, %v2531
      %v2564 = vld [vmem:[#allocation3 + $0x1] sm:$0xff]
      %v2565 = vld [vmem:[#allocation3 + $0x9] sm:$0xff]
      %v2566 = vld [vmem:[#allocation3 + $0x19] sm:$0xff]
      %v2567 = vld [vmem:[#allocation3 + $0x21] sm:$0xff]
      %v2568 = vld [vmem:[#allocation3 + $0x31] sm:$0xff]
      %v2569 = vld [vmem:[#allocation3 + $0x39] sm:$0xff]
      %v2570 = vld [vmem:[#allocation3 + $0x49] sm:$0xff]
      %v2571 = vld [vmem:[#allocation3 + $0x51] sm:$0xff]
      %v2572 = vld [vmem:[#allocation3 + $0x61] sm:$0xff]
      %v2573 = vld [vmem:[#allocation3 + $0x69] sm:$0xff]
      %v2574 = vld [vmem:[#allocation3 + $0x79] sm:$0xff]
      %v2575 = vld [vmem:[#allocation3 + $0x81] sm:$0xff]
      %v2576 = vld [vmem:[#allocation3 + $0x91] sm:$0xff]
      %v2577 = vld [vmem:[#allocation3 + $0x99] sm:$0xff]
      %v2578 = vld [vmem:[#allocation3 + $0xa9] sm:$0xff]
      %v2579 = vld [vmem:[#allocation3 + $0xb1] sm:$0xff]
      %v2580 = vld [vmem:[#allocation3 + $0xc1] sm:$0xff]
      %v2581 = vld [vmem:[#allocation3 + $0xc9] sm:$0xff]
      %v2582 = vld [vmem:[#allocation3 + $0xd9] sm:$0xff]
      %v2583 = vld [vmem:[#allocation3 + $0xe1] sm:$0xff]
      %v2584 = vld [vmem:[#allocation3 + $0xf1] sm:$0xff]
      %v2585 = vld [vmem:[#allocation3 + $0xf9] sm:$0xff]
      %v2586 = vld [vmem:[#allocation3 + $0x109] sm:$0xff]
      %v2587 = vld [vmem:[#allocation3 + $0x111] sm:$0xff]
      %v2588 = vld [vmem:[#allocation3 + $0x121] sm:$0xff]
      %v2589 = vld [vmem:[#allocation3 + $0x129] sm:$0xff]
      %v2590 = vld [vmem:[#allocation3 + $0x139] sm:$0xff]
      %v2591 = vld [vmem:[#allocation3 + $0x141] sm:$0xff]
      %v2592 = vld [vmem:[#allocation3 + $0x151] sm:$0xff]
      %v2593 = vld [vmem:[#allocation3 + $0x159] sm:$0xff]
      %v2594 = vld [vmem:[#allocation3 + $0x169] sm:$0xff]
      %v2595 = vld [vmem:[#allocation3 + $0x171] sm:$0xff]
      %2628 = vrot.lane.b32.xlu0 %v2564, 8
      %v2629 = vpop.permute.xlu0 %2628
      %2630 = vrot.lane.b32.xlu0 %v2565, 8
      %v2631 = vpop.permute.xlu0 %2630
      %2632 = vrot.lane.b32.xlu0 %v2566, 8
      %v2633 = vpop.permute.xlu0 %2632
      %2634 = vrot.lane.b32.xlu0 %v2567, 8
      %v2635 = vpop.permute.xlu0 %2634
      %2636 = vrot.lane.b32.xlu0 %v2568, 8
      %v2637 = vpop.permute.xlu0 %2636
      %2638 = vrot.lane.b32.xlu0 %v2569, 8
      %v2639 = vpop.permute.xlu0 %2638
      %2640 = vrot.lane.b32.xlu0 %v2570, 8
      %v2641 = vpop.permute.xlu0 %2640
      %2642 = vrot.lane.b32.xlu0 %v2571, 8
      %v2643 = vpop.permute.xlu0 %2642
      %2644 = vrot.lane.b32.xlu0 %v2572, 8
      %v2645 = vpop.permute.xlu0 %2644
      %2646 = vrot.lane.b32.xlu0 %v2573, 8
      %v2647 = vpop.permute.xlu0 %2646
      %2648 = vrot.lane.b32.xlu0 %v2574, 8
      %v2649 = vpop.permute.xlu0 %2648
      %2650 = vrot.lane.b32.xlu0 %v2575, 8
      %v2651 = vpop.permute.xlu0 %2650
      %2652 = vrot.lane.b32.xlu0 %v2576, 8
      %v2653 = vpop.permute.xlu0 %2652
      %2654 = vrot.lane.b32.xlu0 %v2577, 8
      %v2655 = vpop.permute.xlu0 %2654
      %2656 = vrot.lane.b32.xlu0 %v2578, 8
      %v2657 = vpop.permute.xlu0 %2656
      %2658 = vrot.lane.b32.xlu0 %v2579, 8
      %v2659 = vpop.permute.xlu0 %2658
      %2660 = vrot.lane.b32.xlu0 %v2580, 8
      %v2661 = vpop.permute.xlu0 %2660
      %2662 = vrot.lane.b32.xlu0 %v2581, 8
      %v2663 = vpop.permute.xlu0 %2662
      %2664 = vrot.lane.b32.xlu0 %v2582, 8
      %v2665 = vpop.permute.xlu0 %2664
      %2666 = vrot.lane.b32.xlu0 %v2583, 8
      %v2667 = vpop.permute.xlu0 %2666
      %2668 = vrot.lane.b32.xlu0 %v2584, 8
      %v2669 = vpop.permute.xlu0 %2668
      %2670 = vrot.lane.b32.xlu0 %v2585, 8
      %v2671 = vpop.permute.xlu0 %2670
      %2672 = vrot.lane.b32.xlu0 %v2586, 8
      %v2673 = vpop.permute.xlu0 %2672
      %2674 = vrot.lane.b32.xlu0 %v2587, 8
      %v2675 = vpop.permute.xlu0 %2674
      %2676 = vrot.lane.b32.xlu0 %v2588, 8
      %v2677 = vpop.permute.xlu0 %2676
      %2678 = vrot.lane.b32.xlu0 %v2589, 8
      %v2679 = vpop.permute.xlu0 %2678
      %2680 = vrot.lane.b32.xlu0 %v2590, 8
      %v2681 = vpop.permute.xlu0 %2680
      %2682 = vrot.lane.b32.xlu0 %v2591, 8
      %v2683 = vpop.permute.xlu0 %2682
      %2684 = vrot.lane.b32.xlu0 %v2592, 8
      %v2685 = vpop.permute.xlu0 %2684
      %2686 = vrot.lane.b32.xlu0 %v2593, 8
      %v2687 = vpop.permute.xlu0 %2686
      %2688 = vrot.lane.b32.xlu0 %v2594, 8
      %v2689 = vpop.permute.xlu0 %2688
      %2690 = vrot.lane.b32.xlu0 %v2595, 8
      %v2691 = vpop.permute.xlu0 %2690
      %vm2724 = vcmask 130112
      %2725 = vst.msk [vmem:[#allocation4] sm:$0xff] %vm2724, %v2629
      %2726 = vst.msk [vmem:[#allocation4 + $0x8] sm:$0xff] %vm2724, %v2631
      %2727 = vst.msk [vmem:[#allocation4 + $0x10] sm:$0xff] %vm2724, %v2633
      %2728 = vst.msk [vmem:[#allocation4 + $0x18] sm:$0xff] %vm2724, %v2635
      %2729 = vst.msk [vmem:[#allocation4 + $0x20] sm:$0xff] %vm2724, %v2637
      %2730 = vst.msk [vmem:[#allocation4 + $0x28] sm:$0xff] %vm2724, %v2639
      %2731 = vst.msk [vmem:[#allocation4 + $0x30] sm:$0xff] %vm2724, %v2641
      %2732 = vst.msk [vmem:[#allocation4 + $0x38] sm:$0xff] %vm2724, %v2643
      %2733 = vst.msk [vmem:[#allocation4 + $0x40] sm:$0xff] %vm2724, %v2645
      %2734 = vst.msk [vmem:[#allocation4 + $0x48] sm:$0xff] %vm2724, %v2647
      %2735 = vst.msk [vmem:[#allocation4 + $0x50] sm:$0xff] %vm2724, %v2649
      %2736 = vst.msk [vmem:[#allocation4 + $0x58] sm:$0xff] %vm2724, %v2651
      %2737 = vst.msk [vmem:[#allocation4 + $0x60] sm:$0xff] %vm2724, %v2653
      %2738 = vst.msk [vmem:[#allocation4 + $0x68] sm:$0xff] %vm2724, %v2655
      %2739 = vst.msk [vmem:[#allocation4 + $0x70] sm:$0xff] %vm2724, %v2657
      %2740 = vst.msk [vmem:[#allocation4 + $0x78] sm:$0xff] %vm2724, %v2659
      %2741 = vst.msk [vmem:[#allocation4 + $0x80] sm:$0xff] %vm2724, %v2661
      %2742 = vst.msk [vmem:[#allocation4 + $0x88] sm:$0xff] %vm2724, %v2663
      %2743 = vst.msk [vmem:[#allocation4 + $0x90] sm:$0xff] %vm2724, %v2665
      %2744 = vst.msk [vmem:[#allocation4 + $0x98] sm:$0xff] %vm2724, %v2667
      %2745 = vst.msk [vmem:[#allocation4 + $0xa0] sm:$0xff] %vm2724, %v2669
      %2746 = vst.msk [vmem:[#allocation4 + $0xa8] sm:$0xff] %vm2724, %v2671
      %2747 = vst.msk [vmem:[#allocation4 + $0xb0] sm:$0xff] %vm2724, %v2673
      %2748 = vst.msk [vmem:[#allocation4 + $0xb8] sm:$0xff] %vm2724, %v2675
      %2749 = vst.msk [vmem:[#allocation4 + $0xc0] sm:$0xff] %vm2724, %v2677
      %2750 = vst.msk [vmem:[#allocation4 + $0xc8] sm:$0xff] %vm2724, %v2679
      %2751 = vst.msk [vmem:[#allocation4 + $0xd0] sm:$0xff] %vm2724, %v2681
      %2752 = vst.msk [vmem:[#allocation4 + $0xd8] sm:$0xff] %vm2724, %v2683
      %2753 = vst.msk [vmem:[#allocation4 + $0xe0] sm:$0xff] %vm2724, %v2685
      %2754 = vst.msk [vmem:[#allocation4 + $0xe8] sm:$0xff] %vm2724, %v2687
      %2755 = vst.msk [vmem:[#allocation4 + $0xf0] sm:$0xff] %vm2724, %v2689
      %2756 = vst.msk [vmem:[#allocation4 + $0xf8] sm:$0xff] %vm2724, %v2691
      %v2757 = vld [vmem:[#allocation3 + $0x2] sm:$0xff]
      %v2758 = vld [vmem:[#allocation3 + $0xa] sm:$0xff]
      %v2759 = vld [vmem:[#allocation3 + $0x1a] sm:$0xff]
      %v2760 = vld [vmem:[#allocation3 + $0x22] sm:$0xff]
      %v2761 = vld [vmem:[#allocation3 + $0x32] sm:$0xff]
      %v2762 = vld [vmem:[#allocation3 + $0x3a] sm:$0xff]
      %v2763 = vld [vmem:[#allocation3 + $0x4a] sm:$0xff]
      %v2764 = vld [vmem:[#allocation3 + $0x52] sm:$0xff]
      %v2765 = vld [vmem:[#allocation3 + $0x62] sm:$0xff]
      %v2766 = vld [vmem:[#allocation3 + $0x6a] sm:$0xff]
      %v2767 = vld [vmem:[#allocation3 + $0x7a] sm:$0xff]
      %v2768 = vld [vmem:[#allocation3 + $0x82] sm:$0xff]
      %v2769 = vld [vmem:[#allocation3 + $0x92] sm:$0xff]
      %v2770 = vld [vmem:[#allocation3 + $0x9a] sm:$0xff]
      %v2771 = vld [vmem:[#allocation3 + $0xaa] sm:$0xff]
      %v2772 = vld [vmem:[#allocation3 + $0xb2] sm:$0xff]
      %v2773 = vld [vmem:[#allocation3 + $0xc2] sm:$0xff]
      %v2774 = vld [vmem:[#allocation3 + $0xca] sm:$0xff]
      %v2775 = vld [vmem:[#allocation3 + $0xda] sm:$0xff]
      %v2776 = vld [vmem:[#allocation3 + $0xe2] sm:$0xff]
      %v2777 = vld [vmem:[#allocation3 + $0xf2] sm:$0xff]
      %v2778 = vld [vmem:[#allocation3 + $0xfa] sm:$0xff]
      %v2779 = vld [vmem:[#allocation3 + $0x10a] sm:$0xff]
      %v2780 = vld [vmem:[#allocation3 + $0x112] sm:$0xff]
      %v2781 = vld [vmem:[#allocation3 + $0x122] sm:$0xff]
      %v2782 = vld [vmem:[#allocation3 + $0x12a] sm:$0xff]
      %v2783 = vld [vmem:[#allocation3 + $0x13a] sm:$0xff]
      %v2784 = vld [vmem:[#allocation3 + $0x142] sm:$0xff]
      %v2785 = vld [vmem:[#allocation3 + $0x152] sm:$0xff]
      %v2786 = vld [vmem:[#allocation3 + $0x15a] sm:$0xff]
      %v2787 = vld [vmem:[#allocation3 + $0x16a] sm:$0xff]
      %v2788 = vld [vmem:[#allocation3 + $0x172] sm:$0xff]
      %2821 = vrot.lane.b32.xlu0 %v2757, 16
      %v2822 = vpop.permute.xlu0 %2821
      %2823 = vrot.lane.b32.xlu0 %v2758, 16
      %v2824 = vpop.permute.xlu0 %2823
      %2825 = vrot.lane.b32.xlu0 %v2759, 16
      %v2826 = vpop.permute.xlu0 %2825
      %2827 = vrot.lane.b32.xlu0 %v2760, 16
      %v2828 = vpop.permute.xlu0 %2827
      %2829 = vrot.lane.b32.xlu0 %v2761, 16
      %v2830 = vpop.permute.xlu0 %2829
      %2831 = vrot.lane.b32.xlu0 %v2762, 16
      %v2832 = vpop.permute.xlu0 %2831
      %2833 = vrot.lane.b32.xlu0 %v2763, 16
      %v2834 = vpop.permute.xlu0 %2833
      %2835 = vrot.lane.b32.xlu0 %v2764, 16
      %v2836 = vpop.permute.xlu0 %2835
      %2837 = vrot.lane.b32.xlu0 %v2765, 16
      %v2838 = vpop.permute.xlu0 %2837
      %2839 = vrot.lane.b32.xlu0 %v2766, 16
      %v2840 = vpop.permute.xlu0 %2839
      %2841 = vrot.lane.b32.xlu0 %v2767, 16
      %v2842 = vpop.permute.xlu0 %2841
      %2843 = vrot.lane.b32.xlu0 %v2768, 16
      %v2844 = vpop.permute.xlu0 %2843
      %2845 = vrot.lane.b32.xlu0 %v2769, 16
      %v2846 = vpop.permute.xlu0 %2845
      %2847 = vrot.lane.b32.xlu0 %v2770, 16
      %v2848 = vpop.permute.xlu0 %2847
      %2849 = vrot.lane.b32.xlu0 %v2771, 16
      %v2850 = vpop.permute.xlu0 %2849
      %2851 = vrot.lane.b32.xlu0 %v2772, 16
      %v2852 = vpop.permute.xlu0 %2851
      %2853 = vrot.lane.b32.xlu0 %v2773, 16
      %v2854 = vpop.permute.xlu0 %2853
      %2855 = vrot.lane.b32.xlu0 %v2774, 16
      %v2856 = vpop.permute.xlu0 %2855
      %2857 = vrot.lane.b32.xlu0 %v2775, 16
      %v2858 = vpop.permute.xlu0 %2857
      %2859 = vrot.lane.b32.xlu0 %v2776, 16
      %v2860 = vpop.permute.xlu0 %2859
      %2861 = vrot.lane.b32.xlu0 %v2777, 16
      %v2862 = vpop.permute.xlu0 %2861
      %2863 = vrot.lane.b32.xlu0 %v2778, 16
      %v2864 = vpop.permute.xlu0 %2863
      %2865 = vrot.lane.b32.xlu0 %v2779, 16
      %v2866 = vpop.permute.xlu0 %2865
      %2867 = vrot.lane.b32.xlu0 %v2780, 16
      %v2868 = vpop.permute.xlu0 %2867
      %2869 = vrot.lane.b32.xlu0 %v2781, 16
      %v2870 = vpop.permute.xlu0 %2869
      %2871 = vrot.lane.b32.xlu0 %v2782, 16
      %v2872 = vpop.permute.xlu0 %2871
      %2873 = vrot.lane.b32.xlu0 %v2783, 16
      %v2874 = vpop.permute.xlu0 %2873
      %2875 = vrot.lane.b32.xlu0 %v2784, 16
      %v2876 = vpop.permute.xlu0 %2875
      %2877 = vrot.lane.b32.xlu0 %v2785, 16
      %v2878 = vpop.permute.xlu0 %2877
      %2879 = vrot.lane.b32.xlu0 %v2786, 16
      %v2880 = vpop.permute.xlu0 %2879
      %2881 = vrot.lane.b32.xlu0 %v2787, 16
      %v2882 = vpop.permute.xlu0 %2881
      %2883 = vrot.lane.b32.xlu0 %v2788, 16
      %v2884 = vpop.permute.xlu0 %2883
      %vm2917 = vcmask 195712
      %2918 = vst.msk [vmem:[#allocation4] sm:$0xff] %vm2917, %v2822
      %2919 = vst.msk [vmem:[#allocation4 + $0x8] sm:$0xff] %vm2917, %v2824
      %2920 = vst.msk [vmem:[#allocation4 + $0x10] sm:$0xff] %vm2917, %v2826
      %2921 = vst.msk [vmem:[#allocation4 + $0x18] sm:$0xff] %vm2917, %v2828
      %2922 = vst.msk [vmem:[#allocation4 + $0x20] sm:$0xff] %vm2917, %v2830
      %2923 = vst.msk [vmem:[#allocation4 + $0x28] sm:$0xff] %vm2917, %v2832
      %2924 = vst.msk [vmem:[#allocation4 + $0x30] sm:$0xff] %vm2917, %v2834
      %2925 = vst.msk [vmem:[#allocation4 + $0x38] sm:$0xff] %vm2917, %v2836
      %2926 = vst.msk [vmem:[#allocation4 + $0x40] sm:$0xff] %vm2917, %v2838
      %2927 = vst.msk [vmem:[#allocation4 + $0x48] sm:$0xff] %vm2917, %v2840
      %2928 = vst.msk [vmem:[#allocation4 + $0x50] sm:$0xff] %vm2917, %v2842
      %2929 = vst.msk [vmem:[#allocation4 + $0x58] sm:$0xff] %vm2917, %v2844
      %2930 = vst.msk [vmem:[#allocation4 + $0x60] sm:$0xff] %vm2917, %v2846
      %2931 = vst.msk [vmem:[#allocation4 + $0x68] sm:$0xff] %vm2917, %v2848
      %2932 = vst.msk [vmem:[#allocation4 + $0x70] sm:$0xff] %vm2917, %v2850
      %2933 = vst.msk [vmem:[#allocation4 + $0x78] sm:$0xff] %vm2917, %v2852
      %2934 = vst.msk [vmem:[#allocation4 + $0x80] sm:$0xff] %vm2917, %v2854
      %2935 = vst.msk [vmem:[#allocation4 + $0x88] sm:$0xff] %vm2917, %v2856
      %2936 = vst.msk [vmem:[#allocation4 + $0x90] sm:$0xff] %vm2917, %v2858
      %2937 = vst.msk [vmem:[#allocation4 + $0x98] sm:$0xff] %vm2917, %v2860
      %2938 = vst.msk [vmem:[#allocation4 + $0xa0] sm:$0xff] %vm2917, %v2862
      %2939 = vst.msk [vmem:[#allocation4 + $0xa8] sm:$0xff] %vm2917, %v2864
      %2940 = vst.msk [vmem:[#allocation4 + $0xb0] sm:$0xff] %vm2917, %v2866
      %2941 = vst.msk [vmem:[#allocation4 + $0xb8] sm:$0xff] %vm2917, %v2868
      %2942 = vst.msk [vmem:[#allocation4 + $0xc0] sm:$0xff] %vm2917, %v2870
      %2943 = vst.msk [vmem:[#allocation4 + $0xc8] sm:$0xff] %vm2917, %v2872
      %2944 = vst.msk [vmem:[#allocation4 + $0xd0] sm:$0xff] %vm2917, %v2874
      %2945 = vst.msk [vmem:[#allocation4 + $0xd8] sm:$0xff] %vm2917, %v2876
      %2946 = vst.msk [vmem:[#allocation4 + $0xe0] sm:$0xff] %vm2917, %v2878
      %2947 = vst.msk [vmem:[#allocation4 + $0xe8] sm:$0xff] %vm2917, %v2880
      %2948 = vst.msk [vmem:[#allocation4 + $0xf0] sm:$0xff] %vm2917, %v2882
      %2949 = vst.msk [vmem:[#allocation4 + $0xf8] sm:$0xff] %vm2917, %v2884
      %v2950 = vld [vmem:[%s2467] sm:$0xff]
      %v2951 = vld [vmem:[%s2467 + $0x8] sm:$0xff]
      %v2952 = vld [vmem:[%s2467 + $0x18] sm:$0xff]
      %v2953 = vld [vmem:[%s2467 + $0x20] sm:$0xff]
      %v2954 = vld [vmem:[%s2467 + $0x30] sm:$0xff]
      %v2955 = vld [vmem:[%s2467 + $0x38] sm:$0xff]
      %v2956 = vld [vmem:[%s2467 + $0x48] sm:$0xff]
      %v2957 = vld [vmem:[%s2467 + $0x50] sm:$0xff]
      %v2958 = vld [vmem:[%s2467 + $0x60] sm:$0xff]
      %v2959 = vld [vmem:[%s2467 + $0x68] sm:$0xff]
      %v2960 = vld [vmem:[%s2467 + $0x78] sm:$0xff]
      %v2961 = vld [vmem:[%s2467 + $0x80] sm:$0xff]
      %v2962 = vld [vmem:[%s2467 + $0x90] sm:$0xff]
      %v2963 = vld [vmem:[%s2467 + $0x98] sm:$0xff]
      %v2964 = vld [vmem:[%s2467 + $0xa8] sm:$0xff]
      %v2965 = vld [vmem:[%s2467 + $0xb0] sm:$0xff]
      %v2966 = vld [vmem:[%s2467 + $0xc0] sm:$0xff]
      %v2967 = vld [vmem:[%s2467 + $0xc8] sm:$0xff]
      %v2968 = vld [vmem:[%s2467 + $0xd8] sm:$0xff]
      %v2969 = vld [vmem:[%s2467 + $0xe0] sm:$0xff]
      %v2970 = vld [vmem:[%s2467 + $0xf0] sm:$0xff]
      %v2971 = vld [vmem:[%s2467 + $0xf8] sm:$0xff]
      %v2972 = vld [vmem:[%s2467 + $0x108] sm:$0xff]
      %v2973 = vld [vmem:[%s2467 + $0x110] sm:$0xff]
      %v2974 = vld [vmem:[%s2467 + $0x120] sm:$0xff]
      %v2975 = vld [vmem:[%s2467 + $0x128] sm:$0xff]
      %v2976 = vld [vmem:[%s2467 + $0x138] sm:$0xff]
      %v2977 = vld [vmem:[%s2467 + $0x140] sm:$0xff]
      %v2978 = vld [vmem:[%s2467 + $0x150] sm:$0xff]
      %v2979 = vld [vmem:[%s2467 + $0x158] sm:$0xff]
      %v2980 = vld [vmem:[%s2467 + $0x168] sm:$0xff]
      %v2981 = vld [vmem:[%s2467 + $0x170] sm:$0xff]
      %3014 = vrot.lane.b32.xlu0 %v2950, 24
      %v3015 = vpop.permute.xlu0 %3014
      %3016 = vrot.lane.b32.xlu0 %v2951, 24
      %v3017 = vpop.permute.xlu0 %3016
      %3018 = vrot.lane.b32.xlu0 %v2952, 24
      %v3019 = vpop.permute.xlu0 %3018
      %3020 = vrot.lane.b32.xlu0 %v2953, 24
      %v3021 = vpop.permute.xlu0 %3020
      %3022 = vrot.lane.b32.xlu0 %v2954, 24
      %v3023 = vpop.permute.xlu0 %3022
      %3024 = vrot.lane.b32.xlu0 %v2955, 24
      %v3025 = vpop.permute.xlu0 %3024
      %3026 = vrot.lane.b32.xlu0 %v2956, 24
      %v3027 = vpop.permute.xlu0 %3026
      %3028 = vrot.lane.b32.xlu0 %v2957, 24
      %v3029 = vpop.permute.xlu0 %3028
      %3030 = vrot.lane.b32.xlu0 %v2958, 24
      %v3031 = vpop.permute.xlu0 %3030
      %3032 = vrot.lane.b32.xlu0 %v2959, 24
      %v3033 = vpop.permute.xlu0 %3032
      %3034 = vrot.lane.b32.xlu0 %v2960, 24
      %v3035 = vpop.permute.xlu0 %3034
      %3036 = vrot.lane.b32.xlu0 %v2961, 24
      %v3037 = vpop.permute.xlu0 %3036
      %3038 = vrot.lane.b32.xlu0 %v2962, 24
      %v3039 = vpop.permute.xlu0 %3038
      %3040 = vrot.lane.b32.xlu0 %v2963, 24
      %v3041 = vpop.permute.xlu0 %3040
      %3042 = vrot.lane.b32.xlu0 %v2964, 24
      %v3043 = vpop.permute.xlu0 %3042
      %3044 = vrot.lane.b32.xlu0 %v2965, 24
      %v3045 = vpop.permute.xlu0 %3044
      %3046 = vrot.lane.b32.xlu0 %v2966, 24
      %v3047 = vpop.permute.xlu0 %3046
      %3048 = vrot.lane.b32.xlu0 %v2967, 24
      %v3049 = vpop.permute.xlu0 %3048
      %3050 = vrot.lane.b32.xlu0 %v2968, 24
      %v3051 = vpop.permute.xlu0 %3050
      %3052 = vrot.lane.b32.xlu0 %v2969, 24
      %v3053 = vpop.permute.xlu0 %3052
      %3054 = vrot.lane.b32.xlu0 %v2970, 24
      %v3055 = vpop.permute.xlu0 %3054
      %3056 = vrot.lane.b32.xlu0 %v2971, 24
      %v3057 = vpop.permute.xlu0 %3056
      %3058 = vrot.lane.b32.xlu0 %v2972, 24
      %v3059 = vpop.permute.xlu0 %3058
      %3060 = vrot.lane.b32.xlu0 %v2973, 24
      %v3061 = vpop.permute.xlu0 %3060
      %3062 = vrot.lane.b32.xlu0 %v2974, 24
      %v3063 = vpop.permute.xlu0 %3062
      %3064 = vrot.lane.b32.xlu0 %v2975, 24
      %v3065 = vpop.permute.xlu0 %3064
      %3066 = vrot.lane.b32.xlu0 %v2976, 24
      %v3067 = vpop.permute.xlu0 %3066
      %3068 = vrot.lane.b32.xlu0 %v2977, 24
      %v3069 = vpop.permute.xlu0 %3068
      %3070 = vrot.lane.b32.xlu0 %v2978, 24
      %v3071 = vpop.permute.xlu0 %3070
      %3072 = vrot.lane.b32.xlu0 %v2979, 24
      %v3073 = vpop.permute.xlu0 %3072
      %3074 = vrot.lane.b32.xlu0 %v2980, 24
      %v3075 = vpop.permute.xlu0 %3074
      %3076 = vrot.lane.b32.xlu0 %v2981, 24
      %v3077 = vpop.permute.xlu0 %3076
      %vm3110 = vcmask 261312
      %3111 = vst.msk [vmem:[#allocation4] sm:$0xff] %vm3110, %v3015
      %3112 = vst.msk [vmem:[#allocation4 + $0x8] sm:$0xff] %vm3110, %v3017
      %3113 = vst.msk [vmem:[#allocation4 + $0x10] sm:$0xff] %vm3110, %v3019
      %3114 = vst.msk [vmem:[#allocation4 + $0x18] sm:$0xff] %vm3110, %v3021
      %3115 = vst.msk [vmem:[#allocation4 + $0x20] sm:$0xff] %vm3110, %v3023
      %3116 = vst.msk [vmem:[#allocation4 + $0x28] sm:$0xff] %vm3110, %v3025
      %3117 = vst.msk [vmem:[#allocation4 + $0x30] sm:$0xff] %vm3110, %v3027
      %3118 = vst.msk [vmem:[#allocation4 + $0x38] sm:$0xff] %vm3110, %v3029
      %3119 = vst.msk [vmem:[#allocation4 + $0x40] sm:$0xff] %vm3110, %v3031
      %3120 = vst.msk [vmem:[#allocation4 + $0x48] sm:$0xff] %vm3110, %v3033
      %3121 = vst.msk [vmem:[#allocation4 + $0x50] sm:$0xff] %vm3110, %v3035
      %3122 = vst.msk [vmem:[#allocation4 + $0x58] sm:$0xff] %vm3110, %v3037
      %3123 = vst.msk [vmem:[#allocation4 + $0x60] sm:$0xff] %vm3110, %v3039
      %3124 = vst.msk [vmem:[#allocation4 + $0x68] sm:$0xff] %vm3110, %v3041
      %3125 = vst.msk [vmem:[#allocation4 + $0x70] sm:$0xff] %vm3110, %v3043
      %3126 = vst.msk [vmem:[#allocation4 + $0x78] sm:$0xff] %vm3110, %v3045
      %3127 = vst.msk [vmem:[#allocation4 + $0x80] sm:$0xff] %vm3110, %v3047
      %3128 = vst.msk [vmem:[#allocation4 + $0x88] sm:$0xff] %vm3110, %v3049
      %3129 = vst.msk [vmem:[#allocation4 + $0x90] sm:$0xff] %vm3110, %v3051
      %3130 = vst.msk [vmem:[#allocation4 + $0x98] sm:$0xff] %vm3110, %v3053
      %3131 = vst.msk [vmem:[#allocation4 + $0xa0] sm:$0xff] %vm3110, %v3055
      %3132 = vst.msk [vmem:[#allocation4 + $0xa8] sm:$0xff] %vm3110, %v3057
      %3133 = vst.msk [vmem:[#allocation4 + $0xb0] sm:$0xff] %vm3110, %v3059
      %3134 = vst.msk [vmem:[#allocation4 + $0xb8] sm:$0xff] %vm3110, %v3061
      %3135 = vst.msk [vmem:[#allocation4 + $0xc0] sm:$0xff] %vm3110, %v3063
      %3136 = vst.msk [vmem:[#allocation4 + $0xc8] sm:$0xff] %vm3110, %v3065
      %3137 = vst.msk [vmem:[#allocation4 + $0xd0] sm:$0xff] %vm3110, %v3067
      %3138 = vst.msk [vmem:[#allocation4 + $0xd8] sm:$0xff] %vm3110, %v3069
      %3139 = vst.msk [vmem:[#allocation4 + $0xe0] sm:$0xff] %vm3110, %v3071
      %3140 = vst.msk [vmem:[#allocation4 + $0xe8] sm:$0xff] %vm3110, %v3073
      %3141 = vst.msk [vmem:[#allocation4 + $0xf0] sm:$0xff] %vm3110, %v3075
      %3142 = vst.msk [vmem:[#allocation4 + $0xf8] sm:$0xff] %vm3110, %v3077
      %v3143 = vld [vmem:[%s2467 + $0x1] sm:$0xff]
      %v3144 = vld [vmem:[%s2467 + $0x9] sm:$0xff]
      %v3145 = vld [vmem:[%s2467 + $0x19] sm:$0xff]
      %v3146 = vld [vmem:[%s2467 + $0x21] sm:$0xff]
      %v3147 = vld [vmem:[%s2467 + $0x31] sm:$0xff]
      %v3148 = vld [vmem:[%s2467 + $0x39] sm:$0xff]
      %v3149 = vld [vmem:[%s2467 + $0x49] sm:$0xff]
      %v3150 = vld [vmem:[%s2467 + $0x51] sm:$0xff]
      %v3151 = vld [vmem:[%s2467 + $0x61] sm:$0xff]
      %v3152 = vld [vmem:[%s2467 + $0x69] sm:$0xff]
      %v3153 = vld [vmem:[%s2467 + $0x79] sm:$0xff]
      %v3154 = vld [vmem:[%s2467 + $0x81] sm:$0xff]
      %v3155 = vld [vmem:[%s2467 + $0x91] sm:$0xff]
      %v3156 = vld [vmem:[%s2467 + $0x99] sm:$0xff]
      %v3157 = vld [vmem:[%s2467 + $0xa9] sm:$0xff]
      %v3158 = vld [vmem:[%s2467 + $0xb1] sm:$0xff]
      %v3159 = vld [vmem:[%s2467 + $0xc1] sm:$0xff]
      %v3160 = vld [vmem:[%s2467 + $0xc9] sm:$0xff]
      %v3161 = vld [vmem:[%s2467 + $0xd9] sm:$0xff]
      %v3162 = vld [vmem:[%s2467 + $0xe1] sm:$0xff]
      %v3163 = vld [vmem:[%s2467 + $0xf1] sm:$0xff]
      %v3164 = vld [vmem:[%s2467 + $0xf9] sm:$0xff]
      %v3165 = vld [vmem:[%s2467 + $0x109] sm:$0xff]
      %v3166 = vld [vmem:[%s2467 + $0x111] sm:$0xff]
      %v3167 = vld [vmem:[%s2467 + $0x121] sm:$0xff]
      %v3168 = vld [vmem:[%s2467 + $0x129] sm:$0xff]
      %v3169 = vld [vmem:[%s2467 + $0x139] sm:$0xff]
      %v3170 = vld [vmem:[%s2467 + $0x141] sm:$0xff]
      %v3171 = vld [vmem:[%s2467 + $0x151] sm:$0xff]
      %v3172 = vld [vmem:[%s2467 + $0x159] sm:$0xff]
      %v3173 = vld [vmem:[%s2467 + $0x169] sm:$0xff]
      %v3174 = vld [vmem:[%s2467 + $0x171] sm:$0xff]
      %3207 = vrot.lane.b32.xlu0 %v3143, 32
      %v3208 = vpop.permute.xlu0 %3207
      %3209 = vrot.lane.b32.xlu0 %v3144, 32
      %v3210 = vpop.permute.xlu0 %3209
      %3211 = vrot.lane.b32.xlu0 %v3145, 32
      %v3212 = vpop.permute.xlu0 %3211
      %3213 = vrot.lane.b32.xlu0 %v3146, 32
      %v3214 = vpop.permute.xlu0 %3213
      %3215 = vrot.lane.b32.xlu0 %v3147, 32
      %v3216 = vpop.permute.xlu0 %3215
      %3217 = vrot.lane.b32.xlu0 %v3148, 32
      %v3218 = vpop.permute.xlu0 %3217
      %3219 = vrot.lane.b32.xlu0 %v3149, 32
      %v3220 = vpop.permute.xlu0 %3219
      %3221 = vrot.lane.b32.xlu0 %v3150, 32
      %v3222 = vpop.permute.xlu0 %3221
      %3223 = vrot.lane.b32.xlu0 %v3151, 32
      %v3224 = vpop.permute.xlu0 %3223
      %3225 = vrot.lane.b32.xlu0 %v3152, 32
      %v3226 = vpop.permute.xlu0 %3225
      %3227 = vrot.lane.b32.xlu0 %v3153, 32
      %v3228 = vpop.permute.xlu0 %3227
      %3229 = vrot.lane.b32.xlu0 %v3154, 32
      %v3230 = vpop.permute.xlu0 %3229
      %3231 = vrot.lane.b32.xlu0 %v3155, 32
      %v3232 = vpop.permute.xlu0 %3231
      %3233 = vrot.lane.b32.xlu0 %v3156, 32
      %v3234 = vpop.permute.xlu0 %3233
      %3235 = vrot.lane.b32.xlu0 %v3157, 32
      %v3236 = vpop.permute.xlu0 %3235
      %3237 = vrot.lane.b32.xlu0 %v3158, 32
      %v3238 = vpop.permute.xlu0 %3237
      %3239 = vrot.lane.b32.xlu0 %v3159, 32
      %v3240 = vpop.permute.xlu0 %3239
      %3241 = vrot.lane.b32.xlu0 %v3160, 32
      %v3242 = vpop.permute.xlu0 %3241
      %3243 = vrot.lane.b32.xlu0 %v3161, 32
      %v3244 = vpop.permute.xlu0 %3243
      %3245 = vrot.lane.b32.xlu0 %v3162, 32
      %v3246 = vpop.permute.xlu0 %3245
      %3247 = vrot.lane.b32.xlu0 %v3163, 32
      %v3248 = vpop.permute.xlu0 %3247
      %3249 = vrot.lane.b32.xlu0 %v3164, 32
      %v3250 = vpop.permute.xlu0 %3249
      %3251 = vrot.lane.b32.xlu0 %v3165, 32
      %v3252 = vpop.permute.xlu0 %3251
      %3253 = vrot.lane.b32.xlu0 %v3166, 32
      %v3254 = vpop.permute.xlu0 %3253
      %3255 = vrot.lane.b32.xlu0 %v3167, 32
      %v3256 = vpop.permute.xlu0 %3255
      %3257 = vrot.lane.b32.xlu0 %v3168, 32
      %v3258 = vpop.permute.xlu0 %3257
      %3259 = vrot.lane.b32.xlu0 %v3169, 32
      %v3260 = vpop.permute.xlu0 %3259
      %3261 = vrot.lane.b32.xlu0 %v3170, 32
      %v3262 = vpop.permute.xlu0 %3261
      %3263 = vrot.lane.b32.xlu0 %v3171, 32
      %v3264 = vpop.permute.xlu0 %3263
      %3265 = vrot.lane.b32.xlu0 %v3172, 32
      %v3266 = vpop.permute.xlu0 %3265
      %3267 = vrot.lane.b32.xlu0 %v3173, 32
      %v3268 = vpop.permute.xlu0 %3267
      %3269 = vrot.lane.b32.xlu0 %v3174, 32
      %v3270 = vpop.permute.xlu0 %3269
      %vm3303 = vcmask 326912
      %3304 = vst.msk [vmem:[#allocation4] sm:$0xff] %vm3303, %v3208
      %3305 = vst.msk [vmem:[#allocation4 + $0x8] sm:$0xff] %vm3303, %v3210
      %3306 = vst.msk [vmem:[#allocation4 + $0x10] sm:$0xff] %vm3303, %v3212
      %3307 = vst.msk [vmem:[#allocation4 + $0x18] sm:$0xff] %vm3303, %v3214
      %3308 = vst.msk [vmem:[#allocation4 + $0x20] sm:$0xff] %vm3303, %v3216
      %3309 = vst.msk [vmem:[#allocation4 + $0x28] sm:$0xff] %vm3303, %v3218
      %3310 = vst.msk [vmem:[#allocation4 + $0x30] sm:$0xff] %vm3303, %v3220
      %3311 = vst.msk [vmem:[#allocation4 + $0x38] sm:$0xff] %vm3303, %v3222
      %3312 = vst.msk [vmem:[#allocation4 + $0x40] sm:$0xff] %vm3303, %v3224
      %3313 = vst.msk [vmem:[#allocation4 + $0x48] sm:$0xff] %vm3303, %v3226
      %3314 = vst.msk [vmem:[#allocation4 + $0x50] sm:$0xff] %vm3303, %v3228
      %3315 = vst.msk [vmem:[#allocation4 + $0x58] sm:$0xff] %vm3303, %v3230
      %3316 = vst.msk [vmem:[#allocation4 + $0x60] sm:$0xff] %vm3303, %v3232
      %3317 = vst.msk [vmem:[#allocation4 + $0x68] sm:$0xff] %vm3303, %v3234
      %3318 = vst.msk [vmem:[#allocation4 + $0x70] sm:$0xff] %vm3303, %v3236
      %3319 = vst.msk [vmem:[#allocation4 + $0x78] sm:$0xff] %vm3303, %v3238
      %3320 = vst.msk [vmem:[#allocation4 + $0x80] sm:$0xff] %vm3303, %v3240
      %3321 = vst.msk [vmem:[#allocation4 + $0x88] sm:$0xff] %vm3303, %v3242
      %3322 = vst.msk [vmem:[#allocation4 + $0x90] sm:$0xff] %vm3303, %v3244
      %3323 = vst.msk [vmem:[#allocation4 + $0x98] sm:$0xff] %vm3303, %v3246
      %3324 = vst.msk [vmem:[#allocation4 + $0xa0] sm:$0xff] %vm3303, %v3248
      %3325 = vst.msk [vmem:[#allocation4 + $0xa8] sm:$0xff] %vm3303, %v3250
      %3326 = vst.msk [vmem:[#allocation4 + $0xb0] sm:$0xff] %vm3303, %v3252
      %3327 = vst.msk [vmem:[#allocation4 + $0xb8] sm:$0xff] %vm3303, %v3254
      %3328 = vst.msk [vmem:[#allocation4 + $0xc0] sm:$0xff] %vm3303, %v3256
      %3329 = vst.msk [vmem:[#allocation4 + $0xc8] sm:$0xff] %vm3303, %v3258
      %3330 = vst.msk [vmem:[#allocation4 + $0xd0] sm:$0xff] %vm3303, %v3260
      %3331 = vst.msk [vmem:[#allocation4 + $0xd8] sm:$0xff] %vm3303, %v3262
      %3332 = vst.msk [vmem:[#allocation4 + $0xe0] sm:$0xff] %vm3303, %v3264
      %3333 = vst.msk [vmem:[#allocation4 + $0xe8] sm:$0xff] %vm3303, %v3266
      %3334 = vst.msk [vmem:[#allocation4 + $0xf0] sm:$0xff] %vm3303, %v3268
      %3335 = vst.msk [vmem:[#allocation4 + $0xf8] sm:$0xff] %vm3303, %v3270
      %v3336 = vld [vmem:[%s2467 + $0x2] sm:$0xff]
      %v3337 = vld [vmem:[%s2467 + $0xa] sm:$0xff]
      %v3338 = vld [vmem:[%s2467 + $0x1a] sm:$0xff]
      %v3339 = vld [vmem:[%s2467 + $0x22] sm:$0xff]
      %v3340 = vld [vmem:[%s2467 + $0x32] sm:$0xff]
      %v3341 = vld [vmem:[%s2467 + $0x3a] sm:$0xff]
      %v3342 = vld [vmem:[%s2467 + $0x4a] sm:$0xff]
      %v3343 = vld [vmem:[%s2467 + $0x52] sm:$0xff]
      %v3344 = vld [vmem:[%s2467 + $0x62] sm:$0xff]
      %v3345 = vld [vmem:[%s2467 + $0x6a] sm:$0xff]
      %v3346 = vld [vmem:[%s2467 + $0x7a] sm:$0xff]
      %v3347 = vld [vmem:[%s2467 + $0x82] sm:$0xff]
      %v3348 = vld [vmem:[%s2467 + $0x92] sm:$0xff]
      %v3349 = vld [vmem:[%s2467 + $0x9a] sm:$0xff]
      %v3350 = vld [vmem:[%s2467 + $0xaa] sm:$0xff]
      %v3351 = vld [vmem:[%s2467 + $0xb2] sm:$0xff]
      %v3352 = vld [vmem:[%s2467 + $0xc2] sm:$0xff]
      %v3353 = vld [vmem:[%s2467 + $0xca] sm:$0xff]
      %v3354 = vld [vmem:[%s2467 + $0xda] sm:$0xff]
      %v3355 = vld [vmem:[%s2467 + $0xe2] sm:$0xff]
      %v3356 = vld [vmem:[%s2467 + $0xf2] sm:$0xff]
      %v3357 = vld [vmem:[%s2467 + $0xfa] sm:$0xff]
      %v3358 = vld [vmem:[%s2467 + $0x10a] sm:$0xff]
      %v3359 = vld [vmem:[%s2467 + $0x112] sm:$0xff]
      %v3360 = vld [vmem:[%s2467 + $0x122] sm:$0xff]
      %v3361 = vld [vmem:[%s2467 + $0x12a] sm:$0xff]
      %v3362 = vld [vmem:[%s2467 + $0x13a] sm:$0xff]
      %v3363 = vld [vmem:[%s2467 + $0x142] sm:$0xff]
      %v3364 = vld [vmem:[%s2467 + $0x152] sm:$0xff]
      %v3365 = vld [vmem:[%s2467 + $0x15a] sm:$0xff]
      %v3366 = vld [vmem:[%s2467 + $0x16a] sm:$0xff]
      %v3367 = vld [vmem:[%s2467 + $0x172] sm:$0xff]
      %3400 = vrot.lane.b32.xlu0 %v3336, 40
      %v3401 = vpop.permute.xlu0 %3400
      %3402 = vrot.lane.b32.xlu0 %v3337, 40
      %v3403 = vpop.permute.xlu0 %3402
      %3404 = vrot.lane.b32.xlu0 %v3338, 40
      %v3405 = vpop.permute.xlu0 %3404
      %3406 = vrot.lane.b32.xlu0 %v3339, 40
      %v3407 = vpop.permute.xlu0 %3406
      %3408 = vrot.lane.b32.xlu0 %v3340, 40
      %v3409 = vpop.permute.xlu0 %3408
      %3410 = vrot.lane.b32.xlu0 %v3341, 40
      %v3411 = vpop.permute.xlu0 %3410
      %3412 = vrot.lane.b32.xlu0 %v3342, 40
      %v3413 = vpop.permute.xlu0 %3412
      %3414 = vrot.lane.b32.xlu0 %v3343, 40
      %v3415 = vpop.permute.xlu0 %3414
      %3416 = vrot.lane.b32.xlu0 %v3344, 40
      %v3417 = vpop.permute.xlu0 %3416
      %3418 = vrot.lane.b32.xlu0 %v3345, 40
      %v3419 = vpop.permute.xlu0 %3418
      %3420 = vrot.lane.b32.xlu0 %v3346, 40
      %v3421 = vpop.permute.xlu0 %3420
      %3422 = vrot.lane.b32.xlu0 %v3347, 40
      %v3423 = vpop.permute.xlu0 %3422
      %3424 = vrot.lane.b32.xlu0 %v3348, 40
      %v3425 = vpop.permute.xlu0 %3424
      %3426 = vrot.lane.b32.xlu0 %v3349, 40
      %v3427 = vpop.permute.xlu0 %3426
      %3428 = vrot.lane.b32.xlu0 %v3350, 40
      %v3429 = vpop.permute.xlu0 %3428
      %3430 = vrot.lane.b32.xlu0 %v3351, 40
      %v3431 = vpop.permute.xlu0 %3430
      %3432 = vrot.lane.b32.xlu0 %v3352, 40
      %v3433 = vpop.permute.xlu0 %3432
      %3434 = vrot.lane.b32.xlu0 %v3353, 40
      %v3435 = vpop.permute.xlu0 %3434
      %3436 = vrot.lane.b32.xlu0 %v3354, 40
      %v3437 = vpop.permute.xlu0 %3436
      %3438 = vrot.lane.b32.xlu0 %v3355, 40
      %v3439 = vpop.permute.xlu0 %3438
      %3440 = vrot.lane.b32.xlu0 %v3356, 40
      %v3441 = vpop.permute.xlu0 %3440
      %3442 = vrot.lane.b32.xlu0 %v3357, 40
      %v3443 = vpop.permute.xlu0 %3442
      %3444 = vrot.lane.b32.xlu0 %v3358, 40
      %v3445 = vpop.permute.xlu0 %3444
      %3446 = vrot.lane.b32.xlu0 %v3359, 40
      %v3447 = vpop.permute.xlu0 %3446
      %3448 = vrot.lane.b32.xlu0 %v3360, 40
      %v3449 = vpop.permute.xlu0 %3448
      %3450 = vrot.lane.b32.xlu0 %v3361, 40
      %v3451 = vpop.permute.xlu0 %3450
      %3452 = vrot.lane.b32.xlu0 %v3362, 40
      %v3453 = vpop.permute.xlu0 %3452
      %3454 = vrot.lane.b32.xlu0 %v3363, 40
      %v3455 = vpop.permute.xlu0 %3454
      %3456 = vrot.lane.b32.xlu0 %v3364, 40
      %v3457 = vpop.permute.xlu0 %3456
      %3458 = vrot.lane.b32.xlu0 %v3365, 40
      %v3459 = vpop.permute.xlu0 %3458
      %3460 = vrot.lane.b32.xlu0 %v3366, 40
      %v3461 = vpop.permute.xlu0 %3460
      %3462 = vrot.lane.b32.xlu0 %v3367, 40
      %v3463 = vpop.permute.xlu0 %3462
      %vm3496 = vcmask 392512
      %3497 = vst.msk [vmem:[#allocation4] sm:$0xff] %vm3496, %v3401
      %3498 = vst.msk [vmem:[#allocation4 + $0x8] sm:$0xff] %vm3496, %v3403
      %3499 = vst.msk [vmem:[#allocation4 + $0x10] sm:$0xff] %vm3496, %v3405
      %3500 = vst.msk [vmem:[#allocation4 + $0x18] sm:$0xff] %vm3496, %v3407
      %3501 = vst.msk [vmem:[#allocation4 + $0x20] sm:$0xff] %vm3496, %v3409
      %3502 = vst.msk [vmem:[#allocation4 + $0x28] sm:$0xff] %vm3496, %v3411
      %3503 = vst.msk [vmem:[#allocation4 + $0x30] sm:$0xff] %vm3496, %v3413
      %3504 = vst.msk [vmem:[#allocation4 + $0x38] sm:$0xff] %vm3496, %v3415
      %3505 = vst.msk [vmem:[#allocation4 + $0x40] sm:$0xff] %vm3496, %v3417
      %3506 = vst.msk [vmem:[#allocation4 + $0x48] sm:$0xff] %vm3496, %v3419
      %3507 = vst.msk [vmem:[#allocation4 + $0x50] sm:$0xff] %vm3496, %v3421
      %3508 = vst.msk [vmem:[#allocation4 + $0x58] sm:$0xff] %vm3496, %v3423
      %3509 = vst.msk [vmem:[#allocation4 + $0x60] sm:$0xff] %vm3496, %v3425
      %3510 = vst.msk [vmem:[#allocation4 + $0x68] sm:$0xff] %vm3496, %v3427
      %3511 = vst.msk [vmem:[#allocation4 + $0x70] sm:$0xff] %vm3496, %v3429
      %3512 = vst.msk [vmem:[#allocation4 + $0x78] sm:$0xff] %vm3496, %v3431
      %3513 = vst.msk [vmem:[#allocation4 + $0x80] sm:$0xff] %vm3496, %v3433
      %3514 = vst.msk [vmem:[#allocation4 + $0x88] sm:$0xff] %vm3496, %v3435
      %3515 = vst.msk [vmem:[#allocation4 + $0x90] sm:$0xff] %vm3496, %v3437
      %3516 = vst.msk [vmem:[#allocation4 + $0x98] sm:$0xff] %vm3496, %v3439
      %3517 = vst.msk [vmem:[#allocation4 + $0xa0] sm:$0xff] %vm3496, %v3441
      %3518 = vst.msk [vmem:[#allocation4 + $0xa8] sm:$0xff] %vm3496, %v3443
      %3519 = vst.msk [vmem:[#allocation4 + $0xb0] sm:$0xff] %vm3496, %v3445
      %3520 = vst.msk [vmem:[#allocation4 + $0xb8] sm:$0xff] %vm3496, %v3447
      %3521 = vst.msk [vmem:[#allocation4 + $0xc0] sm:$0xff] %vm3496, %v3449
      %3522 = vst.msk [vmem:[#allocation4 + $0xc8] sm:$0xff] %vm3496, %v3451
      %3523 = vst.msk [vmem:[#allocation4 + $0xd0] sm:$0xff] %vm3496, %v3453
      %3524 = vst.msk [vmem:[#allocation4 + $0xd8] sm:$0xff] %vm3496, %v3455
      %3525 = vst.msk [vmem:[#allocation4 + $0xe0] sm:$0xff] %vm3496, %v3457
      %3526 = vst.msk [vmem:[#allocation4 + $0xe8] sm:$0xff] %vm3496, %v3459
      %3527 = vst.msk [vmem:[#allocation4 + $0xf0] sm:$0xff] %vm3496, %v3461
      %3528 = vst.msk [vmem:[#allocation4 + $0xf8] sm:$0xff] %vm3496, %v3463
      %s3529 = scalar_lea.vmem [#allocation3], 48
      %v3530 = vld [vmem:[%s3529] sm:$0xff]
      %v3531 = vld [vmem:[%s3529 + $0x8] sm:$0xff]
      %v3532 = vld [vmem:[%s3529 + $0x18] sm:$0xff]
      %v3533 = vld [vmem:[%s3529 + $0x20] sm:$0xff]
      %v3534 = vld [vmem:[%s3529 + $0x30] sm:$0xff]
      %v3535 = vld [vmem:[%s3529 + $0x38] sm:$0xff]
      %v3536 = vld [vmem:[%s3529 + $0x48] sm:$0xff]
      %v3537 = vld [vmem:[%s3529 + $0x50] sm:$0xff]
      %v3538 = vld [vmem:[%s3529 + $0x60] sm:$0xff]
      %v3539 = vld [vmem:[%s3529 + $0x68] sm:$0xff]
      %v3540 = vld [vmem:[%s3529 + $0x78] sm:$0xff]
      %v3541 = vld [vmem:[%s3529 + $0x80] sm:$0xff]
      %v3542 = vld [vmem:[%s3529 + $0x90] sm:$0xff]
      %v3543 = vld [vmem:[%s3529 + $0x98] sm:$0xff]
      %v3544 = vld [vmem:[%s3529 + $0xa8] sm:$0xff]
      %v3545 = vld [vmem:[%s3529 + $0xb0] sm:$0xff]
      %v3546 = vld [vmem:[%s3529 + $0xc0] sm:$0xff]
      %v3547 = vld [vmem:[%s3529 + $0xc8] sm:$0xff]
      %v3548 = vld [vmem:[%s3529 + $0xd8] sm:$0xff]
      %v3549 = vld [vmem:[%s3529 + $0xe0] sm:$0xff]
      %v3550 = vld [vmem:[%s3529 + $0xf0] sm:$0xff]
      %v3551 = vld [vmem:[%s3529 + $0xf8] sm:$0xff]
      %v3552 = vld [vmem:[%s3529 + $0x108] sm:$0xff]
      %v3553 = vld [vmem:[%s3529 + $0x110] sm:$0xff]
      %v3554 = vld [vmem:[%s3529 + $0x120] sm:$0xff]
      %v3555 = vld [vmem:[%s3529 + $0x128] sm:$0xff]
      %v3556 = vld [vmem:[%s3529 + $0x138] sm:$0xff]
      %v3557 = vld [vmem:[%s3529 + $0x140] sm:$0xff]
      %v3558 = vld [vmem:[%s3529 + $0x150] sm:$0xff]
      %v3559 = vld [vmem:[%s3529 + $0x158] sm:$0xff]
      %v3560 = vld [vmem:[%s3529 + $0x168] sm:$0xff]
      %v3561 = vld [vmem:[%s3529 + $0x170] sm:$0xff]
      %3594 = vrot.lane.b32.xlu0 %v3530, 48
      %v3595 = vpop.permute.xlu0 %3594
      %3596 = vrot.lane.b32.xlu0 %v3531, 48
      %v3597 = vpop.permute.xlu0 %3596
      %3598 = vrot.lane.b32.xlu0 %v3532, 48
      %v3599 = vpop.permute.xlu0 %3598
      %3600 = vrot.lane.b32.xlu0 %v3533, 48
      %v3601 = vpop.permute.xlu0 %3600
      %3602 = vrot.lane.b32.xlu0 %v3534, 48
      %v3603 = vpop.permute.xlu0 %3602
      %3604 = vrot.lane.b32.xlu0 %v3535, 48
      %v3605 = vpop.permute.xlu0 %3604
      %3606 = vrot.lane.b32.xlu0 %v3536, 48
      %v3607 = vpop.permute.xlu0 %3606
      %3608 = vrot.lane.b32.xlu0 %v3537, 48
      %v3609 = vpop.permute.xlu0 %3608
      %3610 = vrot.lane.b32.xlu0 %v3538, 48
      %v3611 = vpop.permute.xlu0 %3610
      %3612 = vrot.lane.b32.xlu0 %v3539, 48
      %v3613 = vpop.permute.xlu0 %3612
      %3614 = vrot.lane.b32.xlu0 %v3540, 48
      %v3615 = vpop.permute.xlu0 %3614
      %3616 = vrot.lane.b32.xlu0 %v3541, 48
      %v3617 = vpop.permute.xlu0 %3616
      %3618 = vrot.lane.b32.xlu0 %v3542, 48
      %v3619 = vpop.permute.xlu0 %3618
      %3620 = vrot.lane.b32.xlu0 %v3543, 48
      %v3621 = vpop.permute.xlu0 %3620
      %3622 = vrot.lane.b32.xlu0 %v3544, 48
      %v3623 = vpop.permute.xlu0 %3622
      %3624 = vrot.lane.b32.xlu0 %v3545, 48
      %v3625 = vpop.permute.xlu0 %3624
      %3626 = vrot.lane.b32.xlu0 %v3546, 48
      %v3627 = vpop.permute.xlu0 %3626
      %3628 = vrot.lane.b32.xlu0 %v3547, 48
      %v3629 = vpop.permute.xlu0 %3628
      %3630 = vrot.lane.b32.xlu0 %v3548, 48
      %v3631 = vpop.permute.xlu0 %3630
      %3632 = vrot.lane.b32.xlu0 %v3549, 48
      %v3633 = vpop.permute.xlu0 %3632
      %3634 = vrot.lane.b32.xlu0 %v3550, 48
      %v3635 = vpop.permute.xlu0 %3634
      %3636 = vrot.lane.b32.xlu0 %v3551, 48
      %v3637 = vpop.permute.xlu0 %3636
      %3638 = vrot.lane.b32.xlu0 %v3552, 48
      %v3639 = vpop.permute.xlu0 %3638
      %3640 = vrot.lane.b32.xlu0 %v3553, 48
      %v3641 = vpop.permute.xlu0 %3640
      %3642 = vrot.lane.b32.xlu0 %v3554, 48
      %v3643 = vpop.permute.xlu0 %3642
      %3644 = vrot.lane.b32.xlu0 %v3555, 48
      %v3645 = vpop.permute.xlu0 %3644
      %3646 = vrot.lane.b32.xlu0 %v3556, 48
      %v3647 = vpop.permute.xlu0 %3646
      %3648 = vrot.lane.b32.xlu0 %v3557, 48
      %v3649 = vpop.permute.xlu0 %3648
      %3650 = vrot.lane.b32.xlu0 %v3558, 48
      %v3651 = vpop.permute.xlu0 %3650
      %3652 = vrot.lane.b32.xlu0 %v3559, 48
      %v3653 = vpop.permute.xlu0 %3652
      %3654 = vrot.lane.b32.xlu0 %v3560, 48
      %v3655 = vpop.permute.xlu0 %3654
      %3656 = vrot.lane.b32.xlu0 %v3561, 48
      %v3657 = vpop.permute.xlu0 %3656
      %vm3690 = vcmask 458112
      %3691 = vst.msk [vmem:[#allocation4] sm:$0xff] %vm3690, %v3595
      %3692 = vst.msk [vmem:[#allocation4 + $0x8] sm:$0xff] %vm3690, %v3597
      %3693 = vst.msk [vmem:[#allocation4 + $0x10] sm:$0xff] %vm3690, %v3599
      %3694 = vst.msk [vmem:[#allocation4 + $0x18] sm:$0xff] %vm3690, %v3601
      %3695 = vst.msk [vmem:[#allocation4 + $0x20] sm:$0xff] %vm3690, %v3603
      %3696 = vst.msk [vmem:[#allocation4 + $0x28] sm:$0xff] %vm3690, %v3605
      %3697 = vst.msk [vmem:[#allocation4 + $0x30] sm:$0xff] %vm3690, %v3607
      %3698 = vst.msk [vmem:[#allocation4 + $0x38] sm:$0xff] %vm3690, %v3609
      %3699 = vst.msk [vmem:[#allocation4 + $0x40] sm:$0xff] %vm3690, %v3611
      %3700 = vst.msk [vmem:[#allocation4 + $0x48] sm:$0xff] %vm3690, %v3613
      %3701 = vst.msk [vmem:[#allocation4 + $0x50] sm:$0xff] %vm3690, %v3615
      %3702 = vst.msk [vmem:[#allocation4 + $0x58] sm:$0xff] %vm3690, %v3617
      %3703 = vst.msk [vmem:[#allocation4 + $0x60] sm:$0xff] %vm3690, %v3619
      %3704 = vst.msk [vmem:[#allocation4 + $0x68] sm:$0xff] %vm3690, %v3621
      %3705 = vst.msk [vmem:[#allocation4 + $0x70] sm:$0xff] %vm3690, %v3623
      %3706 = vst.msk [vmem:[#allocation4 + $0x78] sm:$0xff] %vm3690, %v3625
      %3707 = vst.msk [vmem:[#allocation4 + $0x80] sm:$0xff] %vm3690, %v3627
      %3708 = vst.msk [vmem:[#allocation4 + $0x88] sm:$0xff] %vm3690, %v3629
      %3709 = vst.msk [vmem:[#allocation4 + $0x90] sm:$0xff] %vm3690, %v3631
      %3710 = vst.msk [vmem:[#allocation4 + $0x98] sm:$0xff] %vm3690, %v3633
      %3711 = vst.msk [vmem:[#allocation4 + $0xa0] sm:$0xff] %vm3690, %v3635
      %3712 = vst.msk [vmem:[#allocation4 + $0xa8] sm:$0xff] %vm3690, %v3637
      %3713 = vst.msk [vmem:[#allocation4 + $0xb0] sm:$0xff] %vm3690, %v3639
      %3714 = vst.msk [vmem:[#allocation4 + $0xb8] sm:$0xff] %vm3690, %v3641
      %3715 = vst.msk [vmem:[#allocation4 + $0xc0] sm:$0xff] %vm3690, %v3643
      %3716 = vst.msk [vmem:[#allocation4 + $0xc8] sm:$0xff] %vm3690, %v3645
      %3717 = vst.msk [vmem:[#allocation4 + $0xd0] sm:$0xff] %vm3690, %v3647
      %3718 = vst.msk [vmem:[#allocation4 + $0xd8] sm:$0xff] %vm3690, %v3649
      %3719 = vst.msk [vmem:[#allocation4 + $0xe0] sm:$0xff] %vm3690, %v3651
      %3720 = vst.msk [vmem:[#allocation4 + $0xe8] sm:$0xff] %vm3690, %v3653
      %3721 = vst.msk [vmem:[#allocation4 + $0xf0] sm:$0xff] %vm3690, %v3655
      %3722 = vst.msk [vmem:[#allocation4 + $0xf8] sm:$0xff] %vm3690, %v3657
      %v3723 = vld [vmem:[%s3529 + $0x1] sm:$0xff]
      %v3724 = vld [vmem:[%s3529 + $0x9] sm:$0xff]
      %v3725 = vld [vmem:[%s3529 + $0x19] sm:$0xff]
      %v3726 = vld [vmem:[%s3529 + $0x21] sm:$0xff]
      %v3727 = vld [vmem:[%s3529 + $0x31] sm:$0xff]
      %v3728 = vld [vmem:[%s3529 + $0x39] sm:$0xff]
      %v3729 = vld [vmem:[%s3529 + $0x49] sm:$0xff]
      %v3730 = vld [vmem:[%s3529 + $0x51] sm:$0xff]
      %v3731 = vld [vmem:[%s3529 + $0x61] sm:$0xff]
      %v3732 = vld [vmem:[%s3529 + $0x69] sm:$0xff]
      %v3733 = vld [vmem:[%s3529 + $0x79] sm:$0xff]
      %v3734 = vld [vmem:[%s3529 + $0x81] sm:$0xff]
      %v3735 = vld [vmem:[%s3529 + $0x91] sm:$0xff]
      %v3736 = vld [vmem:[%s3529 + $0x99] sm:$0xff]
      %v3737 = vld [vmem:[%s3529 + $0xa9] sm:$0xff]
      %v3738 = vld [vmem:[%s3529 + $0xb1] sm:$0xff]
      %v3739 = vld [vmem:[%s3529 + $0xc1] sm:$0xff]
      %v3740 = vld [vmem:[%s3529 + $0xc9] sm:$0xff]
      %v3741 = vld [vmem:[%s3529 + $0xd9] sm:$0xff]
      %v3742 = vld [vmem:[%s3529 + $0xe1] sm:$0xff]
      %v3743 = vld [vmem:[%s3529 + $0xf1] sm:$0xff]
      %v3744 = vld [vmem:[%s3529 + $0xf9] sm:$0xff]
      %v3745 = vld [vmem:[%s3529 + $0x109] sm:$0xff]
      %v3746 = vld [vmem:[%s3529 + $0x111] sm:$0xff]
      %v3747 = vld [vmem:[%s3529 + $0x121] sm:$0xff]
      %v3748 = vld [vmem:[%s3529 + $0x129] sm:$0xff]
      %v3749 = vld [vmem:[%s3529 + $0x139] sm:$0xff]
      %v3750 = vld [vmem:[%s3529 + $0x141] sm:$0xff]
      %v3751 = vld [vmem:[%s3529 + $0x151] sm:$0xff]
      %v3752 = vld [vmem:[%s3529 + $0x159] sm:$0xff]
      %v3753 = vld [vmem:[%s3529 + $0x169] sm:$0xff]
      %v3754 = vld [vmem:[%s3529 + $0x171] sm:$0xff]
      %3787 = vrot.lane.b32.xlu0 %v3723, 56
      %v3788 = vpop.permute.xlu0 %3787
      %3789 = vrot.lane.b32.xlu0 %v3724, 56
      %v3790 = vpop.permute.xlu0 %3789
      %3791 = vrot.lane.b32.xlu0 %v3725, 56
      %v3792 = vpop.permute.xlu0 %3791
      %3793 = vrot.lane.b32.xlu0 %v3726, 56
      %v3794 = vpop.permute.xlu0 %3793
      %3795 = vrot.lane.b32.xlu0 %v3727, 56
      %v3796 = vpop.permute.xlu0 %3795
      %3797 = vrot.lane.b32.xlu0 %v3728, 56
      %v3798 = vpop.permute.xlu0 %3797
      %3799 = vrot.lane.b32.xlu0 %v3729, 56
      %v3800 = vpop.permute.xlu0 %3799
      %3801 = vrot.lane.b32.xlu0 %v3730, 56
      %v3802 = vpop.permute.xlu0 %3801
      %3803 = vrot.lane.b32.xlu0 %v3731, 56
      %v3804 = vpop.permute.xlu0 %3803
      %3805 = vrot.lane.b32.xlu0 %v3732, 56
      %v3806 = vpop.permute.xlu0 %3805
      %3807 = vrot.lane.b32.xlu0 %v3733, 56
      %v3808 = vpop.permute.xlu0 %3807
      %3809 = vrot.lane.b32.xlu0 %v3734, 56
      %v3810 = vpop.permute.xlu0 %3809
      %3811 = vrot.lane.b32.xlu0 %v3735, 56
      %v3812 = vpop.permute.xlu0 %3811
      %3813 = vrot.lane.b32.xlu0 %v3736, 56
      %v3814 = vpop.permute.xlu0 %3813
      %3815 = vrot.lane.b32.xlu0 %v3737, 56
      %v3816 = vpop.permute.xlu0 %3815
      %3817 = vrot.lane.b32.xlu0 %v3738, 56
      %v3818 = vpop.permute.xlu0 %3817
      %3819 = vrot.lane.b32.xlu0 %v3739, 56
      %v3820 = vpop.permute.xlu0 %3819
      %3821 = vrot.lane.b32.xlu0 %v3740, 56
      %v3822 = vpop.permute.xlu0 %3821
      %3823 = vrot.lane.b32.xlu0 %v3741, 56
      %v3824 = vpop.permute.xlu0 %3823
      %3825 = vrot.lane.b32.xlu0 %v3742, 56
      %v3826 = vpop.permute.xlu0 %3825
      %3827 = vrot.lane.b32.xlu0 %v3743, 56
      %v3828 = vpop.permute.xlu0 %3827
      %3829 = vrot.lane.b32.xlu0 %v3744, 56
      %v3830 = vpop.permute.xlu0 %3829
      %3831 = vrot.lane.b32.xlu0 %v3745, 56
      %v3832 = vpop.permute.xlu0 %3831
      %3833 = vrot.lane.b32.xlu0 %v3746, 56
      %v3834 = vpop.permute.xlu0 %3833
      %3835 = vrot.lane.b32.xlu0 %v3747, 56
      %v3836 = vpop.permute.xlu0 %3835
      %3837 = vrot.lane.b32.xlu0 %v3748, 56
      %v3838 = vpop.permute.xlu0 %3837
      %3839 = vrot.lane.b32.xlu0 %v3749, 56
      %v3840 = vpop.permute.xlu0 %3839
      %3841 = vrot.lane.b32.xlu0 %v3750, 56
      %v3842 = vpop.permute.xlu0 %3841
      %3843 = vrot.lane.b32.xlu0 %v3751, 56
      %v3844 = vpop.permute.xlu0 %3843
      %3845 = vrot.lane.b32.xlu0 %v3752, 56
      %v3846 = vpop.permute.xlu0 %3845
      %3847 = vrot.lane.b32.xlu0 %v3753, 56
      %v3848 = vpop.permute.xlu0 %3847
      %3849 = vrot.lane.b32.xlu0 %v3754, 56
      %v3850 = vpop.permute.xlu0 %3849
      %vm3883 = vcmask 523712
      %3884 = vst.msk [vmem:[#allocation4] sm:$0xff] %vm3883, %v3788
      %3885 = vst.msk [vmem:[#allocation4 + $0x8] sm:$0xff] %vm3883, %v3790
      %3886 = vst.msk [vmem:[#allocation4 + $0x10] sm:$0xff] %vm3883, %v3792
      %3887 = vst.msk [vmem:[#allocation4 + $0x18] sm:$0xff] %vm3883, %v3794
      %3888 = vst.msk [vmem:[#allocation4 + $0x20] sm:$0xff] %vm3883, %v3796
      %3889 = vst.msk [vmem:[#allocation4 + $0x28] sm:$0xff] %vm3883, %v3798
      %3890 = vst.msk [vmem:[#allocation4 + $0x30] sm:$0xff] %vm3883, %v3800
      %3891 = vst.msk [vmem:[#allocation4 + $0x38] sm:$0xff] %vm3883, %v3802
      %3892 = vst.msk [vmem:[#allocation4 + $0x40] sm:$0xff] %vm3883, %v3804
      %3893 = vst.msk [vmem:[#allocation4 + $0x48] sm:$0xff] %vm3883, %v3806
      %3894 = vst.msk [vmem:[#allocation4 + $0x50] sm:$0xff] %vm3883, %v3808
      %3895 = vst.msk [vmem:[#allocation4 + $0x58] sm:$0xff] %vm3883, %v3810
      %3896 = vst.msk [vmem:[#allocation4 + $0x60] sm:$0xff] %vm3883, %v3812
      %3897 = vst.msk [vmem:[#allocation4 + $0x68] sm:$0xff] %vm3883, %v3814
      %3898 = vst.msk [vmem:[#allocation4 + $0x70] sm:$0xff] %vm3883, %v3816
      %3899 = vst.msk [vmem:[#allocation4 + $0x78] sm:$0xff] %vm3883, %v3818
      %3900 = vst.msk [vmem:[#allocation4 + $0x80] sm:$0xff] %vm3883, %v3820
      %3901 = vst.msk [vmem:[#allocation4 + $0x88] sm:$0xff] %vm3883, %v3822
      %3902 = vst.msk [vmem:[#allocation4 + $0x90] sm:$0xff] %vm3883, %v3824
      %3903 = vst.msk [vmem:[#allocation4 + $0x98] sm:$0xff] %vm3883, %v3826
      %3904 = vst.msk [vmem:[#allocation4 + $0xa0] sm:$0xff] %vm3883, %v3828
      %3905 = vst.msk [vmem:[#allocation4 + $0xa8] sm:$0xff] %vm3883, %v3830
      %3906 = vst.msk [vmem:[#allocation4 + $0xb0] sm:$0xff] %vm3883, %v3832
      %3907 = vst.msk [vmem:[#allocation4 + $0xb8] sm:$0xff] %vm3883, %v3834
      %3908 = vst.msk [vmem:[#allocation4 + $0xc0] sm:$0xff] %vm3883, %v3836
      %3909 = vst.msk [vmem:[#allocation4 + $0xc8] sm:$0xff] %vm3883, %v3838
      %3910 = vst.msk [vmem:[#allocation4 + $0xd0] sm:$0xff] %vm3883, %v3840
      %3911 = vst.msk [vmem:[#allocation4 + $0xd8] sm:$0xff] %vm3883, %v3842
      %3912 = vst.msk [vmem:[#allocation4 + $0xe0] sm:$0xff] %vm3883, %v3844
      %3913 = vst.msk [vmem:[#allocation4 + $0xe8] sm:$0xff] %vm3883, %v3846
      %3914 = vst.msk [vmem:[#allocation4 + $0xf0] sm:$0xff] %vm3883, %v3848
      %3915 = vst.msk [vmem:[#allocation4 + $0xf8] sm:$0xff] %vm3883, %v3850
      %v3916 = vld [vmem:[%s3529 + $0x2] sm:$0xff]
      %v3917 = vld [vmem:[%s3529 + $0xa] sm:$0xff]
      %v3918 = vld [vmem:[%s3529 + $0x1a] sm:$0xff]
      %v3919 = vld [vmem:[%s3529 + $0x22] sm:$0xff]
      %v3920 = vld [vmem:[%s3529 + $0x32] sm:$0xff]
      %v3921 = vld [vmem:[%s3529 + $0x3a] sm:$0xff]
      %v3922 = vld [vmem:[%s3529 + $0x4a] sm:$0xff]
      %v3923 = vld [vmem:[%s3529 + $0x52] sm:$0xff]
      %v3924 = vld [vmem:[%s3529 + $0x62] sm:$0xff]
      %v3925 = vld [vmem:[%s3529 + $0x6a] sm:$0xff]
      %v3926 = vld [vmem:[%s3529 + $0x7a] sm:$0xff]
      %v3927 = vld [vmem:[%s3529 + $0x82] sm:$0xff]
      %v3928 = vld [vmem:[%s3529 + $0x92] sm:$0xff]
      %v3929 = vld [vmem:[%s3529 + $0x9a] sm:$0xff]
      %v3930 = vld [vmem:[%s3529 + $0xaa] sm:$0xff]
      %v3931 = vld [vmem:[%s3529 + $0xb2] sm:$0xff]
      %v3932 = vld [vmem:[%s3529 + $0xc2] sm:$0xff]
      %v3933 = vld [vmem:[%s3529 + $0xca] sm:$0xff]
      %v3934 = vld [vmem:[%s3529 + $0xda] sm:$0xff]
      %v3935 = vld [vmem:[%s3529 + $0xe2] sm:$0xff]
      %v3936 = vld [vmem:[%s3529 + $0xf2] sm:$0xff]
      %v3937 = vld [vmem:[%s3529 + $0xfa] sm:$0xff]
      %v3938 = vld [vmem:[%s3529 + $0x10a] sm:$0xff]
      %v3939 = vld [vmem:[%s3529 + $0x112] sm:$0xff]
      %v3940 = vld [vmem:[%s3529 + $0x122] sm:$0xff]
      %v3941 = vld [vmem:[%s3529 + $0x12a] sm:$0xff]
      %v3942 = vld [vmem:[%s3529 + $0x13a] sm:$0xff]
      %v3943 = vld [vmem:[%s3529 + $0x142] sm:$0xff]
      %v3944 = vld [vmem:[%s3529 + $0x152] sm:$0xff]
      %v3945 = vld [vmem:[%s3529 + $0x15a] sm:$0xff]
      %v3946 = vld [vmem:[%s3529 + $0x16a] sm:$0xff]
      %v3947 = vld [vmem:[%s3529 + $0x172] sm:$0xff]
      %3980 = vrot.lane.b32.xlu0 %v3916, 64
      %v3981 = vpop.permute.xlu0 %3980
      %3982 = vrot.lane.b32.xlu0 %v3917, 64
      %v3983 = vpop.permute.xlu0 %3982
      %3984 = vrot.lane.b32.xlu0 %v3918, 64
      %v3985 = vpop.permute.xlu0 %3984
      %3986 = vrot.lane.b32.xlu0 %v3919, 64
      %v3987 = vpop.permute.xlu0 %3986
      %3988 = vrot.lane.b32.xlu0 %v3920, 64
      %v3989 = vpop.permute.xlu0 %3988
      %3990 = vrot.lane.b32.xlu0 %v3921, 64
      %v3991 = vpop.permute.xlu0 %3990
      %3992 = vrot.lane.b32.xlu0 %v3922, 64
      %v3993 = vpop.permute.xlu0 %3992
      %3994 = vrot.lane.b32.xlu0 %v3923, 64
      %v3995 = vpop.permute.xlu0 %3994
      %3996 = vrot.lane.b32.xlu0 %v3924, 64
      %v3997 = vpop.permute.xlu0 %3996
      %3998 = vrot.lane.b32.xlu0 %v3925, 64
      %v3999 = vpop.permute.xlu0 %3998
      %4000 = vrot.lane.b32.xlu0 %v3926, 64
      %v4001 = vpop.permute.xlu0 %4000
      %4002 = vrot.lane.b32.xlu0 %v3927, 64
      %v4003 = vpop.permute.xlu0 %4002
      %4004 = vrot.lane.b32.xlu0 %v3928, 64
      %v4005 = vpop.permute.xlu0 %4004
      %4006 = vrot.lane.b32.xlu0 %v3929, 64
      %v4007 = vpop.permute.xlu0 %4006
      %4008 = vrot.lane.b32.xlu0 %v3930, 64
      %v4009 = vpop.permute.xlu0 %4008
      %4010 = vrot.lane.b32.xlu0 %v3931, 64
      %v4011 = vpop.permute.xlu0 %4010
      %4012 = vrot.lane.b32.xlu0 %v3932, 64
      %v4013 = vpop.permute.xlu0 %4012
      %4014 = vrot.lane.b32.xlu0 %v3933, 64
      %v4015 = vpop.permute.xlu0 %4014
      %4016 = vrot.lane.b32.xlu0 %v3934, 64
      %v4017 = vpop.permute.xlu0 %4016
      %4018 = vrot.lane.b32.xlu0 %v3935, 64
      %v4019 = vpop.permute.xlu0 %4018
      %4020 = vrot.lane.b32.xlu0 %v3936, 64
      %v4021 = vpop.permute.xlu0 %4020
      %4022 = vrot.lane.b32.xlu0 %v3937, 64
      %v4023 = vpop.permute.xlu0 %4022
      %4024 = vrot.lane.b32.xlu0 %v3938, 64
      %v4025 = vpop.permute.xlu0 %4024
      %4026 = vrot.lane.b32.xlu0 %v3939, 64
      %v4027 = vpop.permute.xlu0 %4026
      %4028 = vrot.lane.b32.xlu0 %v3940, 64
      %v4029 = vpop.permute.xlu0 %4028
      %4030 = vrot.lane.b32.xlu0 %v3941, 64
      %v4031 = vpop.permute.xlu0 %4030
      %4032 = vrot.lane.b32.xlu0 %v3942, 64
      %v4033 = vpop.permute.xlu0 %4032
      %4034 = vrot.lane.b32.xlu0 %v3943, 64
      %v4035 = vpop.permute.xlu0 %4034
      %4036 = vrot.lane.b32.xlu0 %v3944, 64
      %v4037 = vpop.permute.xlu0 %4036
      %4038 = vrot.lane.b32.xlu0 %v3945, 64
      %v4039 = vpop.permute.xlu0 %4038
      %4040 = vrot.lane.b32.xlu0 %v3946, 64
      %v4041 = vpop.permute.xlu0 %4040
      %4042 = vrot.lane.b32.xlu0 %v3947, 64
      %v4043 = vpop.permute.xlu0 %4042
      %vm4076 = vcmask 589312
      %4077 = vst.msk [vmem:[#allocation4] sm:$0xff] %vm4076, %v3981
      %4078 = vst.msk [vmem:[#allocation4 + $0x8] sm:$0xff] %vm4076, %v3983
      %4079 = vst.msk [vmem:[#allocation4 + $0x10] sm:$0xff] %vm4076, %v3985
      %4080 = vst.msk [vmem:[#allocation4 + $0x18] sm:$0xff] %vm4076, %v3987
      %4081 = vst.msk [vmem:[#allocation4 + $0x20] sm:$0xff] %vm4076, %v3989
      %4082 = vst.msk [vmem:[#allocation4 + $0x28] sm:$0xff] %vm4076, %v3991
      %4083 = vst.msk [vmem:[#allocation4 + $0x30] sm:$0xff] %vm4076, %v3993
      %4084 = vst.msk [vmem:[#allocation4 + $0x38] sm:$0xff] %vm4076, %v3995
      %4085 = vst.msk [vmem:[#allocation4 + $0x40] sm:$0xff] %vm4076, %v3997
      %4086 = vst.msk [vmem:[#allocation4 + $0x48] sm:$0xff] %vm4076, %v3999
      %4087 = vst.msk [vmem:[#allocation4 + $0x50] sm:$0xff] %vm4076, %v4001
      %4088 = vst.msk [vmem:[#allocation4 + $0x58] sm:$0xff] %vm4076, %v4003
      %4089 = vst.msk [vmem:[#allocation4 + $0x60] sm:$0xff] %vm4076, %v4005
      %4090 = vst.msk [vmem:[#allocation4 + $0x68] sm:$0xff] %vm4076, %v4007
      %4091 = vst.msk [vmem:[#allocation4 + $0x70] sm:$0xff] %vm4076, %v4009
      %4092 = vst.msk [vmem:[#allocation4 + $0x78] sm:$0xff] %vm4076, %v4011
      %4093 = vst.msk [vmem:[#allocation4 + $0x80] sm:$0xff] %vm4076, %v4013
      %4094 = vst.msk [vmem:[#allocation4 + $0x88] sm:$0xff] %vm4076, %v4015
      %4095 = vst.msk [vmem:[#allocation4 + $0x90] sm:$0xff] %vm4076, %v4017
      %4096 = vst.msk [vmem:[#allocation4 + $0x98] sm:$0xff] %vm4076, %v4019
      %4097 = vst.msk [vmem:[#allocation4 + $0xa0] sm:$0xff] %vm4076, %v4021
      %4098 = vst.msk [vmem:[#allocation4 + $0xa8] sm:$0xff] %vm4076, %v4023
      %4099 = vst.msk [vmem:[#allocation4 + $0xb0] sm:$0xff] %vm4076, %v4025
      %4100 = vst.msk [vmem:[#allocation4 + $0xb8] sm:$0xff] %vm4076, %v4027
      %4101 = vst.msk [vmem:[#allocation4 + $0xc0] sm:$0xff] %vm4076, %v4029
      %4102 = vst.msk [vmem:[#allocation4 + $0xc8] sm:$0xff] %vm4076, %v4031
      %4103 = vst.msk [vmem:[#allocation4 + $0xd0] sm:$0xff] %vm4076, %v4033
      %4104 = vst.msk [vmem:[#allocation4 + $0xd8] sm:$0xff] %vm4076, %v4035
      %4105 = vst.msk [vmem:[#allocation4 + $0xe0] sm:$0xff] %vm4076, %v4037
      %4106 = vst.msk [vmem:[#allocation4 + $0xe8] sm:$0xff] %vm4076, %v4039
      %4107 = vst.msk [vmem:[#allocation4 + $0xf0] sm:$0xff] %vm4076, %v4041
      %4108 = vst.msk [vmem:[#allocation4 + $0xf8] sm:$0xff] %vm4076, %v4043
      %v4109 = vld [vmem:[#allocation4] sm:$0xff]
      %v4110 = vld [vmem:[#allocation4 + $0x8] sm:$0xff]
      %v4111 = vld [vmem:[#allocation4 + $0x10] sm:$0xff]
      %v4112 = vld [vmem:[#allocation4 + $0x18] sm:$0xff]
      %v4113 = vld [vmem:[#allocation4 + $0x20] sm:$0xff]
      %v4114 = vld [vmem:[#allocation4 + $0x28] sm:$0xff]
      %v4115 = vld [vmem:[#allocation4 + $0x30] sm:$0xff]
      %v4116 = vld [vmem:[#allocation4 + $0x38] sm:$0xff]
      %v4117 = vld [vmem:[#allocation4 + $0x40] sm:$0xff]
      %v4118 = vld [vmem:[#allocation4 + $0x48] sm:$0xff]
      %v4119 = vld [vmem:[#allocation4 + $0x50] sm:$0xff]
      %v4120 = vld [vmem:[#allocation4 + $0x58] sm:$0xff]
      %v4121 = vld [vmem:[#allocation4 + $0x60] sm:$0xff]
      %v4122 = vld [vmem:[#allocation4 + $0x68] sm:$0xff]
      %v4123 = vld [vmem:[#allocation4 + $0x70] sm:$0xff]
      %v4124 = vld [vmem:[#allocation4 + $0x78] sm:$0xff]
      %v4125 = vld [vmem:[#allocation4 + $0x80] sm:$0xff]
      %v4126 = vld [vmem:[#allocation4 + $0x88] sm:$0xff]
      %v4127 = vld [vmem:[#allocation4 + $0x90] sm:$0xff]
      %v4128 = vld [vmem:[#allocation4 + $0x98] sm:$0xff]
      %v4129 = vld [vmem:[#allocation4 + $0xa0] sm:$0xff]
      %v4130 = vld [vmem:[#allocation4 + $0xa8] sm:$0xff]
      %v4131 = vld [vmem:[#allocation4 + $0xb0] sm:$0xff]
      %v4132 = vld [vmem:[#allocation4 + $0xb8] sm:$0xff]
      %v4133 = vld [vmem:[#allocation4 + $0xc0] sm:$0xff]
      %v4134 = vld [vmem:[#allocation4 + $0xc8] sm:$0xff]
      %v4135 = vld [vmem:[#allocation4 + $0xd0] sm:$0xff]
      %v4136 = vld [vmem:[#allocation4 + $0xd8] sm:$0xff]
      %v4137 = vld [vmem:[#allocation4 + $0xe0] sm:$0xff]
      %v4138 = vld [vmem:[#allocation4 + $0xe8] sm:$0xff]
      %v4139 = vld [vmem:[#allocation4 + $0xf0] sm:$0xff]
      %v4140 = vld [vmem:[#allocation4 + $0xf8] sm:$0xff]
      %v4141 = vld [vmem:[%s3] sm:$0xff]
      %v4142 = vld [vmem:[%s3 + $0x8] sm:$0xff]
      %v4143 = vld [vmem:[%s3 + $0x10] sm:$0xff]
      %v4144 = vld [vmem:[%s3 + $0x18] sm:$0xff]
      %v4145 = vld [vmem:[%s3 + $0x20] sm:$0xff]
      %v4146 = vld [vmem:[%s3 + $0x28] sm:$0xff]
      %v4147 = vld [vmem:[%s3 + $0x30] sm:$0xff]
      %v4148 = vld [vmem:[%s3 + $0x38] sm:$0xff]
      %v4149 = vld [vmem:[%s3 + $0x40] sm:$0xff]
      %v4150 = vld [vmem:[%s4] sm:$0x1]
      %v4152 = vlaneseq
      %v4153 = vshrl.u32 %v4152, 7
      %v4154 = vsub.s32 0, %v4153
      %v4155 = vrot.slane %v4150, %v4154
      %vm4157 = vcmask 588800
      %v4159 = vsel %vm4157, %v4109, 0
      %v4162 = vsel %vm4157, %v4110, 0
      %v4165 = vsel %vm4157, %v4111, 0
      %v4168 = vsel %vm4157, %v4112, 0
      %v4171 = vsel %vm4157, %v4113, 0
      %v4174 = vsel %vm4157, %v4114, 0
      %v4177 = vsel %vm4157, %v4115, 0
      %v4180 = vsel %vm4157, %v4116, 0
      %v4183 = vsel %vm4157, %v4117, 0
      %v4186 = vsel %vm4157, %v4118, 0
      %v4189 = vsel %vm4157, %v4119, 0
      %v4192 = vsel %vm4157, %v4120, 0
      %v4195 = vsel %vm4157, %v4121, 0
      %v4198 = vsel %vm4157, %v4122, 0
      %v4201 = vsel %vm4157, %v4123, 0
      %v4204 = vsel %vm4157, %v4124, 0
      %v4207 = vsel %vm4157, %v4125, 0
      %v4210 = vsel %vm4157, %v4126, 0
      %v4213 = vsel %vm4157, %v4127, 0
      %v4216 = vsel %vm4157, %v4128, 0
      %v4219 = vsel %vm4157, %v4129, 0
      %v4222 = vsel %vm4157, %v4130, 0
      %v4225 = vsel %vm4157, %v4131, 0
      %v4228 = vsel %vm4157, %v4132, 0
      %v4231 = vsel %vm4157, %v4133, 0
      %v4234 = vsel %vm4157, %v4134, 0
      %v4237 = vsel %vm4157, %v4135, 0
      %v4240 = vsel %vm4157, %v4136, 0
      %v4243 = vsel %vm4157, %v4137, 0
      %v4246 = vsel %vm4157, %v4138, 0
      %v4249 = vsel %vm4157, %v4139, 0
      %v4252 = vsel %vm4157, %v4140, 0
      %4254 = vmatprep.subr.mxu0 0.0
      %4255 = vmatpush1.msra.mxu0 %v4141
      %4256 = vmatprep.subr.mxu0 0.0
      %4257 = vmatpush1.msra.mxu0 %v4142
      %4258 = vmatprep.subr.mxu0 0.0
      %4259 = vmatpush1.msra.mxu0 %v4143
      %4260 = vmatprep.subr.mxu0 0.0
      %4261 = vmatpush1.msra.mxu0 %v4144
      %4262 = vmatprep.subr.mxu0 0.0
      %4263 = vmatpush1.msra.mxu0 %v4145
      %4264 = vmatprep.subr.mxu0 0.0
      %4265 = vmatpush1.msra.mxu0 %v4146
      %4266 = vmatprep.subr.mxu0 0.0
      %4267 = vmatpush1.msra.mxu0 %v4147
      %4268 = vmatprep.subr.mxu0 0.0
      %4269 = vmatpush1.msra.mxu0 %v4148
      %4270 = vmatprep.subr.mxu0 0.0
      %4271 = vmatpush1.msra.mxu0 %v4149
      %4272 = vmatprep.subr.mxu0 0.0
      %4273 = vmatpush1.msra.mxu0 0.0
      %4274 = vmatprep.subr.mxu0 0.0
      %4275 = vmatpush1.msra.mxu0 0.0
      %4276 = vmatprep.subr.mxu0 0.0
      %4277 = vmatpush1.msra.mxu0 0.0
      %4278 = vmatprep.subr.mxu0 0.0
      %4279 = vmatpush1.msra.mxu0 0.0
      %4280 = vmatprep.subr.mxu0 0.0
      %4281 = vmatpush1.msra.mxu0 0.0
      %4282 = vmatprep.subr.mxu0 0.0
      %4283 = vmatpush1.msra.mxu0 0.0
      %4284 = vmatprep.subr.mxu0 0.0
      %4285 = vmatpush1.msra.mxu0 0.0
      %4286 = vmatprep.subr.mxu0 0.0
      %4287 = vmatpush1.msra.mxu0 0.0
      %4288 = vmatprep.subr.mxu0 0.0
      %4289 = vmatpush1.msra.mxu0 0.0
      %4290 = vmatprep.subr.mxu0 0.0
      %4291 = vmatpush1.msra.mxu0 0.0
      %4292 = vmatprep.subr.mxu0 0.0
      %4293 = vmatpush1.msra.mxu0 0.0
      %4294 = vmatprep.subr.mxu0 0.0
      %4295 = vmatpush1.msra.mxu0 0.0
      %4296 = vmatprep.subr.mxu0 0.0
      %4297 = vmatpush1.msra.mxu0 0.0
      %4298 = vmatprep.subr.mxu0 0.0
      %4299 = vmatpush1.msra.mxu0 0.0
      %4300 = vmatprep.subr.mxu0 0.0
      %4301 = vmatpush1.msra.mxu0 0.0
      %4302 = vmatprep.subr.mxu0 0.0
      %4303 = vmatpush1.msra.mxu0 0.0
      %4304 = vmatprep.subr.mxu0 0.0
      %4305 = vmatpush1.msra.mxu0 0.0
      %4306 = vmatprep.subr.mxu0 0.0
      %4307 = vmatpush1.msra.mxu0 0.0
      %4308 = vmatprep.subr.mxu0 0.0
      %4309 = vmatpush1.msra.mxu0 0.0
      %4310 = vmatprep.subr.mxu0 0.0
      %4311 = vmatpush1.msra.mxu0 0.0
      %4312 = vmatprep.subr.mxu0 0.0
      %4313 = vmatpush1.msra.mxu0 0.0
      %4314 = vmatprep.subr.mxu0 0.0
      %4315 = vmatpush1.msra.mxu0 0.0
      %4316 = vmatprep.subr.mxu0 0.0
      %4317 = vmatpush1.msra.mxu0 0.0
      %4318 = vmatprep.mubr.f32.mxu0 0.0
      %4319 = vmatmul.mubr.f32.gmra.mrb[0].mxu0 %v4159
      %v4320 = vpop.f32.mrb[0].mxu0
      %v4321 = vadd.f32 %v4155, %v4320
      %v4322 = vpop.f32.mrb[0].mxu0
      %4323 = vmatprep.mubr.f32.mxu0 0.0
      %4324 = vmatmul.mubr.f32.gmra.mrb[0].mxu0 %v4162
      %v4325 = vpop.f32.mrb[0].mxu0
      %v4326 = vadd.f32 %v4155, %v4325
      %v4327 = vpop.f32.mrb[0].mxu0
      %4328 = vmatprep.mubr.f32.mxu0 0.0
      %4329 = vmatmul.mubr.f32.gmra.mrb[0].mxu0 %v4165
      %v4330 = vpop.f32.mrb[0].mxu0
      %v4331 = vadd.f32 %v4155, %v4330
      %v4332 = vpop.f32.mrb[0].mxu0
      %4333 = vmatprep.mubr.f32.mxu0 0.0
      %4334 = vmatmul.mubr.f32.gmra.mrb[0].mxu0 %v4168
      %v4335 = vpop.f32.mrb[0].mxu0
      %v4336 = vadd.f32 %v4155, %v4335
      %v4337 = vpop.f32.mrb[0].mxu0
      %4338 = vmatprep.mubr.f32.mxu0 0.0
      %4339 = vmatmul.mubr.f32.gmra.mrb[0].mxu0 %v4171
      %v4340 = vpop.f32.mrb[0].mxu0
      %v4341 = vadd.f32 %v4155, %v4340
      %v4342 = vpop.f32.mrb[0].mxu0
      %4343 = vmatprep.mubr.f32.mxu0 0.0
      %4344 = vmatmul.mubr.f32.gmra.mrb[0].mxu0 %v4174
      %v4345 = vpop.f32.mrb[0].mxu0
      %v4346 = vadd.f32 %v4155, %v4345
      %v4347 = vpop.f32.mrb[0].mxu0
      %4348 = vmatprep.mubr.f32.mxu0 0.0
      %4349 = vmatmul.mubr.f32.gmra.mrb[0].mxu0 %v4177
      %v4350 = vpop.f32.mrb[0].mxu0
      %v4351 = vadd.f32 %v4155, %v4350
      %v4352 = vpop.f32.mrb[0].mxu0
      %4353 = vmatprep.mubr.f32.mxu0 0.0
      %4354 = vmatmul.mubr.f32.gmra.mrb[0].mxu0 %v4180
      %v4355 = vpop.f32.mrb[0].mxu0
      %v4356 = vadd.f32 %v4155, %v4355
      %v4357 = vpop.f32.mrb[0].mxu0
      %4358 = vmatprep.mubr.f32.mxu0 0.0
      %4359 = vmatmul.mubr.f32.gmra.mrb[0].mxu0 %v4183
      %v4360 = vpop.f32.mrb[0].mxu0
      %v4361 = vadd.f32 %v4155, %v4360
      %v4362 = vpop.f32.mrb[0].mxu0
      %4363 = vmatprep.mubr.f32.mxu0 0.0
      %4364 = vmatmul.mubr.f32.gmra.mrb[0].mxu0 %v4186
      %v4365 = vpop.f32.mrb[0].mxu0
      %v4366 = vadd.f32 %v4155, %v4365
      %v4367 = vpop.f32.mrb[0].mxu0
      %4368 = vmatprep.mubr.f32.mxu0 0.0
      %4369 = vmatmul.mubr.f32.gmra.mrb[0].mxu0 %v4189
      %v4370 = vpop.f32.mrb[0].mxu0
      %v4371 = vadd.f32 %v4155, %v4370
      %v4372 = vpop.f32.mrb[0].mxu0
      %4373 = vmatprep.mubr.f32.mxu0 0.0
      %4374 = vmatmul.mubr.f32.gmra.mrb[0].mxu0 %v4192
      %v4375 = vpop.f32.mrb[0].mxu0
      %v4376 = vadd.f32 %v4155, %v4375
      %v4377 = vpop.f32.mrb[0].mxu0
      %4378 = vmatprep.mubr.f32.mxu0 0.0
      %4379 = vmatmul.mubr.f32.gmra.mrb[0].mxu0 %v4195
      %v4380 = vpop.f32.mrb[0].mxu0
      %v4381 = vadd.f32 %v4155, %v4380
      %v4382 = vpop.f32.mrb[0].mxu0
      %4383 = vmatprep.mubr.f32.mxu0 0.0
      %4384 = vmatmul.mubr.f32.gmra.mrb[0].mxu0 %v4198
      %v4385 = vpop.f32.mrb[0].mxu0
      %v4386 = vadd.f32 %v4155, %v4385
      %v4387 = vpop.f32.mrb[0].mxu0
      %4388 = vmatprep.mubr.f32.mxu0 0.0
      %4389 = vmatmul.mubr.f32.gmra.mrb[0].mxu0 %v4201
      %v4390 = vpop.f32.mrb[0].mxu0
      %v4391 = vadd.f32 %v4155, %v4390
      %v4392 = vpop.f32.mrb[0].mxu0
      %4393 = vmatprep.mubr.f32.mxu0 0.0
      %4394 = vmatmul.mubr.f32.gmra.mrb[0].mxu0 %v4204
      %v4395 = vpop.f32.mrb[0].mxu0
      %v4396 = vadd.f32 %v4155, %v4395
      %v4397 = vpop.f32.mrb[0].mxu0
      %4398 = vmatprep.mubr.f32.mxu0 0.0
      %4399 = vmatmul.mubr.f32.gmra.mrb[0].mxu0 %v4207
      %v4400 = vpop.f32.mrb[0].mxu0
      %v4401 = vadd.f32 %v4155, %v4400
      %v4402 = vpop.f32.mrb[0].mxu0
      %4403 = vmatprep.mubr.f32.mxu0 0.0
      %4404 = vmatmul.mubr.f32.gmra.mrb[0].mxu0 %v4210
      %v4405 = vpop.f32.mrb[0].mxu0
      %v4406 = vadd.f32 %v4155, %v4405
      %v4407 = vpop.f32.mrb[0].mxu0
      %4408 = vmatprep.mubr.f32.mxu0 0.0
      %4409 = vmatmul.mubr.f32.gmra.mrb[0].mxu0 %v4213
      %v4410 = vpop.f32.mrb[0].mxu0
      %v4411 = vadd.f32 %v4155, %v4410
      %v4412 = vpop.f32.mrb[0].mxu0
      %4413 = vmatprep.mubr.f32.mxu0 0.0
      %4414 = vmatmul.mubr.f32.gmra.mrb[0].mxu0 %v4216
      %v4415 = vpop.f32.mrb[0].mxu0
      %v4416 = vadd.f32 %v4155, %v4415
      %v4417 = vpop.f32.mrb[0].mxu0
      %4418 = vmatprep.mubr.f32.mxu0 0.0
      %4419 = vmatmul.mubr.f32.gmra.mrb[0].mxu0 %v4219
      %v4420 = vpop.f32.mrb[0].mxu0
      %v4421 = vadd.f32 %v4155, %v4420
      %v4422 = vpop.f32.mrb[0].mxu0
      %4423 = vmatprep.mubr.f32.mxu0 0.0
      %4424 = vmatmul.mubr.f32.gmra.mrb[0].mxu0 %v4222
      %v4425 = vpop.f32.mrb[0].mxu0
      %v4426 = vadd.f32 %v4155, %v4425
      %v4427 = vpop.f32.mrb[0].mxu0
      %4428 = vmatprep.mubr.f32.mxu0 0.0
      %4429 = vmatmul.mubr.f32.gmra.mrb[0].mxu0 %v4225
      %v4430 = vpop.f32.mrb[0].mxu0
      %v4431 = vadd.f32 %v4155, %v4430
      %v4432 = vpop.f32.mrb[0].mxu0
      %4433 = vmatprep.mubr.f32.mxu0 0.0
      %4434 = vmatmul.mubr.f32.gmra.mrb[0].mxu0 %v4228
      %v4435 = vpop.f32.mrb[0].mxu0
      %v4436 = vadd.f32 %v4155, %v4435
      %v4437 = vpop.f32.mrb[0].mxu0
      %4438 = vmatprep.mubr.f32.mxu0 0.0
      %4439 = vmatmul.mubr.f32.gmra.mrb[0].mxu0 %v4231
      %v4440 = vpop.f32.mrb[0].mxu0
      %v4441 = vadd.f32 %v4155, %v4440
      %v4442 = vpop.f32.mrb[0].mxu0
      %4443 = vmatprep.mubr.f32.mxu0 0.0
      %4444 = vmatmul.mubr.f32.gmra.mrb[0].mxu0 %v4234
      %v4445 = vpop.f32.mrb[0].mxu0
      %v4446 = vadd.f32 %v4155, %v4445
      %v4447 = vpop.f32.mrb[0].mxu0
      %4448 = vmatprep.mubr.f32.mxu0 0.0
      %4449 = vmatmul.mubr.f32.gmra.mrb[0].mxu0 %v4237
      %v4450 = vpop.f32.mrb[0].mxu0
      %v4451 = vadd.f32 %v4155, %v4450
      %v4452 = vpop.f32.mrb[0].mxu0
      %4453 = vmatprep.mubr.f32.mxu0 0.0
      %4454 = vmatmul.mubr.f32.gmra.mrb[0].mxu0 %v4240
      %v4455 = vpop.f32.mrb[0].mxu0
      %v4456 = vadd.f32 %v4155, %v4455
      %v4457 = vpop.f32.mrb[0].mxu0
      %4458 = vmatprep.mubr.f32.mxu0 0.0
      %4459 = vmatmul.mubr.f32.gmra.mrb[0].mxu0 %v4243
      %v4460 = vpop.f32.mrb[0].mxu0
      %v4461 = vadd.f32 %v4155, %v4460
      %v4462 = vpop.f32.mrb[0].mxu0
      %4463 = vmatprep.mubr.f32.mxu0 0.0
      %4464 = vmatmul.mubr.f32.gmra.mrb[0].mxu0 %v4246
      %v4465 = vpop.f32.mrb[0].mxu0
      %v4466 = vadd.f32 %v4155, %v4465
      %v4467 = vpop.f32.mrb[0].mxu0
      %4468 = vmatprep.mubr.f32.mxu0 0.0
      %4469 = vmatmul.mubr.f32.gmra.mrb[0].mxu0 %v4249
      %v4470 = vpop.f32.mrb[0].mxu0
      %v4471 = vadd.f32 %v4155, %v4470
      %v4472 = vpop.f32.mrb[0].mxu0
      %4473 = vmatprep.mubr.f32.mxu0 0.0
      %4474 = vmatmul.mubr.f32.gmra.mrb[0].mxu0 %v4252
      %v4475 = vpop.f32.mrb[0].mxu0
      %v4476 = vadd.f32 %v4155, %v4475
      %v4477 = vpop.f32.mrb[0].mxu0
      %4478 = vdwg.mxu0
      %v4479 = vld [vmem:[%s5] sm:$0xf]
      %v4481 = vsel %vm311, %v279, 0
      %v4484 = vsel %vm311, %v280, 0
      %v4487 = vsel %vm311, %v281, 0
      %v4490 = vsel %vm311, %v282, 0
      %v4493 = vsel %vm311, %v283, 0
      %v4496 = vsel %vm311, %v284, 0
      %v4499 = vsel %vm311, %v285, 0
      %v4502 = vsel %vm311, %v286, 0
      %v4505 = vsel %vm311, %v287, 0
      %v4508 = vsel %vm311, %v288, 0
      %v4511 = vsel %vm311, %v289, 0
      %v4514 = vsel %vm311, %v290, 0
      %v4517 = vsel %vm311, %v291, 0
      %v4520 = vsel %vm311, %v292, 0
      %v4523 = vsel %vm311, %v293, 0
      %v4526 = vsel %vm311, %v294, 0
      %v4529 = vsel %vm311, %v295, 0
      %v4532 = vsel %vm311, %v296, 0
      %v4535 = vsel %vm311, %v297, 0
      %v4538 = vsel %vm311, %v298, 0
      %v4541 = vsel %vm311, %v299, 0
      %v4544 = vsel %vm311, %v300, 0
      %v4547 = vsel %vm311, %v301, 0
      %v4550 = vsel %vm311, %v302, 0
      %v4553 = vsel %vm311, %v303, 0
      %v4556 = vsel %vm311, %v304, 0
      %v4559 = vsel %vm311, %v305, 0
      %v4562 = vsel %vm311, %v306, 0
      %v4565 = vsel %vm311, %v307, 0
      %v4568 = vsel %vm311, %v308, 0
      %v4571 = vsel %vm311, %v309, 0
      %v4574 = vsel %vm311, %v310, 0
      %v4577 = vsel %vm2150, %v4479, 0
      %4579 = vmatprep.subr.mxu0 0.0
      %4580 = vmatpush1.msra.mxu0 %v4577
      %4581 = vmatprep.subr.mxu0 0.0
      %4582 = vmatpush1.msra.mxu0 0.0
      %4583 = vmatprep.subr.mxu0 0.0
      %4584 = vmatpush1.msra.mxu0 0.0
      %4585 = vmatprep.subr.mxu0 0.0
      %4586 = vmatpush1.msra.mxu0 0.0
      %4587 = vmatprep.subr.mxu0 0.0
      %4588 = vmatpush1.msra.mxu0 0.0
      %4589 = vmatprep.subr.mxu0 0.0
      %4590 = vmatpush1.msra.mxu0 0.0
      %4591 = vmatprep.subr.mxu0 0.0
      %4592 = vmatpush1.msra.mxu0 0.0
      %4593 = vmatprep.subr.mxu0 0.0
      %4594 = vmatpush1.msra.mxu0 0.0
      %4595 = vmatprep.subr.mxu0 0.0
      %4596 = vmatpush1.msra.mxu0 0.0
      %4597 = vmatprep.subr.mxu0 0.0
      %4598 = vmatpush1.msra.mxu0 0.0
      %4599 = vmatprep.subr.mxu0 0.0
      %4600 = vmatpush1.msra.mxu0 0.0
      %4601 = vmatprep.subr.mxu0 0.0
      %4602 = vmatpush1.msra.mxu0 0.0
      %4603 = vmatprep.subr.mxu0 0.0
      %4604 = vmatpush1.msra.mxu0 0.0
      %4605 = vmatprep.subr.mxu0 0.0
      %4606 = vmatpush1.msra.mxu0 0.0
      %4607 = vmatprep.subr.mxu0 0.0
      %4608 = vmatpush1.msra.mxu0 0.0
      %4609 = vmatprep.subr.mxu0 0.0
      %4610 = vmatpush1.msra.mxu0 0.0
      %4611 = vmatprep.subr.mxu0 0.0
      %4612 = vmatpush1.msra.mxu0 0.0
      %4613 = vmatprep.subr.mxu0 0.0
      %4614 = vmatpush1.msra.mxu0 0.0
      %4615 = vmatprep.subr.mxu0 0.0
      %4616 = vmatpush1.msra.mxu0 0.0
      %4617 = vmatprep.subr.mxu0 0.0
      %4618 = vmatpush1.msra.mxu0 0.0
      %4619 = vmatprep.subr.mxu0 0.0
      %4620 = vmatpush1.msra.mxu0 0.0
      %4621 = vmatprep.subr.mxu0 0.0
      %4622 = vmatpush1.msra.mxu0 0.0
      %4623 = vmatprep.subr.mxu0 0.0
      %4624 = vmatpush1.msra.mxu0 0.0
      %4625 = vmatprep.subr.mxu0 0.0
      %4626 = vmatpush1.msra.mxu0 0.0
      %4627 = vmatprep.subr.mxu0 0.0
      %4628 = vmatpush1.msra.mxu0 0.0
      %4629 = vmatprep.subr.mxu0 0.0
      %4630 = vmatpush1.msra.mxu0 0.0
      %4631 = vmatprep.subr.mxu0 0.0
      %4632 = vmatpush1.msra.mxu0 0.0
      %4633 = vmatprep.subr.mxu0 0.0
      %4634 = vmatpush1.msra.mxu0 0.0
      %4635 = vmatprep.subr.mxu0 0.0
      %4636 = vmatpush1.msra.mxu0 0.0
      %4637 = vmatprep.subr.mxu0 0.0
      %4638 = vmatpush1.msra.mxu0 0.0
      %4639 = vmatprep.subr.mxu0 0.0
      %4640 = vmatpush1.msra.mxu0 0.0
      %4641 = vmatprep.subr.mxu0 0.0
      %4642 = vmatpush1.msra.mxu0 0.0
      %4643 = vmatprep.mubr.f32.mxu0 0.0
      %4644 = vmatmul.mubr.f32.gmra.mrb[0].mxu0 %v4481
      %v4645 = vpop.f32.mrb[0].mxu0
      %v4646 = vadd.f32 0.0, %v4645
      %v4647 = vpop.f32.mrb[0].mxu0
      %4648 = vmatprep.mubr.f32.mxu0 0.0
      %4649 = vmatmul.mubr.f32.gmra.mrb[0].mxu0 %v4484
      %v4650 = vpop.f32.mrb[0].mxu0
      %v4651 = vadd.f32 0.0, %v4650
      %v4652 = vpop.f32.mrb[0].mxu0
      %4653 = vmatprep.mubr.f32.mxu0 0.0
      %4654 = vmatmul.mubr.f32.gmra.mrb[0].mxu0 %v4487
      %v4655 = vpop.f32.mrb[0].mxu0
      %v4656 = vadd.f32 0.0, %v4655
      %v4657 = vpop.f32.mrb[0].mxu0
      %4658 = vmatprep.mubr.f32.mxu0 0.0
      %4659 = vmatmul.mubr.f32.gmra.mrb[0].mxu0 %v4490
      %v4660 = vpop.f32.mrb[0].mxu0
      %v4661 = vadd.f32 0.0, %v4660
      %v4662 = vpop.f32.mrb[0].mxu0
      %4663 = vmatprep.mubr.f32.mxu0 0.0
      %4664 = vmatmul.mubr.f32.gmra.mrb[0].mxu0 %v4493
      %v4665 = vpop.f32.mrb[0].mxu0
      %v4666 = vadd.f32 0.0, %v4665
      %v4667 = vpop.f32.mrb[0].mxu0
      %4668 = vmatprep.mubr.f32.mxu0 0.0
      %4669 = vmatmul.mubr.f32.gmra.mrb[0].mxu0 %v4496
      %v4670 = vpop.f32.mrb[0].mxu0
      %v4671 = vadd.f32 0.0, %v4670
      %v4672 = vpop.f32.mrb[0].mxu0
      %4673 = vmatprep.mubr.f32.mxu0 0.0
      %4674 = vmatmul.mubr.f32.gmra.mrb[0].mxu0 %v4499
      %v4675 = vpop.f32.mrb[0].mxu0
      %v4676 = vadd.f32 0.0, %v4675
      %v4677 = vpop.f32.mrb[0].mxu0
      %4678 = vmatprep.mubr.f32.mxu0 0.0
      %4679 = vmatmul.mubr.f32.gmra.mrb[0].mxu0 %v4502
      %v4680 = vpop.f32.mrb[0].mxu0
      %v4681 = vadd.f32 0.0, %v4680
      %v4682 = vpop.f32.mrb[0].mxu0
      %4683 = vmatprep.mubr.f32.mxu0 0.0
      %4684 = vmatmul.mubr.f32.gmra.mrb[0].mxu0 %v4505
      %v4685 = vpop.f32.mrb[0].mxu0
      %v4686 = vadd.f32 0.0, %v4685
      %v4687 = vpop.f32.mrb[0].mxu0
      %4688 = vmatprep.mubr.f32.mxu0 0.0
      %4689 = vmatmul.mubr.f32.gmra.mrb[0].mxu0 %v4508
      %v4690 = vpop.f32.mrb[0].mxu0
      %v4691 = vadd.f32 0.0, %v4690
      %v4692 = vpop.f32.mrb[0].mxu0
      %4693 = vmatprep.mubr.f32.mxu0 0.0
      %4694 = vmatmul.mubr.f32.gmra.mrb[0].mxu0 %v4511
      %v4695 = vpop.f32.mrb[0].mxu0
      %v4696 = vadd.f32 0.0, %v4695
      %v4697 = vpop.f32.mrb[0].mxu0
      %4698 = vmatprep.mubr.f32.mxu0 0.0
      %4699 = vmatmul.mubr.f32.gmra.mrb[0].mxu0 %v4514
      %v4700 = vpop.f32.mrb[0].mxu0
      %v4701 = vadd.f32 0.0, %v4700
      %v4702 = vpop.f32.mrb[0].mxu0
      %4703 = vmatprep.mubr.f32.mxu0 0.0
      %4704 = vmatmul.mubr.f32.gmra.mrb[0].mxu0 %v4517
      %v4705 = vpop.f32.mrb[0].mxu0
      %v4706 = vadd.f32 0.0, %v4705
      %v4707 = vpop.f32.mrb[0].mxu0
      %4708 = vmatprep.mubr.f32.mxu0 0.0
      %4709 = vmatmul.mubr.f32.gmra.mrb[0].mxu0 %v4520
      %v4710 = vpop.f32.mrb[0].mxu0
      %v4711 = vadd.f32 0.0, %v4710
      %v4712 = vpop.f32.mrb[0].mxu0
      %4713 = vmatprep.mubr.f32.mxu0 0.0
      %4714 = vmatmul.mubr.f32.gmra.mrb[0].mxu0 %v4523
      %v4715 = vpop.f32.mrb[0].mxu0
      %v4716 = vadd.f32 0.0, %v4715
      %v4717 = vpop.f32.mrb[0].mxu0
      %4718 = vmatprep.mubr.f32.mxu0 0.0
      %4719 = vmatmul.mubr.f32.gmra.mrb[0].mxu0 %v4526
      %v4720 = vpop.f32.mrb[0].mxu0
      %v4721 = vadd.f32 0.0, %v4720
      %v4722 = vpop.f32.mrb[0].mxu0
      %4723 = vmatprep.mubr.f32.mxu0 0.0
      %4724 = vmatmul.mubr.f32.gmra.mrb[0].mxu0 %v4529
      %v4725 = vpop.f32.mrb[0].mxu0
      %v4726 = vadd.f32 0.0, %v4725
      %v4727 = vpop.f32.mrb[0].mxu0
      %4728 = vmatprep.mubr.f32.mxu0 0.0
      %4729 = vmatmul.mubr.f32.gmra.mrb[0].mxu0 %v4532
      %v4730 = vpop.f32.mrb[0].mxu0
      %v4731 = vadd.f32 0.0, %v4730
      %v4732 = vpop.f32.mrb[0].mxu0
      %4733 = vmatprep.mubr.f32.mxu0 0.0
      %4734 = vmatmul.mubr.f32.gmra.mrb[0].mxu0 %v4535
      %v4735 = vpop.f32.mrb[0].mxu0
      %v4736 = vadd.f32 0.0, %v4735
      %v4737 = vpop.f32.mrb[0].mxu0
      %4738 = vmatprep.mubr.f32.mxu0 0.0
      %4739 = vmatmul.mubr.f32.gmra.mrb[0].mxu0 %v4538
      %v4740 = vpop.f32.mrb[0].mxu0
      %v4741 = vadd.f32 0.0, %v4740
      %v4742 = vpop.f32.mrb[0].mxu0
      %4743 = vmatprep.mubr.f32.mxu0 0.0
      %4744 = vmatmul.mubr.f32.gmra.mrb[0].mxu0 %v4541
      %v4745 = vpop.f32.mrb[0].mxu0
      %v4746 = vadd.f32 0.0, %v4745
      %v4747 = vpop.f32.mrb[0].mxu0
      %4748 = vmatprep.mubr.f32.mxu0 0.0
      %4749 = vmatmul.mubr.f32.gmra.mrb[0].mxu0 %v4544
      %v4750 = vpop.f32.mrb[0].mxu0
      %v4751 = vadd.f32 0.0, %v4750
      %v4752 = vpop.f32.mrb[0].mxu0
      %4753 = vmatprep.mubr.f32.mxu0 0.0
      %4754 = vmatmul.mubr.f32.gmra.mrb[0].mxu0 %v4547
      %v4755 = vpop.f32.mrb[0].mxu0
      %v4756 = vadd.f32 0.0, %v4755
      %v4757 = vpop.f32.mrb[0].mxu0
      %4758 = vmatprep.mubr.f32.mxu0 0.0
      %4759 = vmatmul.mubr.f32.gmra.mrb[0].mxu0 %v4550
      %v4760 = vpop.f32.mrb[0].mxu0
      %v4761 = vadd.f32 0.0, %v4760
      %v4762 = vpop.f32.mrb[0].mxu0
      %4763 = vmatprep.mubr.f32.mxu0 0.0
      %4764 = vmatmul.mubr.f32.gmra.mrb[0].mxu0 %v4553
      %v4765 = vpop.f32.mrb[0].mxu0
      %v4766 = vadd.f32 0.0, %v4765
      %v4767 = vpop.f32.mrb[0].mxu0
      %4768 = vmatprep.mubr.f32.mxu0 0.0
      %4769 = vmatmul.mubr.f32.gmra.mrb[0].mxu0 %v4556
      %v4770 = vpop.f32.mrb[0].mxu0
      %v4771 = vadd.f32 0.0, %v4770
      %v4772 = vpop.f32.mrb[0].mxu0
      %4773 = vmatprep.mubr.f32.mxu0 0.0
      %4774 = vmatmul.mubr.f32.gmra.mrb[0].mxu0 %v4559
      %v4775 = vpop.f32.mrb[0].mxu0
      %v4776 = vadd.f32 0.0, %v4775
      %v4777 = vpop.f32.mrb[0].mxu0
      %4778 = vmatprep.mubr.f32.mxu0 0.0
      %4779 = vmatmul.mubr.f32.gmra.mrb[0].mxu0 %v4562
      %v4780 = vpop.f32.mrb[0].mxu0
      %v4781 = vadd.f32 0.0, %v4780
      %v4782 = vpop.f32.mrb[0].mxu0
      %4783 = vmatprep.mubr.f32.mxu0 0.0
      %4784 = vmatmul.mubr.f32.gmra.mrb[0].mxu0 %v4565
      %v4785 = vpop.f32.mrb[0].mxu0
      %v4786 = vadd.f32 0.0, %v4785
      %v4787 = vpop.f32.mrb[0].mxu0
      %4788 = vmatprep.mubr.f32.mxu0 0.0
      %4789 = vmatmul.mubr.f32.gmra.mrb[0].mxu0 %v4568
      %v4790 = vpop.f32.mrb[0].mxu0
      %v4791 = vadd.f32 0.0, %v4790
      %v4792 = vpop.f32.mrb[0].mxu0
      %4793 = vmatprep.mubr.f32.mxu0 0.0
      %4794 = vmatmul.mubr.f32.gmra.mrb[0].mxu0 %v4571
      %v4795 = vpop.f32.mrb[0].mxu0
      %v4796 = vadd.f32 0.0, %v4795
      %v4797 = vpop.f32.mrb[0].mxu0
      %4798 = vmatprep.mubr.f32.mxu0 0.0
      %4799 = vmatmul.mubr.f32.gmra.mrb[0].mxu0 %v4574
      %v4800 = vpop.f32.mrb[0].mxu0
      %v4801 = vadd.f32 0.0, %v4800
      %v4802 = vpop.f32.mrb[0].mxu0
      %4803 = vdwg.mxu0
      %v4804 = vadd.f32 %v4321, %v4646
      %v4805 = vadd.f32 %v4326, %v4651
      %v4806 = vadd.f32 %v4331, %v4656
      %v4807 = vadd.f32 %v4336, %v4661
      %v4808 = vadd.f32 %v4341, %v4666
      %v4809 = vadd.f32 %v4346, %v4671
      %v4810 = vadd.f32 %v4351, %v4676
      %v4811 = vadd.f32 %v4356, %v4681
      %v4812 = vadd.f32 %v4361, %v4686
      %v4813 = vadd.f32 %v4366, %v4691
      %v4814 = vadd.f32 %v4371, %v4696
      %v4815 = vadd.f32 %v4376, %v4701
      %v4816 = vadd.f32 %v4381, %v4706
      %v4817 = vadd.f32 %v4386, %v4711
      %v4818 = vadd.f32 %v4391, %v4716
      %v4819 = vadd.f32 %v4396, %v4721
      %v4820 = vadd.f32 %v4401, %v4726
      %v4821 = vadd.f32 %v4406, %v4731
      %v4822 = vadd.f32 %v4411, %v4736
      %v4823 = vadd.f32 %v4416, %v4741
      %v4824 = vadd.f32 %v4421, %v4746
      %v4825 = vadd.f32 %v4426, %v4751
      %v4826 = vadd.f32 %v4431, %v4756
      %v4827 = vadd.f32 %v4436, %v4761
      %v4828 = vadd.f32 %v4441, %v4766
      %v4829 = vadd.f32 %v4446, %v4771
      %v4830 = vadd.f32 %v4451, %v4776
      %v4831 = vadd.f32 %v4456, %v4781
      %v4832 = vadd.f32 %v4461, %v4786
      %v4833 = vadd.f32 %v4466, %v4791
      %v4834 = vadd.f32 %v4471, %v4796
      %v4835 = vadd.f32 %v4476, %v4801
      %v4836 = vld [vmem:[%s6] sm:$0x1]
      %v4838 = vlaneseq
      %v4839 = vshrl.u32 %v4838, 7
      %v4840 = vsub.s32 0, %v4839
      %v4841 = vrot.slane %v4836, %v4840
      %v4843 = vadd.f32 %v4804, %v4841
      %v4844 = vadd.f32 %v4805, %v4841
      %v4845 = vadd.f32 %v4806, %v4841
      %v4846 = vadd.f32 %v4807, %v4841
      %v4847 = vadd.f32 %v4808, %v4841
      %v4848 = vadd.f32 %v4809, %v4841
      %v4849 = vadd.f32 %v4810, %v4841
      %v4850 = vadd.f32 %v4811, %v4841
      %v4851 = vadd.f32 %v4812, %v4841
      %v4852 = vadd.f32 %v4813, %v4841
      %v4853 = vadd.f32 %v4814, %v4841
      %v4854 = vadd.f32 %v4815, %v4841
      %v4855 = vadd.f32 %v4816, %v4841
      %v4856 = vadd.f32 %v4817, %v4841
      %v4857 = vadd.f32 %v4818, %v4841
      %v4858 = vadd.f32 %v4819, %v4841
      %v4859 = vadd.f32 %v4820, %v4841
      %v4860 = vadd.f32 %v4821, %v4841
      %v4861 = vadd.f32 %v4822, %v4841
      %v4862 = vadd.f32 %v4823, %v4841
      %v4863 = vadd.f32 %v4824, %v4841
      %v4864 = vadd.f32 %v4825, %v4841
      %v4865 = vadd.f32 %v4826, %v4841
      %v4866 = vadd.f32 %v4827, %v4841
      %v4867 = vadd.f32 %v4828, %v4841
      %v4868 = vadd.f32 %v4829, %v4841
      %v4869 = vadd.f32 %v4830, %v4841
      %v4870 = vadd.f32 %v4831, %v4841
      %v4871 = vadd.f32 %v4832, %v4841
      %v4872 = vadd.f32 %v4833, %v4841
      %v4873 = vadd.f32 %v4834, %v4841
      %v4874 = vadd.f32 %v4835, %v4841
      %4875 = vst.msk [vmem:[%s278] sm:$0xff] %vm2411, %v4843
      %4876 = vst.msk [vmem:[%s278 + $0x8] sm:$0xff] %vm2411, %v4844
      %4877 = vst.msk [vmem:[%s278 + $0x10] sm:$0xff] %vm2411, %v4845
      %4878 = vst.msk [vmem:[%s278 + $0x18] sm:$0xff] %vm2411, %v4846
      %4879 = vst.msk [vmem:[%s278 + $0x20] sm:$0xff] %vm2411, %v4847
      %4880 = vst.msk [vmem:[%s278 + $0x28] sm:$0xff] %vm2411, %v4848
      %4881 = vst.msk [vmem:[%s278 + $0x30] sm:$0xff] %vm2411, %v4849
      %4882 = vst.msk [vmem:[%s278 + $0x38] sm:$0xff] %vm2411, %v4850
      %4883 = vst.msk [vmem:[%s278 + $0x40] sm:$0xff] %vm2411, %v4851
      %4884 = vst.msk [vmem:[%s278 + $0x48] sm:$0xff] %vm2411, %v4852
      %4885 = vst.msk [vmem:[%s278 + $0x50] sm:$0xff] %vm2411, %v4853
      %4886 = vst.msk [vmem:[%s278 + $0x58] sm:$0xff] %vm2411, %v4854
      %4887 = vst.msk [vmem:[%s278 + $0x60] sm:$0xff] %vm2411, %v4855
      %4888 = vst.msk [vmem:[%s278 + $0x68] sm:$0xff] %vm2411, %v4856
      %4889 = vst.msk [vmem:[%s278 + $0x70] sm:$0xff] %vm2411, %v4857
      %4890 = vst.msk [vmem:[%s278 + $0x78] sm:$0xff] %vm2411, %v4858
      %4891 = vst.msk [vmem:[%s278 + $0x80] sm:$0xff] %vm2411, %v4859
      %4892 = vst.msk [vmem:[%s278 + $0x88] sm:$0xff] %vm2411, %v4860
      %4893 = vst.msk [vmem:[%s278 + $0x90] sm:$0xff] %vm2411, %v4861
      %4894 = vst.msk [vmem:[%s278 + $0x98] sm:$0xff] %vm2411, %v4862
      %4895 = vst.msk [vmem:[%s278 + $0xa0] sm:$0xff] %vm2411, %v4863
      %4896 = vst.msk [vmem:[%s278 + $0xa8] sm:$0xff] %vm2411, %v4864
      %4897 = vst.msk [vmem:[%s278 + $0xb0] sm:$0xff] %vm2411, %v4865
      %4898 = vst.msk [vmem:[%s278 + $0xb8] sm:$0xff] %vm2411, %v4866
      %4899 = vst.msk [vmem:[%s278 + $0xc0] sm:$0xff] %vm2411, %v4867
      %4900 = vst.msk [vmem:[%s278 + $0xc8] sm:$0xff] %vm2411, %v4868
      %4901 = vst.msk [vmem:[%s278 + $0xd0] sm:$0xff] %vm2411, %v4869
      %4902 = vst.msk [vmem:[%s278 + $0xd8] sm:$0xff] %vm2411, %v4870
      %4903 = vst.msk [vmem:[%s278 + $0xe0] sm:$0xff] %vm2411, %v4871
      %4904 = vst.msk [vmem:[%s278 + $0xe8] sm:$0xff] %vm2411, %v4872
      %4905 = vst.msk [vmem:[%s278 + $0xf0] sm:$0xff] %vm2411, %v4873
      %4906 = vst.msk [vmem:[%s278 + $0xf8] sm:$0xff] %vm2411, %v4874
      %p4907 = scmp.lt.s32.totalorder %s18, 1
      %s4908 = scalar_select %p4907, %s18, 1
      %s4909 = smul.addr %s4908, 32
      %s4910 = smul.addr %s4909, 8
      %s4911 = scalar_lea.vmem %s7, %s4910
      // Predicated region
      $region49: #{tpu_custom_call.1} parent=47 // pred_check
        %p4912 = pneg %p188
      $region50: #{tpu_custom_call.1} parent=47 // pred_check_branch
        %4914 = sbr.rel (%p4912) target = $region52
      $region51: #{tpu_custom_call.1} parent=47 // pred_region
        _
      $region52: #{tpu_custom_call.1} parent=47 // pred_fallthru
        _
    $region48: #{tpu_custom_call.1} parent=5 // pred_fallthru
      _
    %p4915 = scmp.le.s32.totalorder 2, %s13
    // Predicated region
    $region53: #{tpu_custom_call.1} parent=5 // pred_check
      %p4916 = pneg %p4915
    $region54: #{tpu_custom_call.1} parent=5 // pred_check_branch
      %4918 = sbr.rel (%p4916) target = $region56
    $region55: #{tpu_custom_call.1} parent=5 // pred_region
      %s4919 = ssub.s32 %s13, 2
      // Predicated region
      $region57: #{tpu_custom_call.1} parent=55 // pred_check
        %p4920 = pneg %p194
      $region58: #{tpu_custom_call.1} parent=55 // pred_check_branch
        %4922 = sbr.rel (%p4920) target = $region60
      $region59: #{tpu_custom_call.1} parent=55 // pred_region
        %p4923 = scmp.lt.s32.totalorder %s19, 1
        %s4924 = scalar_select %p4923, %s19, 1
        %s4925 = smul.addr %s4924, 32
        %s4926 = smul.addr %s4925, 8
        %s4927 = scalar_lea.vmem %s7, %s4926
      $region60: #{tpu_custom_call.1} parent=55 // pred_fallthru
        _
    $region56: #{tpu_custom_call.1} parent=5 // pred_fallthru
      _
  $region6: #{tpu_custom_call.1} parent=0 // loop_footer
    %s17 = sadd.s32 1, %s13
  $region7: #{tpu_custom_call.1} parent=0 // loop_footer_branch
    %12 = sbr.rel target = $region3
  $region8: #{tpu_custom_call.1} parent=0 // loop_exit
    _

</llo_original>
